<compile_context>
chip_gen: v5e
topology: v5e:2x2
jax: 0.10.0
libtpu: 0.0.40
codegen_flags: <defaults>
</compile_context>

<pallas_src>
import jax
import jax.numpy as jnp
from jax.experimental import pallas as pl
from jax.experimental.pallas import tpu as pltpu


def _dual_path_attention_kernel(x_ref, w1_ref, w2_ref, sconv_ref, params_ref,
                                o_ref, pad_ref):
    """One batch element per grid step.

    x_ref    : (1, H, W, C)      VMEM  input features
    w1_ref   : (C, Cr)           VMEM  channel-MLP conv1 weight (transposed)
    w2_ref   : (Cr, C)           VMEM  channel-MLP conv2 weight (transposed)
    sconv_ref: (2*K*K,)          SMEM  BN-folded spatial conv weights, flat [c, ky, kx]
    params_ref: (2,)             SMEM  [bn_bias_folded, scale_param_logit]
    o_ref    : (1, H, W, C)      VMEM  output
    pad_ref  : (2, H+2P, W+2P)   VMEM  scratch for zero-padded avg/max spatial maps
    """
    x = x_ref[0]                                   # (H, W, C) f32
    H, W, C = x.shape
    P = (pad_ref.shape[1] - H) // 2
    K = 2 * P + 1

    # ---------------- channel attention ----------------
    avg_c = jnp.mean(jnp.mean(x, axis=0), axis=0, keepdims=True)   # (1, C)
    max_c = jnp.max(jnp.max(x, axis=0), axis=0, keepdims=True)     # (1, C)

    # Batch the shared MLP over the (avg, max) pair: a single (2,C)@(C,Cr) and
    # (2,Cr)@(Cr,C) instead of four 1-row matmuls.
    row_id = jax.lax.broadcasted_iota(jnp.int32, (2, C), 0)
    pooled = jnp.where(row_id == 0,
                       jnp.broadcast_to(avg_c, (2, C)),
                       jnp.broadcast_to(max_c, (2, C)))            # (2, C)
    h = jnp.maximum(
        jnp.dot(pooled, w1_ref[...], preferred_element_type=jnp.float32), 0.0)
    mlp_out = jnp.dot(h, w2_ref[...], preferred_element_type=jnp.float32)  # (2, C)
    channel_att = jax.nn.sigmoid(
        jnp.sum(mlp_out, axis=0, keepdims=True))                   # (1, C)
    x_ca = x * channel_att[None]                                   # (H, W, C)

    # ---------------- spatial attention ----------------
    avg_s = jnp.mean(x_ca, axis=-1)                                # (H, W)
    max_s = jnp.max(x_ca, axis=-1)                                 # (H, W)

    # zero-padded (avg, max) maps in VMEM scratch (border zeros -> "SAME" conv)
    pad_ref[...] = jnp.zeros_like(pad_ref)
    pad_ref[0:1, P:P + H, P:P + W] = avg_s[None]
    pad_ref[1:2, P:P + H, P:P + W] = max_s[None]
    pad = pad_ref[...]                                             # (2, Hp, Wp)

    # KxK conv (2 -> 1 channel), fully unrolled.
    # Lane-direction shift hoisted to the outer kx loop (one column strip per kx);
    # inner ky loop uses a single fused (2, H, W) sublane slice for both channel
    # taps, with SMEM scalar weights.
    conv = jnp.zeros((H, W), jnp.float32)
    for kx in range(K):
        colstrip = pad[:, :, kx:kx + W]                            # (2, Hp, W)
        for ky in range(K):
            taps = colstrip[:, ky:ky + H, :]                       # (2, H, W)
            w_a = sconv_ref[ky * K + kx]                           # avg-channel tap
            w_m = sconv_ref[K * K + ky * K + kx]                   # max-channel tap
            conv = conv + w_a * taps[0] + w_m * taps[1]

    spatial_att = jax.nn.sigmoid(conv + params_ref[0])             # (H, W)

    # ---------------- fused learned residual blend ----------------
    # out = x + a*(x_sa - x) == (1-a)*x + (a*spatial_att)*x_ca  (x_sa never built)
    att = jax.nn.sigmoid(jnp.full((1, 1), params_ref[1], dtype=jnp.float32))
    out = x * (1.0 - att) + x_ca * (att * spatial_att)[:, :, None]
    o_ref[0] = out.astype(o_ref.dtype)


def dual_path_attention(x_nchw, W1, W2, Ws, bn_gamma, bn_beta, bn_mean, bn_var,
                        scale_logit, *, eps=1e-5):
    """x_nchw: (B, C, H, W) like the PyTorch module. Returns (B, C, H, W)."""
    B, C, H, W = x_nchw.shape
    Cr = W1.shape[0]
    K = Ws.shape[-1]
    P = K // 2

    # glue: NCHW -> NHWC, fold BN into the spatial conv, transpose MLP weights
    x_nhwc = jnp.transpose(x_nchw, (0, 2, 3, 1)).astype(jnp.float32)
    bn_scale = bn_gamma / jnp.sqrt(bn_var + eps)
    bn_bias = bn_beta - bn_mean * bn_scale
    sconv_flat = (Ws * bn_scale).reshape(-1).astype(jnp.float32)    # (2*K*K,)
    params = jnp.stack([bn_bias, scale_logit]).astype(jnp.float32)  # (2,)
    w1 = W1.T.astype(jnp.float32)                                   # (C, Cr)
    w2 = W2.T.astype(jnp.float32)                                   # (Cr, C)

    out_nhwc = pl.pallas_call(
        _dual_path_attention_kernel,
        out_shape=jax.ShapeDtypeStruct((B, H, W, C), jnp.float32),
        grid_spec=pltpu.PrefetchScalarGridSpec(
            num_scalar_prefetch=0,
            grid=(B,),
            in_specs=[
                pl.BlockSpec((1, H, W, C), lambda b: (b, 0, 0, 0)),
                pl.BlockSpec((C, Cr), lambda b: (0, 0)),
                pl.BlockSpec((Cr, C), lambda b: (0, 0)),
                pl.BlockSpec(memory_space=pltpu.MemorySpace.SMEM),
                pl.BlockSpec(memory_space=pltpu.MemorySpace.SMEM),
            ],
            out_specs=pl.BlockSpec((1, H, W, C), lambda b: (b, 0, 0, 0)),
            scratch_shapes=[pltpu.VMEM((2, H + 2 * P, W + 2 * P), jnp.float32)],
        ),
        compiler_params=pltpu.CompilerParams(
            dimension_semantics=("parallel",)),
    )(x_nhwc, w1, w2, sconv_flat, params)

    # TODO(synk): these NCHW<->NHWC transposes are extra HBM passes; drop them if
    # the surrounding graph can produce/consume NHWC directly.
    return jnp.transpose(out_nhwc, (0, 3, 1, 2))


def _reference_forward(x_nchw, W1, W2, Ws, bn_gamma, bn_beta, bn_mean, bn_var,
                       scale_logit, eps=1e-5):
    """Pure-JAX reference replicating the PyTorch forward (inference-mode BN)."""
    x = jnp.transpose(x_nchw, (0, 2, 3, 1)).astype(jnp.float32)     # NHWC
    identity = x
    avg_c = jnp.mean(x, axis=(1, 2))                                # (B, C)
    max_c = jnp.max(x, axis=(1, 2))

    def mlp(v):
        return jnp.maximum(v @ W1.T, 0.0) @ W2.T

    ca = jax.nn.sigmoid(mlp(avg_c) + mlp(max_c))                    # (B, C)
    xc = x * ca[:, None, None, :]
    avg_s = jnp.mean(xc, axis=-1, keepdims=True)
    max_s = jnp.max(xc, axis=-1, keepdims=True)
    sp_in = jnp.concatenate([avg_s, max_s], axis=-1)                # (B,H,W,2)
    w_hwio = jnp.transpose(Ws, (1, 2, 0))[..., None]                # (K,K,2,1)
    conv = jax.lax.conv_general_dilated(
        sp_in, w_hwio, (1, 1), "SAME",
        dimension_numbers=("NHWC", "HWIO", "NHWC"))[..., 0]         # (B,H,W)
    bn_scale = bn_gamma / jnp.sqrt(bn_var + eps)
    bn_bias = bn_beta - bn_mean * bn_scale
    sa = jax.nn.sigmoid(conv * bn_scale + bn_bias)
    xs = xc * sa[..., None]
    a = jax.nn.sigmoid(scale_logit)
    out = identity + a * (xs - identity)
    return jnp.transpose(out, (0, 3, 1, 2))                         # back to NCHW


if __name__ == "__main__":
    # small shapes consistent with the module (in_channels=32, reduction=8, k=7)
    B, C, H, W = 2, 32, 16, 16
    reduction, K = 8, 7
    Cr = C // reduction

    key = jax.random.PRNGKey(0)
    k1, k2, k3, kx = jax.random.split(key, 4)

    # deterministic Kaiming-normal-style init (fan_out, relu), matching shapes:
    #   channel_mlp conv1: (Cr, C, 1, 1), conv2: (C, Cr, 1, 1)
    #   spatial_conv     : (1, 2, K, K)  -> stored squeezed as (2, K, K)
    W1 = jax.random.normal(k1, (Cr, C), jnp.float32) * (2.0 / Cr) ** 0.5
    W2 = jax.random.normal(k2, (C, Cr), jnp.float32) * (2.0 / C) ** 0.5
    Ws = jax.random.normal(k3, (2, K, K), jnp.float32) * (2.0 / (K * K)) ** 0.5

    bn_gamma = jnp.float32(1.0)
    bn_beta = jnp.float32(0.0)
    bn_mean = jnp.float32(0.0)
    bn_var = jnp.float32(1.0)
    scale_logit = jnp.float32(0.0)   # nn.Parameter(torch.zeros(1))

    x = jax.random.normal(kx, (B, C, H, W), jnp.float32)

    out = dual_path_attention(x, W1, W2, Ws, bn_gamma, bn_beta, bn_mean,
                              bn_var, scale_logit)
    out = jax.block_until_ready(out)

    ref = _reference_forward(x, W1, W2, Ws, bn_gamma, bn_beta, bn_mean,
                             bn_var, scale_logit)
    assert out.shape == (B, C, H, W)
    max_err = float(jnp.max(jnp.abs(out - ref)))
    assert max_err < 1e-3, f"mismatch vs reference: {max_err}"

    print("KERNEL_OK")
</pallas_src>

<mosaic_0001>
module attributes {stable_mosaic.version = 11 : i64} {
  func.func @_dual_path_attention_kernel(%arg0: i32, %arg1: memref<1x16x16x32xf32, #tpu.memory_space<vmem>>, %arg2: memref<32x4xf32, #tpu.memory_space<vmem>>, %arg3: memref<4x32xf32, #tpu.memory_space<vmem>>, %arg4: memref<98xf32, #tpu.memory_space<smem>>, %arg5: memref<2xf32, #tpu.memory_space<smem>>, %arg6: memref<1x16x16x32xf32, #tpu.memory_space<vmem>>, %arg7: memref<2x22x22xf32, #tpu.memory_space<vmem>>) attributes {dimension_semantics = [#tpu.dimension_semantics<parallel>], iteration_bounds = array<i64: 2>, scalar_prefetch = 0 : i64, scratch_operands = 1 : i64, tpu.core_type = #tpu.core_type<tc>, window_params = [{transform_indices = @transform_0, window_bounds = array<i64: 1, 16, 16, 32>}, {pipeline_mode = #tpu.pipeline_mode<synchronous>, transform_indices = @transform_1, window_bounds = array<i64: 32, 4>}, {pipeline_mode = #tpu.pipeline_mode<synchronous>, transform_indices = @transform_2, window_bounds = array<i64: 4, 32>}, {transform_indices = @transform_3, window_bounds = array<i64: 98>}, {transform_indices = @transform_4, window_bounds = array<i64: 2>}, {transform_indices = @transform_5, window_bounds = array<i64: 1, 16, 16, 32>}]} {
    %c0 = arith.constant 0 : index
    %c0_0 = arith.constant 0 : index
    %c0_1 = arith.constant 0 : index
    %c0_2 = arith.constant 0 : index
    %0 = vector.load %arg1[%c0, %c0_0, %c0_1, %c0_2] : memref<1x16x16x32xf32, #tpu.memory_space<vmem>>, vector<1x16x16x32xf32>
    %1 = vector.shape_cast %0 : vector<1x16x16x32xf32> to vector<16x16x32xf32>
    %cst = arith.constant dense<0.000000e+00> : vector<16x32xf32>
    %2 = vector.multi_reduction <add>, %1, %cst [0] : vector<16x16x32xf32> to vector<16x32xf32>
    %cst_3 = arith.constant 1.600000e+01 : f32
    %3 = vector.broadcast %cst_3 : f32 to vector<16x32xf32>
    %4 = arith.divf %2, %3 : vector<16x32xf32>
    %cst_4 = arith.constant dense<0.000000e+00> : vector<32xf32>
    %5 = vector.multi_reduction <add>, %4, %cst_4 [0] : vector<16x32xf32> to vector<32xf32>
    %6 = vector.shape_cast %5 : vector<32xf32> to vector<1x32xf32>
    %cst_5 = arith.constant 1.600000e+01 : f32
    %7 = vector.broadcast %cst_5 : f32 to vector<1x32xf32>
    %8 = arith.divf %6, %7 : vector<1x32xf32>
    %cst_6 = arith.constant dense<0xFF800000> : vector<16x32xf32>
    %9 = vector.multi_reduction <maximumf>, %1, %cst_6 [0] : vector<16x16x32xf32> to vector<16x32xf32>
    %cst_7 = arith.constant dense<0xFF800000> : vector<32xf32>
    %10 = vector.multi_reduction <maximumf>, %9, %cst_7 [0] : vector<16x32xf32> to vector<32xf32>
    %11 = vector.shape_cast %10 : vector<32xf32> to vector<1x32xf32>
    %12 = tpu.iota {dimensions = array<i32: 0>} : vector<2x32xi32>
    %c0_i32 = arith.constant 0 : i32
    %13 = vector.broadcast %c0_i32 : i32 to vector<2x32xi32>
    %14 = arith.cmpi eq, %12, %13 : vector<2x32xi32>
    %15 = vector.shape_cast %8 : vector<1x32xf32> to vector<1x32xf32>
    %16 = vector.broadcast %15 : vector<1x32xf32> to vector<2x32xf32>
    %17 = vector.shape_cast %11 : vector<1x32xf32> to vector<1x32xf32>
    %18 = vector.broadcast %17 : vector<1x32xf32> to vector<2x32xf32>
    %19 = arith.select %14, %16, %18 : vector<2x32xi1>, vector<2x32xf32>
    %c0_8 = arith.constant 0 : index
    %c0_9 = arith.constant 0 : index
    %20 = vector.load %arg2[%c0_8, %c0_9] : memref<32x4xf32, #tpu.memory_space<vmem>>, vector<32x4xf32>
    %cst_10 = arith.constant dense<0.000000e+00> : vector<2x4xf32>
    %21 = tpu.matmul %19, %20, %cst_10 {dimension_numbers = #tpu.dot_dimension_numbers<[1], [0], [0], [1], [0, 0, 1, 1], [], []>} : vector<2x32xf32>, vector<32x4xf32>, vector<2x4xf32> -> vector<2x4xf32>
    %cst_11 = arith.constant 0.000000e+00 : f32
    %22 = vector.broadcast %cst_11 : f32 to vector<2x4xf32>
    %23 = arith.maximumf %21, %22 : vector<2x4xf32>
    %c0_12 = arith.constant 0 : index
    %c0_13 = arith.constant 0 : index
    %24 = vector.load %arg3[%c0_12, %c0_13] : memref<4x32xf32, #tpu.memory_space<vmem>>, vector<4x32xf32>
    %cst_14 = arith.constant dense<0.000000e+00> : vector<2x32xf32>
    %25 = tpu.matmul %23, %24, %cst_14 {dimension_numbers = #tpu.dot_dimension_numbers<[1], [0], [0], [1], [0, 0, 1, 1], [], []>} : vector<2x4xf32>, vector<4x32xf32>, vector<2x32xf32> -> vector<2x32xf32>
    %cst_15 = arith.constant dense<0.000000e+00> : vector<32xf32>
    %26 = vector.multi_reduction <add>, %25, %cst_15 [0] : vector<2x32xf32> to vector<32xf32>
    %27 = vector.shape_cast %26 : vector<32xf32> to vector<1x32xf32>
    %28 = arith.negf %27 : vector<1x32xf32>
    %29 = math.exp %28 : vector<1x32xf32>
    %cst_16 = arith.constant 1.000000e+00 : f32
    %30 = vector.broadcast %cst_16 : f32 to vector<1x32xf32>
    %31 = arith.addf %30, %29 : vector<1x32xf32>
    %32 = arith.divf %30, %31 : vector<1x32xf32>
    %33 = vector.shape_cast %32 : vector<1x32xf32> to vector<1x1x32xf32>
    %34 = vector.broadcast %33 : vector<1x1x32xf32> to vector<16x16x32xf32>
    %35 = arith.mulf %1, %34 : vector<16x16x32xf32>
    %cst_17 = arith.constant dense<0.000000e+00> : vector<16x16xf32>
    %36 = vector.multi_reduction <add>, %35, %cst_17 [2] : vector<16x16x32xf32> to vector<16x16xf32>
    %cst_18 = arith.constant 3.200000e+01 : f32
    %37 = vector.broadcast %cst_18 : f32 to vector<16x16xf32>
    %38 = arith.divf %36, %37 : vector<16x16xf32>
    %cst_19 = arith.constant dense<0xFF800000> : vector<16x16xf32>
    %39 = vector.multi_reduction <maximumf>, %35, %cst_19 [2] : vector<16x16x32xf32> to vector<16x16xf32>
    %cst_20 = arith.constant 0.000000e+00 : f32
    %40 = vector.broadcast %cst_20 : f32 to vector<2x22x22xf32>
    %c0_21 = arith.constant 0 : index
    %c0_22 = arith.constant 0 : index
    %c0_23 = arith.constant 0 : index
    %41 = vector.load %arg7[%c0_21, %c0_22, %c0_23] : memref<2x22x22xf32, #tpu.memory_space<vmem>>, vector<2x22x22xf32>
    tpu.vector_store %arg7[%c0_21, %c0_22, %c0_23], %40 {strides = array<i32>} : memref<2x22x22xf32, #tpu.memory_space<vmem>>, vector<2x22x22xf32>,
    %42 = vector.shape_cast %38 : vector<16x16xf32> to vector<1x16x16xf32>
    %c0_24 = arith.constant 0 : index
    %c3 = arith.constant 3 : index
    %c3_25 = arith.constant 3 : index
    %43 = vector.load %arg7[%c0_24, %c3, %c3_25] : memref<2x22x22xf32, #tpu.memory_space<vmem>>, vector<1x16x16xf32>
    tpu.vector_store %arg7[%c0_24, %c3, %c3_25], %42 {strides = array<i32>} : memref<2x22x22xf32, #tpu.memory_space<vmem>>, vector<1x16x16xf32>,
    %44 = vector.shape_cast %39 : vector<16x16xf32> to vector<1x16x16xf32>
    %c1 = arith.constant 1 : index
    %c3_26 = arith.constant 3 : index
    %c3_27 = arith.constant 3 : index
    %45 = vector.load %arg7[%c1, %c3_26, %c3_27] : memref<2x22x22xf32, #tpu.memory_space<vmem>>, vector<1x16x16xf32>
    tpu.vector_store %arg7[%c1, %c3_26, %c3_27], %44 {strides = array<i32>} : memref<2x22x22xf32, #tpu.memory_space<vmem>>, vector<1x16x16xf32>,
    %c0_28 = arith.constant 0 : index
    %c0_29 = arith.constant 0 : index
    %c0_30 = arith.constant 0 : index
    %46 = vector.load %arg7[%c0_28, %c0_29, %c0_30] : memref<2x22x22xf32, #tpu.memory_space<vmem>>, vector<2x22x22xf32>
    %cst_31 = arith.constant 0.000000e+00 : f32
    %47 = vector.broadcast %cst_31 : f32 to vector<16x16xf32>
    %48 = vector.extract_strided_slice %46 {offsets = [0, 0, 0], sizes = [2, 22, 16], strides = [1, 1, 1]} : vector<2x22x22xf32> to vector<2x22x16xf32>
    %49 = vector.extract_strided_slice %48 {offsets = [0, 0, 0], sizes = [2, 16, 16], strides = [1, 1, 1]} : vector<2x22x16xf32> to vector<2x16x16xf32>
    %c0_32 = arith.constant 0 : index
    %50 = memref.load %arg4[%c0_32] : memref<98xf32, #tpu.memory_space<smem>>
    %c49 = arith.constant 49 : index
    %51 = memref.load %arg4[%c49] : memref<98xf32, #tpu.memory_space<smem>>
    %52 = vector.extract_strided_slice %49 {offsets = [0, 0, 0], sizes = [1, 16, 16], strides = [1, 1, 1]} : vector<2x16x16xf32> to vector<1x16x16xf32>
    %53 = vector.shape_cast %52 : vector<1x16x16xf32> to vector<16x16xf32>
    %54 = vector.broadcast %50 : f32 to vector<16x16xf32>
    %55 = arith.mulf %54, %53 : vector<16x16xf32>
    %56 = arith.addf %47, %55 : vector<16x16xf32>
    %57 = vector.extract_strided_slice %49 {offsets = [1, 0, 0], sizes = [1, 16, 16], strides = [1, 1, 1]} : vector<2x16x16xf32> to vector<1x16x16xf32>
    %58 = vector.shape_cast %57 : vector<1x16x16xf32> to vector<16x16xf32>
    %59 = vector.broadcast %51 : f32 to vector<16x16xf32>
    %60 = arith.mulf %59, %58 : vector<16x16xf32>
    %61 = arith.addf %56, %60 : vector<16x16xf32>
    %62 = vector.extract_strided_slice %48 {offsets = [0, 1, 0], sizes = [2, 16, 16], strides = [1, 1, 1]} : vector<2x22x16xf32> to vector<2x16x16xf32>
    %c7 = arith.constant 7 : index
    %63 = memref.load %arg4[%c7] : memref<98xf32, #tpu.memory_space<smem>>
    %c56 = arith.constant 56 : index
    %64 = memref.load %arg4[%c56] : memref<98xf32, #tpu.memory_space<smem>>
    %65 = vector.extract_strided_slice %62 {offsets = [0, 0, 0], sizes = [1, 16, 16], strides = [1, 1, 1]} : vector<2x16x16xf32> to vector<1x16x16xf32>
    %66 = vector.shape_cast %65 : vector<1x16x16xf32> to vector<16x16xf32>
    %67 = vector.broadcast %63 : f32 to vector<16x16xf32>
    %68 = arith.mulf %67, %66 : vector<16x16xf32>
    %69 = arith.addf %61, %68 : vector<16x16xf32>
    %70 = vector.extract_strided_slice %62 {offsets = [1, 0, 0], sizes = [1, 16, 16], strides = [1, 1, 1]} : vector<2x16x16xf32> to vector<1x16x16xf32>
    %71 = vector.shape_cast %70 : vector<1x16x16xf32> to vector<16x16xf32>
    %72 = vector.broadcast %64 : f32 to vector<16x16xf32>
    %73 = arith.mulf %72, %71 : vector<16x16xf32>
    %74 = arith.addf %69, %73 : vector<16x16xf32>
    %75 = vector.extract_strided_slice %48 {offsets = [0, 2, 0], sizes = [2, 16, 16], strides = [1, 1, 1]} : vector<2x22x16xf32> to vector<2x16x16xf32>
    %c14 = arith.constant 14 : index
    %76 = memref.load %arg4[%c14] : memref<98xf32, #tpu.memory_space<smem>>
    %c63 = arith.constant 63 : index
    %77 = memref.load %arg4[%c63] : memref<98xf32, #tpu.memory_space<smem>>
    %78 = vector.extract_strided_slice %75 {offsets = [0, 0, 0], sizes = [1, 16, 16], strides = [1, 1, 1]} : vector<2x16x16xf32> to vector<1x16x16xf32>
    %79 = vector.shape_cast %78 : vector<1x16x16xf32> to vector<16x16xf32>
    %80 = vector.broadcast %76 : f32 to vector<16x16xf32>
    %81 = arith.mulf %80, %79 : vector<16x16xf32>
    %82 = arith.addf %74, %81 : vector<16x16xf32>
    %83 = vector.extract_strided_slice %75 {offsets = [1, 0, 0], sizes = [1, 16, 16], strides = [1, 1, 1]} : vector<2x16x16xf32> to vector<1x16x16xf32>
    %84 = vector.shape_cast %83 : vector<1x16x16xf32> to vector<16x16xf32>
    %85 = vector.broadcast %77 : f32 to vector<16x16xf32>
    %86 = arith.mulf %85, %84 : vector<16x16xf32>
    %87 = arith.addf %82, %86 : vector<16x16xf32>
    %88 = vector.extract_strided_slice %48 {offsets = [0, 3, 0], sizes = [2, 16, 16], strides = [1, 1, 1]} : vector<2x22x16xf32> to vector<2x16x16xf32>
    %c21 = arith.constant 21 : index
    %89 = memref.load %arg4[%c21] : memref<98xf32, #tpu.memory_space<smem>>
    %c70 = arith.constant 70 : index
    %90 = memref.load %arg4[%c70] : memref<98xf32, #tpu.memory_space<smem>>
    %91 = vector.extract_strided_slice %88 {offsets = [0, 0, 0], sizes = [1, 16, 16], strides = [1, 1, 1]} : vector<2x16x16xf32> to vector<1x16x16xf32>
    %92 = vector.shape_cast %91 : vector<1x16x16xf32> to vector<16x16xf32>
    %93 = vector.broadcast %89 : f32 to vector<16x16xf32>
    %94 = arith.mulf %93, %92 : vector<16x16xf32>
    %95 = arith.addf %87, %94 : vector<16x16xf32>
    %96 = vector.extract_strided_slice %88 {offsets = [1, 0, 0], sizes = [1, 16, 16], strides = [1, 1, 1]} : vector<2x16x16xf32> to vector<1x16x16xf32>
    %97 = vector.shape_cast %96 : vector<1x16x16xf32> to vector<16x16xf32>
    %98 = vector.broadcast %90 : f32 to vector<16x16xf32>
    %99 = arith.mulf %98, %97 : vector<16x16xf32>
    %100 = arith.addf %95, %99 : vector<16x16xf32>
    %101 = vector.extract_strided_slice %48 {offsets = [0, 4, 0], sizes = [2, 16, 16], strides = [1, 1, 1]} : vector<2x22x16xf32> to vector<2x16x16xf32>
    %c28 = arith.constant 28 : index
    %102 = memref.load %arg4[%c28] : memref<98xf32, #tpu.memory_space<smem>>
    %c77 = arith.constant 77 : index
    %103 = memref.load %arg4[%c77] : memref<98xf32, #tpu.memory_space<smem>>
    %104 = vector.extract_strided_slice %101 {offsets = [0, 0, 0], sizes = [1, 16, 16], strides = [1, 1, 1]} : vector<2x16x16xf32> to vector<1x16x16xf32>
    %105 = vector.shape_cast %104 : vector<1x16x16xf32> to vector<16x16xf32>
    %106 = vector.broadcast %102 : f32 to vector<16x16xf32>
    %107 = arith.mulf %106, %105 : vector<16x16xf32>
    %108 = arith.addf %100, %107 : vector<16x16xf32>
    %109 = vector.extract_strided_slice %101 {offsets = [1, 0, 0], sizes = [1, 16, 16], strides = [1, 1, 1]} : vector<2x16x16xf32> to vector<1x16x16xf32>
    %110 = vector.shape_cast %109 : vector<1x16x16xf32> to vector<16x16xf32>
    %111 = vector.broadcast %103 : f32 to vector<16x16xf32>
    %112 = arith.mulf %111, %110 : vector<16x16xf32>
    %113 = arith.addf %108, %112 : vector<16x16xf32>
    %114 = vector.extract_strided_slice %48 {offsets = [0, 5, 0], sizes = [2, 16, 16], strides = [1, 1, 1]} : vector<2x22x16xf32> to vector<2x16x16xf32>
    %c35 = arith.constant 35 : index
    %115 = memref.load %arg4[%c35] : memref<98xf32, #tpu.memory_space<smem>>
    %c84 = arith.constant 84 : index
    %116 = memref.load %arg4[%c84] : memref<98xf32, #tpu.memory_space<smem>>
    %117 = vector.extract_strided_slice %114 {offsets = [0, 0, 0], sizes = [1, 16, 16], strides = [1, 1, 1]} : vector<2x16x16xf32> to vector<1x16x16xf32>
    %118 = vector.shape_cast %117 : vector<1x16x16xf32> to vector<16x16xf32>
    %119 = vector.broadcast %115 : f32 to vector<16x16xf32>
    %120 = arith.mulf %119, %118 : vector<16x16xf32>
    %121 = arith.addf %113, %120 : vector<16x16xf32>
    %122 = vector.extract_strided_slice %114 {offsets = [1, 0, 0], sizes = [1, 16, 16], strides = [1, 1, 1]} : vector<2x16x16xf32> to vector<1x16x16xf32>
    %123 = vector.shape_cast %122 : vector<1x16x16xf32> to vector<16x16xf32>
    %124 = vector.broadcast %116 : f32 to vector<16x16xf32>
    %125 = arith.mulf %124, %123 : vector<16x16xf32>
    %126 = arith.addf %121, %125 : vector<16x16xf32>
    %127 = vector.extract_strided_slice %48 {offsets = [0, 6, 0], sizes = [2, 16, 16], strides = [1, 1, 1]} : vector<2x22x16xf32> to vector<2x16x16xf32>
    %c42 = arith.constant 42 : index
    %128 = memref.load %arg4[%c42] : memref<98xf32, #tpu.memory_space<smem>>
    %c91 = arith.constant 91 : index
    %129 = memref.load %arg4[%c91] : memref<98xf32, #tpu.memory_space<smem>>
    %130 = vector.extract_strided_slice %127 {offsets = [0, 0, 0], sizes = [1, 16, 16], strides = [1, 1, 1]} : vector<2x16x16xf32> to vector<1x16x16xf32>
    %131 = vector.shape_cast %130 : vector<1x16x16xf32> to vector<16x16xf32>
    %132 = vector.broadcast %128 : f32 to vector<16x16xf32>
    %133 = arith.mulf %132, %131 : vector<16x16xf32>
    %134 = arith.addf %126, %133 : vector<16x16xf32>
    %135 = vector.extract_strided_slice %127 {offsets = [1, 0, 0], sizes = [1, 16, 16], strides = [1, 1, 1]} : vector<2x16x16xf32> to vector<1x16x16xf32>
    %136 = vector.shape_cast %135 : vector<1x16x16xf32> to vector<16x16xf32>
    %137 = vector.broadcast %129 : f32 to vector<16x16xf32>
    %138 = arith.mulf %137, %136 : vector<16x16xf32>
    %139 = arith.addf %134, %138 : vector<16x16xf32>
    %140 = vector.extract_strided_slice %46 {offsets = [0, 0, 1], sizes = [2, 22, 16], strides = [1, 1, 1]} : vector<2x22x22xf32> to vector<2x22x16xf32>
    %141 = vector.extract_strided_slice %140 {offsets = [0, 0, 0], sizes = [2, 16, 16], strides = [1, 1, 1]} : vector<2x22x16xf32> to vector<2x16x16xf32>
    %c1_33 = arith.constant 1 : index
    %142 = memref.load %arg4[%c1_33] : memref<98xf32, #tpu.memory_space<smem>>
    %c50 = arith.constant 50 : index
    %143 = memref.load %arg4[%c50] : memref<98xf32, #tpu.memory_space<smem>>
    %144 = vector.extract_strided_slice %141 {offsets = [0, 0, 0], sizes = [1, 16, 16], strides = [1, 1, 1]} : vector<2x16x16xf32> to vector<1x16x16xf32>
    %145 = vector.shape_cast %144 : vector<1x16x16xf32> to vector<16x16xf32>
    %146 = vector.broadcast %142 : f32 to vector<16x16xf32>
    %147 = arith.mulf %146, %145 : vector<16x16xf32>
    %148 = arith.addf %139, %147 : vector<16x16xf32>
    %149 = vector.extract_strided_slice %141 {offsets = [1, 0, 0], sizes = [1, 16, 16], strides = [1, 1, 1]} : vector<2x16x16xf32> to vector<1x16x16xf32>
    %150 = vector.shape_cast %149 : vector<1x16x16xf32> to vector<16x16xf32>
    %151 = vector.broadcast %143 : f32 to vector<16x16xf32>
    %152 = arith.mulf %151, %150 : vector<16x16xf32>
    %153 = arith.addf %148, %152 : vector<16x16xf32>
    %154 = vector.extract_strided_slice %140 {offsets = [0, 1, 0], sizes = [2, 16, 16], strides = [1, 1, 1]} : vector<2x22x16xf32> to vector<2x16x16xf32>
    %c8 = arith.constant 8 : index
    %155 = memref.load %arg4[%c8] : memref<98xf32, #tpu.memory_space<smem>>
    %c57 = arith.constant 57 : index
    %156 = memref.load %arg4[%c57] : memref<98xf32, #tpu.memory_space<smem>>
    %157 = vector.extract_strided_slice %154 {offsets = [0, 0, 0], sizes = [1, 16, 16], strides = [1, 1, 1]} : vector<2x16x16xf32> to vector<1x16x16xf32>
    %158 = vector.shape_cast %157 : vector<1x16x16xf32> to vector<16x16xf32>
    %159 = vector.broadcast %155 : f32 to vector<16x16xf32>
    %160 = arith.mulf %159, %158 : vector<16x16xf32>
    %161 = arith.addf %153, %160 : vector<16x16xf32>
    %162 = vector.extract_strided_slice %154 {offsets = [1, 0, 0], sizes = [1, 16, 16], strides = [1, 1, 1]} : vector<2x16x16xf32> to vector<1x16x16xf32>
    %163 = vector.shape_cast %162 : vector<1x16x16xf32> to vector<16x16xf32>
    %164 = vector.broadcast %156 : f32 to vector<16x16xf32>
    %165 = arith.mulf %164, %163 : vector<16x16xf32>
    %166 = arith.addf %161, %165 : vector<16x16xf32>
    %167 = vector.extract_strided_slice %140 {offsets = [0, 2, 0], sizes = [2, 16, 16], strides = [1, 1, 1]} : vector<2x22x16xf32> to vector<2x16x16xf32>
    %c15 = arith.constant 15 : index
    %168 = memref.load %arg4[%c15] : memref<98xf32, #tpu.memory_space<smem>>
    %c64 = arith.constant 64 : index
    %169 = memref.load %arg4[%c64] : memref<98xf32, #tpu.memory_space<smem>>
    %170 = vector.extract_strided_slice %167 {offsets = [0, 0, 0], sizes = [1, 16, 16], strides = [1, 1, 1]} : vector<2x16x16xf32> to vector<1x16x16xf32>
    %171 = vector.shape_cast %170 : vector<1x16x16xf32> to vector<16x16xf32>
    %172 = vector.broadcast %168 : f32 to vector<16x16xf32>
    %173 = arith.mulf %172, %171 : vector<16x16xf32>
    %174 = arith.addf %166, %173 : vector<16x16xf32>
    %175 = vector.extract_strided_slice %167 {offsets = [1, 0, 0], sizes = [1, 16, 16], strides = [1, 1, 1]} : vector<2x16x16xf32> to vector<1x16x16xf32>
    %176 = vector.shape_cast %175 : vector<1x16x16xf32> to vector<16x16xf32>
    %177 = vector.broadcast %169 : f32 to vector<16x16xf32>
    %178 = arith.mulf %177, %176 : vector<16x16xf32>
    %179 = arith.addf %174, %178 : vector<16x16xf32>
    %180 = vector.extract_strided_slice %140 {offsets = [0, 3, 0], sizes = [2, 16, 16], strides = [1, 1, 1]} : vector<2x22x16xf32> to vector<2x16x16xf32>
    %c22 = arith.constant 22 : index
    %181 = memref.load %arg4[%c22] : memref<98xf32, #tpu.memory_space<smem>>
    %c71 = arith.constant 71 : index
    %182 = memref.load %arg4[%c71] : memref<98xf32, #tpu.memory_space<smem>>
    %183 = vector.extract_strided_slice %180 {offsets = [0, 0, 0], sizes = [1, 16, 16], strides = [1, 1, 1]} : vector<2x16x16xf32> to vector<1x16x16xf32>
    %184 = vector.shape_cast %183 : vector<1x16x16xf32> to vector<16x16xf32>
    %185 = vector.broadcast %181 : f32 to vector<16x16xf32>
    %186 = arith.mulf %185, %184 : vector<16x16xf32>
    %187 = arith.addf %179, %186 : vector<16x16xf32>
    %188 = vector.extract_strided_slice %180 {offsets = [1, 0, 0], sizes = [1, 16, 16], strides = [1, 1, 1]} : vector<2x16x16xf32> to vector<1x16x16xf32>
    %189 = vector.shape_cast %188 : vector<1x16x16xf32> to vector<16x16xf32>
    %190 = vector.broadcast %182 : f32 to vector<16x16xf32>
    %191 = arith.mulf %190, %189 : vector<16x16xf32>
    %192 = arith.addf %187, %191 : vector<16x16xf32>
    %193 = vector.extract_strided_slice %140 {offsets = [0, 4, 0], sizes = [2, 16, 16], strides = [1, 1, 1]} : vector<2x22x16xf32> to vector<2x16x16xf32>
    %c29 = arith.constant 29 : index
    %194 = memref.load %arg4[%c29] : memref<98xf32, #tpu.memory_space<smem>>
    %c78 = arith.constant 78 : index
    %195 = memref.load %arg4[%c78] : memref<98xf32, #tpu.memory_space<smem>>
    %196 = vector.extract_strided_slice %193 {offsets = [0, 0, 0], sizes = [1, 16, 16], strides = [1, 1, 1]} : vector<2x16x16xf32> to vector<1x16x16xf32>
    %197 = vector.shape_cast %196 : vector<1x16x16xf32> to vector<16x16xf32>
    %198 = vector.broadcast %194 : f32 to vector<16x16xf32>
    %199 = arith.mulf %198, %197 : vector<16x16xf32>
    %200 = arith.addf %192, %199 : vector<16x16xf32>
    %201 = vector.extract_strided_slice %193 {offsets = [1, 0, 0], sizes = [1, 16, 16], strides = [1, 1, 1]} : vector<2x16x16xf32> to vector<1x16x16xf32>
    %202 = vector.shape_cast %201 : vector<1x16x16xf32> to vector<16x16xf32>
    %203 = vector.broadcast %195 : f32 to vector<16x16xf32>
    %204 = arith.mulf %203, %202 : vector<16x16xf32>
    %205 = arith.addf %200, %204 : vector<16x16xf32>
    %206 = vector.extract_strided_slice %140 {offsets = [0, 5, 0], sizes = [2, 16, 16], strides = [1, 1, 1]} : vector<2x22x16xf32> to vector<2x16x16xf32>
    %c36 = arith.constant 36 : index
    %207 = memref.load %arg4[%c36] : memref<98xf32, #tpu.memory_space<smem>>
    %c85 = arith.constant 85 : index
    %208 = memref.load %arg4[%c85] : memref<98xf32, #tpu.memory_space<smem>>
    %209 = vector.extract_strided_slice %206 {offsets = [0, 0, 0], sizes = [1, 16, 16], strides = [1, 1, 1]} : vector<2x16x16xf32> to vector<1x16x16xf32>
    %210 = vector.shape_cast %209 : vector<1x16x16xf32> to vector<16x16xf32>
    %211 = vector.broadcast %207 : f32 to vector<16x16xf32>
    %212 = arith.mulf %211, %210 : vector<16x16xf32>
    %213 = arith.addf %205, %212 : vector<16x16xf32>
    %214 = vector.extract_strided_slice %206 {offsets = [1, 0, 0], sizes = [1, 16, 16], strides = [1, 1, 1]} : vector<2x16x16xf32> to vector<1x16x16xf32>
    %215 = vector.shape_cast %214 : vector<1x16x16xf32> to vector<16x16xf32>
    %216 = vector.broadcast %208 : f32 to vector<16x16xf32>
    %217 = arith.mulf %216, %215 : vector<16x16xf32>
    %218 = arith.addf %213, %217 : vector<16x16xf32>
    %219 = vector.extract_strided_slice %140 {offsets = [0, 6, 0], sizes = [2, 16, 16], strides = [1, 1, 1]} : vector<2x22x16xf32> to vector<2x16x16xf32>
    %c43 = arith.constant 43 : index
    %220 = memref.load %arg4[%c43] : memref<98xf32, #tpu.memory_space<smem>>
    %c92 = arith.constant 92 : index
    %221 = memref.load %arg4[%c92] : memref<98xf32, #tpu.memory_space<smem>>
    %222 = vector.extract_strided_slice %219 {offsets = [0, 0, 0], sizes = [1, 16, 16], strides = [1, 1, 1]} : vector<2x16x16xf32> to vector<1x16x16xf32>
    %223 = vector.shape_cast %222 : vector<1x16x16xf32> to vector<16x16xf32>
    %224 = vector.broadcast %220 : f32 to vector<16x16xf32>
    %225 = arith.mulf %224, %223 : vector<16x16xf32>
    %226 = arith.addf %218, %225 : vector<16x16xf32>
    %227 = vector.extract_strided_slice %219 {offsets = [1, 0, 0], sizes = [1, 16, 16], strides = [1, 1, 1]} : vector<2x16x16xf32> to vector<1x16x16xf32>
    %228 = vector.shape_cast %227 : vector<1x16x16xf32> to vector<16x16xf32>
    %229 = vector.broadcast %221 : f32 to vector<16x16xf32>
    %230 = arith.mulf %229, %228 : vector<16x16xf32>
    %231 = arith.addf %226, %230 : vector<16x16xf32>
    %232 = vector.extract_strided_slice %46 {offsets = [0, 0, 2], sizes = [2, 22, 16], strides = [1, 1, 1]} : vector<2x22x22xf32> to vector<2x22x16xf32>
    %233 = vector.extract_strided_slice %232 {offsets = [0, 0, 0], sizes = [2, 16, 16], strides = [1, 1, 1]} : vector<2x22x16xf32> to vector<2x16x16xf32>
    %c2 = arith.constant 2 : index
    %234 = memref.load %arg4[%c2] : memref<98xf32, #tpu.memory_space<smem>>
    %c51 = arith.constant 51 : index
    %235 = memref.load %arg4[%c51] : memref<98xf32, #tpu.memory_space<smem>>
    %236 = vector.extract_strided_slice %233 {offsets = [0, 0, 0], sizes = [1, 16, 16], strides = [1, 1, 1]} : vector<2x16x16xf32> to vector<1x16x16xf32>
    %237 = vector.shape_cast %236 : vector<1x16x16xf32> to vector<16x16xf32>
    %238 = vector.broadcast %234 : f32 to vector<16x16xf32>
    %239 = arith.mulf %238, %237 : vector<16x16xf32>
    %240 = arith.addf %231, %239 : vector<16x16xf32>
    %241 = vector.extract_strided_slice %233 {offsets = [1, 0, 0], sizes = [1, 16, 16], strides = [1, 1, 1]} : vector<2x16x16xf32> to vector<1x16x16xf32>
    %242 = vector.shape_cast %241 : vector<1x16x16xf32> to vector<16x16xf32>
    %243 = vector.broadcast %235 : f32 to vector<16x16xf32>
    %244 = arith.mulf %243, %242 : vector<16x16xf32>
    %245 = arith.addf %240, %244 : vector<16x16xf32>
    %246 = vector.extract_strided_slice %232 {offsets = [0, 1, 0], sizes = [2, 16, 16], strides = [1, 1, 1]} : vector<2x22x16xf32> to vector<2x16x16xf32>
    %c9 = arith.constant 9 : index
    %247 = memref.load %arg4[%c9] : memref<98xf32, #tpu.memory_space<smem>>
    %c58 = arith.constant 58 : index
    %248 = memref.load %arg4[%c58] : memref<98xf32, #tpu.memory_space<smem>>
    %249 = vector.extract_strided_slice %246 {offsets = [0, 0, 0], sizes = [1, 16, 16], strides = [1, 1, 1]} : vector<2x16x16xf32> to vector<1x16x16xf32>
    %250 = vector.shape_cast %249 : vector<1x16x16xf32> to vector<16x16xf32>
    %251 = vector.broadcast %247 : f32 to vector<16x16xf32>
    %252 = arith.mulf %251, %250 : vector<16x16xf32>
    %253 = arith.addf %245, %252 : vector<16x16xf32>
    %254 = vector.extract_strided_slice %246 {offsets = [1, 0, 0], sizes = [1, 16, 16], strides = [1, 1, 1]} : vector<2x16x16xf32> to vector<1x16x16xf32>
    %255 = vector.shape_cast %254 : vector<1x16x16xf32> to vector<16x16xf32>
    %256 = vector.broadcast %248 : f32 to vector<16x16xf32>
    %257 = arith.mulf %256, %255 : vector<16x16xf32>
    %258 = arith.addf %253, %257 : vector<16x16xf32>
    %259 = vector.extract_strided_slice %232 {offsets = [0, 2, 0], sizes = [2, 16, 16], strides = [1, 1, 1]} : vector<2x22x16xf32> to vector<2x16x16xf32>
    %c16 = arith.constant 16 : index
    %260 = memref.load %arg4[%c16] : memref<98xf32, #tpu.memory_space<smem>>
    %c65 = arith.constant 65 : index
    %261 = memref.load %arg4[%c65] : memref<98xf32, #tpu.memory_space<smem>>
    %262 = vector.extract_strided_slice %259 {offsets = [0, 0, 0], sizes = [1, 16, 16], strides = [1, 1, 1]} : vector<2x16x16xf32> to vector<1x16x16xf32>
    %263 = vector.shape_cast %262 : vector<1x16x16xf32> to vector<16x16xf32>
    %264 = vector.broadcast %260 : f32 to vector<16x16xf32>
    %265 = arith.mulf %264, %263 : vector<16x16xf32>
    %266 = arith.addf %258, %265 : vector<16x16xf32>
    %267 = vector.extract_strided_slice %259 {offsets = [1, 0, 0], sizes = [1, 16, 16], strides = [1, 1, 1]} : vector<2x16x16xf32> to vector<1x16x16xf32>
    %268 = vector.shape_cast %267 : vector<1x16x16xf32> to vector<16x16xf32>
    %269 = vector.broadcast %261 : f32 to vector<16x16xf32>
    %270 = arith.mulf %269, %268 : vector<16x16xf32>
    %271 = arith.addf %266, %270 : vector<16x16xf32>
    %272 = vector.extract_strided_slice %232 {offsets = [0, 3, 0], sizes = [2, 16, 16], strides = [1, 1, 1]} : vector<2x22x16xf32> to vector<2x16x16xf32>
    %c23 = arith.constant 23 : index
    %273 = memref.load %arg4[%c23] : memref<98xf32, #tpu.memory_space<smem>>
    %c72 = arith.constant 72 : index
    %274 = memref.load %arg4[%c72] : memref<98xf32, #tpu.memory_space<smem>>
    %275 = vector.extract_strided_slice %272 {offsets = [0, 0, 0], sizes = [1, 16, 16], strides = [1, 1, 1]} : vector<2x16x16xf32> to vector<1x16x16xf32>
    %276 = vector.shape_cast %275 : vector<1x16x16xf32> to vector<16x16xf32>
    %277 = vector.broadcast %273 : f32 to vector<16x16xf32>
    %278 = arith.mulf %277, %276 : vector<16x16xf32>
    %279 = arith.addf %271, %278 : vector<16x16xf32>
    %280 = vector.extract_strided_slice %272 {offsets = [1, 0, 0], sizes = [1, 16, 16], strides = [1, 1, 1]} : vector<2x16x16xf32> to vector<1x16x16xf32>
    %281 = vector.shape_cast %280 : vector<1x16x16xf32> to vector<16x16xf32>
    %282 = vector.broadcast %274 : f32 to vector<16x16xf32>
    %283 = arith.mulf %282, %281 : vector<16x16xf32>
    %284 = arith.addf %279, %283 : vector<16x16xf32>
    %285 = vector.extract_strided_slice %232 {offsets = [0, 4, 0], sizes = [2, 16, 16], strides = [1, 1, 1]} : vector<2x22x16xf32> to vector<2x16x16xf32>
    %c30 = arith.constant 30 : index
    %286 = memref.load %arg4[%c30] : memref<98xf32, #tpu.memory_space<smem>>
    %c79 = arith.constant 79 : index
    %287 = memref.load %arg4[%c79] : memref<98xf32, #tpu.memory_space<smem>>
    %288 = vector.extract_strided_slice %285 {offsets = [0, 0, 0], sizes = [1, 16, 16], strides = [1, 1, 1]} : vector<2x16x16xf32> to vector<1x16x16xf32>
    %289 = vector.shape_cast %288 : vector<1x16x16xf32> to vector<16x16xf32>
    %290 = vector.broadcast %286 : f32 to vector<16x16xf32>
    %291 = arith.mulf %290, %289 : vector<16x16xf32>
    %292 = arith.addf %284, %291 : vector<16x16xf32>
    %293 = vector.extract_strided_slice %285 {offsets = [1, 0, 0], sizes = [1, 16, 16], strides = [1, 1, 1]} : vector<2x16x16xf32> to vector<1x16x16xf32>
    %294 = vector.shape_cast %293 : vector<1x16x16xf32> to vector<16x16xf32>
    %295 = vector.broadcast %287 : f32 to vector<16x16xf32>
    %296 = arith.mulf %295, %294 : vector<16x16xf32>
    %297 = arith.addf %292, %296 : vector<16x16xf32>
    %298 = vector.extract_strided_slice %232 {offsets = [0, 5, 0], sizes = [2, 16, 16], strides = [1, 1, 1]} : vector<2x22x16xf32> to vector<2x16x16xf32>
    %c37 = arith.constant 37 : index
    %299 = memref.load %arg4[%c37] : memref<98xf32, #tpu.memory_space<smem>>
    %c86 = arith.constant 86 : index
    %300 = memref.load %arg4[%c86] : memref<98xf32, #tpu.memory_space<smem>>
    %301 = vector.extract_strided_slice %298 {offsets = [0, 0, 0], sizes = [1, 16, 16], strides = [1, 1, 1]} : vector<2x16x16xf32> to vector<1x16x16xf32>
    %302 = vector.shape_cast %301 : vector<1x16x16xf32> to vector<16x16xf32>
    %303 = vector.broadcast %299 : f32 to vector<16x16xf32>
    %304 = arith.mulf %303, %302 : vector<16x16xf32>
    %305 = arith.addf %297, %304 : vector<16x16xf32>
    %306 = vector.extract_strided_slice %298 {offsets = [1, 0, 0], sizes = [1, 16, 16], strides = [1, 1, 1]} : vector<2x16x16xf32> to vector<1x16x16xf32>
    %307 = vector.shape_cast %306 : vector<1x16x16xf32> to vector<16x16xf32>
    %308 = vector.broadcast %300 : f32 to vector<16x16xf32>
    %309 = arith.mulf %308, %307 : vector<16x16xf32>
    %310 = arith.addf %305, %309 : vector<16x16xf32>
    %311 = vector.extract_strided_slice %232 {offsets = [0, 6, 0], sizes = [2, 16, 16], strides = [1, 1, 1]} : vector<2x22x16xf32> to vector<2x16x16xf32>
    %c44 = arith.constant 44 : index
    %312 = memref.load %arg4[%c44] : memref<98xf32, #tpu.memory_space<smem>>
    %c93 = arith.constant 93 : index
    %313 = memref.load %arg4[%c93] : memref<98xf32, #tpu.memory_space<smem>>
    %314 = vector.extract_strided_slice %311 {offsets = [0, 0, 0], sizes = [1, 16, 16], strides = [1, 1, 1]} : vector<2x16x16xf32> to vector<1x16x16xf32>
    %315 = vector.shape_cast %314 : vector<1x16x16xf32> to vector<16x16xf32>
    %316 = vector.broadcast %312 : f32 to vector<16x16xf32>
    %317 = arith.mulf %316, %315 : vector<16x16xf32>
    %318 = arith.addf %310, %317 : vector<16x16xf32>
    %319 = vector.extract_strided_slice %311 {offsets = [1, 0, 0], sizes = [1, 16, 16], strides = [1, 1, 1]} : vector<2x16x16xf32> to vector<1x16x16xf32>
    %320 = vector.shape_cast %319 : vector<1x16x16xf32> to vector<16x16xf32>
    %321 = vector.broadcast %313 : f32 to vector<16x16xf32>
    %322 = arith.mulf %321, %320 : vector<16x16xf32>
    %323 = arith.addf %318, %322 : vector<16x16xf32>
    %324 = vector.extract_strided_slice %46 {offsets = [0, 0, 3], sizes = [2, 22, 16], strides = [1, 1, 1]} : vector<2x22x22xf32> to vector<2x22x16xf32>
    %325 = vector.extract_strided_slice %324 {offsets = [0, 0, 0], sizes = [2, 16, 16], strides = [1, 1, 1]} : vector<2x22x16xf32> to vector<2x16x16xf32>
    %c3_34 = arith.constant 3 : index
    %326 = memref.load %arg4[%c3_34] : memref<98xf32, #tpu.memory_space<smem>>
    %c52 = arith.constant 52 : index
    %327 = memref.load %arg4[%c52] : memref<98xf32, #tpu.memory_space<smem>>
    %328 = vector.extract_strided_slice %325 {offsets = [0, 0, 0], sizes = [1, 16, 16], strides = [1, 1, 1]} : vector<2x16x16xf32> to vector<1x16x16xf32>
    %329 = vector.shape_cast %328 : vector<1x16x16xf32> to vector<16x16xf32>
    %330 = vector.broadcast %326 : f32 to vector<16x16xf32>
    %331 = arith.mulf %330, %329 : vector<16x16xf32>
    %332 = arith.addf %323, %331 : vector<16x16xf32>
    %333 = vector.extract_strided_slice %325 {offsets = [1, 0, 0], sizes = [1, 16, 16], strides = [1, 1, 1]} : vector<2x16x16xf32> to vector<1x16x16xf32>
    %334 = vector.shape_cast %333 : vector<1x16x16xf32> to vector<16x16xf32>
    %335 = vector.broadcast %327 : f32 to vector<16x16xf32>
    %336 = arith.mulf %335, %334 : vector<16x16xf32>
    %337 = arith.addf %332, %336 : vector<16x16xf32>
    %338 = vector.extract_strided_slice %324 {offsets = [0, 1, 0], sizes = [2, 16, 16], strides = [1, 1, 1]} : vector<2x22x16xf32> to vector<2x16x16xf32>
    %c10 = arith.constant 10 : index
    %339 = memref.load %arg4[%c10] : memref<98xf32, #tpu.memory_space<smem>>
    %c59 = arith.constant 59 : index
    %340 = memref.load %arg4[%c59] : memref<98xf32, #tpu.memory_space<smem>>
    %341 = vector.extract_strided_slice %338 {offsets = [0, 0, 0], sizes = [1, 16, 16], strides = [1, 1, 1]} : vector<2x16x16xf32> to vector<1x16x16xf32>
    %342 = vector.shape_cast %341 : vector<1x16x16xf32> to vector<16x16xf32>
    %343 = vector.broadcast %339 : f32 to vector<16x16xf32>
    %344 = arith.mulf %343, %342 : vector<16x16xf32>
    %345 = arith.addf %337, %344 : vector<16x16xf32>
    %346 = vector.extract_strided_slice %338 {offsets = [1, 0, 0], sizes = [1, 16, 16], strides = [1, 1, 1]} : vector<2x16x16xf32> to vector<1x16x16xf32>
    %347 = vector.shape_cast %346 : vector<1x16x16xf32> to vector<16x16xf32>
    %348 = vector.broadcast %340 : f32 to vector<16x16xf32>
    %349 = arith.mulf %348, %347 : vector<16x16xf32>
    %350 = arith.addf %345, %349 : vector<16x16xf32>
    %351 = vector.extract_strided_slice %324 {offsets = [0, 2, 0], sizes = [2, 16, 16], strides = [1, 1, 1]} : vector<2x22x16xf32> to vector<2x16x16xf32>
    %c17 = arith.constant 17 : index
    %352 = memref.load %arg4[%c17] : memref<98xf32, #tpu.memory_space<smem>>
    %c66 = arith.constant 66 : index
    %353 = memref.load %arg4[%c66] : memref<98xf32, #tpu.memory_space<smem>>
    %354 = vector.extract_strided_slice %351 {offsets = [0, 0, 0], sizes = [1, 16, 16], strides = [1, 1, 1]} : vector<2x16x16xf32> to vector<1x16x16xf32>
    %355 = vector.shape_cast %354 : vector<1x16x16xf32> to vector<16x16xf32>
    %356 = vector.broadcast %352 : f32 to vector<16x16xf32>
    %357 = arith.mulf %356, %355 : vector<16x16xf32>
    %358 = arith.addf %350, %357 : vector<16x16xf32>
    %359 = vector.extract_strided_slice %351 {offsets = [1, 0, 0], sizes = [1, 16, 16], strides = [1, 1, 1]} : vector<2x16x16xf32> to vector<1x16x16xf32>
    %360 = vector.shape_cast %359 : vector<1x16x16xf32> to vector<16x16xf32>
    %361 = vector.broadcast %353 : f32 to vector<16x16xf32>
    %362 = arith.mulf %361, %360 : vector<16x16xf32>
    %363 = arith.addf %358, %362 : vector<16x16xf32>
    %364 = vector.extract_strided_slice %324 {offsets = [0, 3, 0], sizes = [2, 16, 16], strides = [1, 1, 1]} : vector<2x22x16xf32> to vector<2x16x16xf32>
    %c24 = arith.constant 24 : index
    %365 = memref.load %arg4[%c24] : memref<98xf32, #tpu.memory_space<smem>>
    %c73 = arith.constant 73 : index
    %366 = memref.load %arg4[%c73] : memref<98xf32, #tpu.memory_space<smem>>
    %367 = vector.extract_strided_slice %364 {offsets = [0, 0, 0], sizes = [1, 16, 16], strides = [1, 1, 1]} : vector<2x16x16xf32> to vector<1x16x16xf32>
    %368 = vector.shape_cast %367 : vector<1x16x16xf32> to vector<16x16xf32>
    %369 = vector.broadcast %365 : f32 to vector<16x16xf32>
    %370 = arith.mulf %369, %368 : vector<16x16xf32>
    %371 = arith.addf %363, %370 : vector<16x16xf32>
    %372 = vector.extract_strided_slice %364 {offsets = [1, 0, 0], sizes = [1, 16, 16], strides = [1, 1, 1]} : vector<2x16x16xf32> to vector<1x16x16xf32>
    %373 = vector.shape_cast %372 : vector<1x16x16xf32> to vector<16x16xf32>
    %374 = vector.broadcast %366 : f32 to vector<16x16xf32>
    %375 = arith.mulf %374, %373 : vector<16x16xf32>
    %376 = arith.addf %371, %375 : vector<16x16xf32>
    %377 = vector.extract_strided_slice %324 {offsets = [0, 4, 0], sizes = [2, 16, 16], strides = [1, 1, 1]} : vector<2x22x16xf32> to vector<2x16x16xf32>
    %c31 = arith.constant 31 : index
    %378 = memref.load %arg4[%c31] : memref<98xf32, #tpu.memory_space<smem>>
    %c80 = arith.constant 80 : index
    %379 = memref.load %arg4[%c80] : memref<98xf32, #tpu.memory_space<smem>>
    %380 = vector.extract_strided_slice %377 {offsets = [0, 0, 0], sizes = [1, 16, 16], strides = [1, 1, 1]} : vector<2x16x16xf32> to vector<1x16x16xf32>
    %381 = vector.shape_cast %380 : vector<1x16x16xf32> to vector<16x16xf32>
    %382 = vector.broadcast %378 : f32 to vector<16x16xf32>
    %383 = arith.mulf %382, %381 : vector<16x16xf32>
    %384 = arith.addf %376, %383 : vector<16x16xf32>
    %385 = vector.extract_strided_slice %377 {offsets = [1, 0, 0], sizes = [1, 16, 16], strides = [1, 1, 1]} : vector<2x16x16xf32> to vector<1x16x16xf32>
    %386 = vector.shape_cast %385 : vector<1x16x16xf32> to vector<16x16xf32>
    %387 = vector.broadcast %379 : f32 to vector<16x16xf32>
    %388 = arith.mulf %387, %386 : vector<16x16xf32>
    %389 = arith.addf %384, %388 : vector<16x16xf32>
    %390 = vector.extract_strided_slice %324 {offsets = [0, 5, 0], sizes = [2, 16, 16], strides = [1, 1, 1]} : vector<2x22x16xf32> to vector<2x16x16xf32>
    %c38 = arith.constant 38 : index
    %391 = memref.load %arg4[%c38] : memref<98xf32, #tpu.memory_space<smem>>
    %c87 = arith.constant 87 : index
    %392 = memref.load %arg4[%c87] : memref<98xf32, #tpu.memory_space<smem>>
    %393 = vector.extract_strided_slice %390 {offsets = [0, 0, 0], sizes = [1, 16, 16], strides = [1, 1, 1]} : vector<2x16x16xf32> to vector<1x16x16xf32>
    %394 = vector.shape_cast %393 : vector<1x16x16xf32> to vector<16x16xf32>
    %395 = vector.broadcast %391 : f32 to vector<16x16xf32>
    %396 = arith.mulf %395, %394 : vector<16x16xf32>
    %397 = arith.addf %389, %396 : vector<16x16xf32>
    %398 = vector.extract_strided_slice %390 {offsets = [1, 0, 0], sizes = [1, 16, 16], strides = [1, 1, 1]} : vector<2x16x16xf32> to vector<1x16x16xf32>
    %399 = vector.shape_cast %398 : vector<1x16x16xf32> to vector<16x16xf32>
    %400 = vector.broadcast %392 : f32 to vector<16x16xf32>
    %401 = arith.mulf %400, %399 : vector<16x16xf32>
    %402 = arith.addf %397, %401 : vector<16x16xf32>
    %403 = vector.extract_strided_slice %324 {offsets = [0, 6, 0], sizes = [2, 16, 16], strides = [1, 1, 1]} : vector<2x22x16xf32> to vector<2x16x16xf32>
    %c45 = arith.constant 45 : index
    %404 = memref.load %arg4[%c45] : memref<98xf32, #tpu.memory_space<smem>>
    %c94 = arith.constant 94 : index
    %405 = memref.load %arg4[%c94] : memref<98xf32, #tpu.memory_space<smem>>
    %406 = vector.extract_strided_slice %403 {offsets = [0, 0, 0], sizes = [1, 16, 16], strides = [1, 1, 1]} : vector<2x16x16xf32> to vector<1x16x16xf32>
    %407 = vector.shape_cast %406 : vector<1x16x16xf32> to vector<16x16xf32>
    %408 = vector.broadcast %404 : f32 to vector<16x16xf32>
    %409 = arith.mulf %408, %407 : vector<16x16xf32>
    %410 = arith.addf %402, %409 : vector<16x16xf32>
    %411 = vector.extract_strided_slice %403 {offsets = [1, 0, 0], sizes = [1, 16, 16], strides = [1, 1, 1]} : vector<2x16x16xf32> to vector<1x16x16xf32>
    %412 = vector.shape_cast %411 : vector<1x16x16xf32> to vector<16x16xf32>
    %413 = vector.broadcast %405 : f32 to vector<16x16xf32>
    %414 = arith.mulf %413, %412 : vector<16x16xf32>
    %415 = arith.addf %410, %414 : vector<16x16xf32>
    %416 = vector.extract_strided_slice %46 {offsets = [0, 0, 4], sizes = [2, 22, 16], strides = [1, 1, 1]} : vector<2x22x22xf32> to vector<2x22x16xf32>
    %417 = vector.extract_strided_slice %416 {offsets = [0, 0, 0], sizes = [2, 16, 16], strides = [1, 1, 1]} : vector<2x22x16xf32> to vector<2x16x16xf32>
    %c4 = arith.constant 4 : index
    %418 = memref.load %arg4[%c4] : memref<98xf32, #tpu.memory_space<smem>>
    %c53 = arith.constant 53 : index
    %419 = memref.load %arg4[%c53] : memref<98xf32, #tpu.memory_space<smem>>
    %420 = vector.extract_strided_slice %417 {offsets = [0, 0, 0], sizes = [1, 16, 16], strides = [1, 1, 1]} : vector<2x16x16xf32> to vector<1x16x16xf32>
    %421 = vector.shape_cast %420 : vector<1x16x16xf32> to vector<16x16xf32>
    %422 = vector.broadcast %418 : f32 to vector<16x16xf32>
    %423 = arith.mulf %422, %421 : vector<16x16xf32>
    %424 = arith.addf %415, %423 : vector<16x16xf32>
    %425 = vector.extract_strided_slice %417 {offsets = [1, 0, 0], sizes = [1, 16, 16], strides = [1, 1, 1]} : vector<2x16x16xf32> to vector<1x16x16xf32>
    %426 = vector.shape_cast %425 : vector<1x16x16xf32> to vector<16x16xf32>
    %427 = vector.broadcast %419 : f32 to vector<16x16xf32>
    %428 = arith.mulf %427, %426 : vector<16x16xf32>
    %429 = arith.addf %424, %428 : vector<16x16xf32>
    %430 = vector.extract_strided_slice %416 {offsets = [0, 1, 0], sizes = [2, 16, 16], strides = [1, 1, 1]} : vector<2x22x16xf32> to vector<2x16x16xf32>
    %c11 = arith.constant 11 : index
    %431 = memref.load %arg4[%c11] : memref<98xf32, #tpu.memory_space<smem>>
    %c60 = arith.constant 60 : index
    %432 = memref.load %arg4[%c60] : memref<98xf32, #tpu.memory_space<smem>>
    %433 = vector.extract_strided_slice %430 {offsets = [0, 0, 0], sizes = [1, 16, 16], strides = [1, 1, 1]} : vector<2x16x16xf32> to vector<1x16x16xf32>
    %434 = vector.shape_cast %433 : vector<1x16x16xf32> to vector<16x16xf32>
    %435 = vector.broadcast %431 : f32 to vector<16x16xf32>
    %436 = arith.mulf %435, %434 : vector<16x16xf32>
    %437 = arith.addf %429, %436 : vector<16x16xf32>
    %438 = vector.extract_strided_slice %430 {offsets = [1, 0, 0], sizes = [1, 16, 16], strides = [1, 1, 1]} : vector<2x16x16xf32> to vector<1x16x16xf32>
    %439 = vector.shape_cast %438 : vector<1x16x16xf32> to vector<16x16xf32>
    %440 = vector.broadcast %432 : f32 to vector<16x16xf32>
    %441 = arith.mulf %440, %439 : vector<16x16xf32>
    %442 = arith.addf %437, %441 : vector<16x16xf32>
    %443 = vector.extract_strided_slice %416 {offsets = [0, 2, 0], sizes = [2, 16, 16], strides = [1, 1, 1]} : vector<2x22x16xf32> to vector<2x16x16xf32>
    %c18 = arith.constant 18 : index
    %444 = memref.load %arg4[%c18] : memref<98xf32, #tpu.memory_space<smem>>
    %c67 = arith.constant 67 : index
    %445 = memref.load %arg4[%c67] : memref<98xf32, #tpu.memory_space<smem>>
    %446 = vector.extract_strided_slice %443 {offsets = [0, 0, 0], sizes = [1, 16, 16], strides = [1, 1, 1]} : vector<2x16x16xf32> to vector<1x16x16xf32>
    %447 = vector.shape_cast %446 : vector<1x16x16xf32> to vector<16x16xf32>
    %448 = vector.broadcast %444 : f32 to vector<16x16xf32>
    %449 = arith.mulf %448, %447 : vector<16x16xf32>
    %450 = arith.addf %442, %449 : vector<16x16xf32>
    %451 = vector.extract_strided_slice %443 {offsets = [1, 0, 0], sizes = [1, 16, 16], strides = [1, 1, 1]} : vector<2x16x16xf32> to vector<1x16x16xf32>
    %452 = vector.shape_cast %451 : vector<1x16x16xf32> to vector<16x16xf32>
    %453 = vector.broadcast %445 : f32 to vector<16x16xf32>
    %454 = arith.mulf %453, %452 : vector<16x16xf32>
    %455 = arith.addf %450, %454 : vector<16x16xf32>
    %456 = vector.extract_strided_slice %416 {offsets = [0, 3, 0], sizes = [2, 16, 16], strides = [1, 1, 1]} : vector<2x22x16xf32> to vector<2x16x16xf32>
    %c25 = arith.constant 25 : index
    %457 = memref.load %arg4[%c25] : memref<98xf32, #tpu.memory_space<smem>>
    %c74 = arith.constant 74 : index
    %458 = memref.load %arg4[%c74] : memref<98xf32, #tpu.memory_space<smem>>
    %459 = vector.extract_strided_slice %456 {offsets = [0, 0, 0], sizes = [1, 16, 16], strides = [1, 1, 1]} : vector<2x16x16xf32> to vector<1x16x16xf32>
    %460 = vector.shape_cast %459 : vector<1x16x16xf32> to vector<16x16xf32>
    %461 = vector.broadcast %457 : f32 to vector<16x16xf32>
    %462 = arith.mulf %461, %460 : vector<16x16xf32>
    %463 = arith.addf %455, %462 : vector<16x16xf32>
    %464 = vector.extract_strided_slice %456 {offsets = [1, 0, 0], sizes = [1, 16, 16], strides = [1, 1, 1]} : vector<2x16x16xf32> to vector<1x16x16xf32>
    %465 = vector.shape_cast %464 : vector<1x16x16xf32> to vector<16x16xf32>
    %466 = vector.broadcast %458 : f32 to vector<16x16xf32>
    %467 = arith.mulf %466, %465 : vector<16x16xf32>
    %468 = arith.addf %463, %467 : vector<16x16xf32>
    %469 = vector.extract_strided_slice %416 {offsets = [0, 4, 0], sizes = [2, 16, 16], strides = [1, 1, 1]} : vector<2x22x16xf32> to vector<2x16x16xf32>
    %c32 = arith.constant 32 : index
    %470 = memref.load %arg4[%c32] : memref<98xf32, #tpu.memory_space<smem>>
    %c81 = arith.constant 81 : index
    %471 = memref.load %arg4[%c81] : memref<98xf32, #tpu.memory_space<smem>>
    %472 = vector.extract_strided_slice %469 {offsets = [0, 0, 0], sizes = [1, 16, 16], strides = [1, 1, 1]} : vector<2x16x16xf32> to vector<1x16x16xf32>
    %473 = vector.shape_cast %472 : vector<1x16x16xf32> to vector<16x16xf32>
    %474 = vector.broadcast %470 : f32 to vector<16x16xf32>
    %475 = arith.mulf %474, %473 : vector<16x16xf32>
    %476 = arith.addf %468, %475 : vector<16x16xf32>
    %477 = vector.extract_strided_slice %469 {offsets = [1, 0, 0], sizes = [1, 16, 16], strides = [1, 1, 1]} : vector<2x16x16xf32> to vector<1x16x16xf32>
    %478 = vector.shape_cast %477 : vector<1x16x16xf32> to vector<16x16xf32>
    %479 = vector.broadcast %471 : f32 to vector<16x16xf32>
    %480 = arith.mulf %479, %478 : vector<16x16xf32>
    %481 = arith.addf %476, %480 : vector<16x16xf32>
    %482 = vector.extract_strided_slice %416 {offsets = [0, 5, 0], sizes = [2, 16, 16], strides = [1, 1, 1]} : vector<2x22x16xf32> to vector<2x16x16xf32>
    %c39 = arith.constant 39 : index
    %483 = memref.load %arg4[%c39] : memref<98xf32, #tpu.memory_space<smem>>
    %c88 = arith.constant 88 : index
    %484 = memref.load %arg4[%c88] : memref<98xf32, #tpu.memory_space<smem>>
    %485 = vector.extract_strided_slice %482 {offsets = [0, 0, 0], sizes = [1, 16, 16], strides = [1, 1, 1]} : vector<2x16x16xf32> to vector<1x16x16xf32>
    %486 = vector.shape_cast %485 : vector<1x16x16xf32> to vector<16x16xf32>
    %487 = vector.broadcast %483 : f32 to vector<16x16xf32>
    %488 = arith.mulf %487, %486 : vector<16x16xf32>
    %489 = arith.addf %481, %488 : vector<16x16xf32>
    %490 = vector.extract_strided_slice %482 {offsets = [1, 0, 0], sizes = [1, 16, 16], strides = [1, 1, 1]} : vector<2x16x16xf32> to vector<1x16x16xf32>
    %491 = vector.shape_cast %490 : vector<1x16x16xf32> to vector<16x16xf32>
    %492 = vector.broadcast %484 : f32 to vector<16x16xf32>
    %493 = arith.mulf %492, %491 : vector<16x16xf32>
    %494 = arith.addf %489, %493 : vector<16x16xf32>
    %495 = vector.extract_strided_slice %416 {offsets = [0, 6, 0], sizes = [2, 16, 16], strides = [1, 1, 1]} : vector<2x22x16xf32> to vector<2x16x16xf32>
    %c46 = arith.constant 46 : index
    %496 = memref.load %arg4[%c46] : memref<98xf32, #tpu.memory_space<smem>>
    %c95 = arith.constant 95 : index
    %497 = memref.load %arg4[%c95] : memref<98xf32, #tpu.memory_space<smem>>
    %498 = vector.extract_strided_slice %495 {offsets = [0, 0, 0], sizes = [1, 16, 16], strides = [1, 1, 1]} : vector<2x16x16xf32> to vector<1x16x16xf32>
    %499 = vector.shape_cast %498 : vector<1x16x16xf32> to vector<16x16xf32>
    %500 = vector.broadcast %496 : f32 to vector<16x16xf32>
    %501 = arith.mulf %500, %499 : vector<16x16xf32>
    %502 = arith.addf %494, %501 : vector<16x16xf32>
    %503 = vector.extract_strided_slice %495 {offsets = [1, 0, 0], sizes = [1, 16, 16], strides = [1, 1, 1]} : vector<2x16x16xf32> to vector<1x16x16xf32>
    %504 = vector.shape_cast %503 : vector<1x16x16xf32> to vector<16x16xf32>
    %505 = vector.broadcast %497 : f32 to vector<16x16xf32>
    %506 = arith.mulf %505, %504 : vector<16x16xf32>
    %507 = arith.addf %502, %506 : vector<16x16xf32>
    %508 = vector.extract_strided_slice %46 {offsets = [0, 0, 5], sizes = [2, 22, 16], strides = [1, 1, 1]} : vector<2x22x22xf32> to vector<2x22x16xf32>
    %509 = vector.extract_strided_slice %508 {offsets = [0, 0, 0], sizes = [2, 16, 16], strides = [1, 1, 1]} : vector<2x22x16xf32> to vector<2x16x16xf32>
    %c5 = arith.constant 5 : index
    %510 = memref.load %arg4[%c5] : memref<98xf32, #tpu.memory_space<smem>>
    %c54 = arith.constant 54 : index
    %511 = memref.load %arg4[%c54] : memref<98xf32, #tpu.memory_space<smem>>
    %512 = vector.extract_strided_slice %509 {offsets = [0, 0, 0], sizes = [1, 16, 16], strides = [1, 1, 1]} : vector<2x16x16xf32> to vector<1x16x16xf32>
    %513 = vector.shape_cast %512 : vector<1x16x16xf32> to vector<16x16xf32>
    %514 = vector.broadcast %510 : f32 to vector<16x16xf32>
    %515 = arith.mulf %514, %513 : vector<16x16xf32>
    %516 = arith.addf %507, %515 : vector<16x16xf32>
    %517 = vector.extract_strided_slice %509 {offsets = [1, 0, 0], sizes = [1, 16, 16], strides = [1, 1, 1]} : vector<2x16x16xf32> to vector<1x16x16xf32>
    %518 = vector.shape_cast %517 : vector<1x16x16xf32> to vector<16x16xf32>
    %519 = vector.broadcast %511 : f32 to vector<16x16xf32>
    %520 = arith.mulf %519, %518 : vector<16x16xf32>
    %521 = arith.addf %516, %520 : vector<16x16xf32>
    %522 = vector.extract_strided_slice %508 {offsets = [0, 1, 0], sizes = [2, 16, 16], strides = [1, 1, 1]} : vector<2x22x16xf32> to vector<2x16x16xf32>
    %c12 = arith.constant 12 : index
    %523 = memref.load %arg4[%c12] : memref<98xf32, #tpu.memory_space<smem>>
    %c61 = arith.constant 61 : index
    %524 = memref.load %arg4[%c61] : memref<98xf32, #tpu.memory_space<smem>>
    %525 = vector.extract_strided_slice %522 {offsets = [0, 0, 0], sizes = [1, 16, 16], strides = [1, 1, 1]} : vector<2x16x16xf32> to vector<1x16x16xf32>
    %526 = vector.shape_cast %525 : vector<1x16x16xf32> to vector<16x16xf32>
    %527 = vector.broadcast %523 : f32 to vector<16x16xf32>
    %528 = arith.mulf %527, %526 : vector<16x16xf32>
    %529 = arith.addf %521, %528 : vector<16x16xf32>
    %530 = vector.extract_strided_slice %522 {offsets = [1, 0, 0], sizes = [1, 16, 16], strides = [1, 1, 1]} : vector<2x16x16xf32> to vector<1x16x16xf32>
    %531 = vector.shape_cast %530 : vector<1x16x16xf32> to vector<16x16xf32>
    %532 = vector.broadcast %524 : f32 to vector<16x16xf32>
    %533 = arith.mulf %532, %531 : vector<16x16xf32>
    %534 = arith.addf %529, %533 : vector<16x16xf32>
    %535 = vector.extract_strided_slice %508 {offsets = [0, 2, 0], sizes = [2, 16, 16], strides = [1, 1, 1]} : vector<2x22x16xf32> to vector<2x16x16xf32>
    %c19 = arith.constant 19 : index
    %536 = memref.load %arg4[%c19] : memref<98xf32, #tpu.memory_space<smem>>
    %c68 = arith.constant 68 : index
    %537 = memref.load %arg4[%c68] : memref<98xf32, #tpu.memory_space<smem>>
    %538 = vector.extract_strided_slice %535 {offsets = [0, 0, 0], sizes = [1, 16, 16], strides = [1, 1, 1]} : vector<2x16x16xf32> to vector<1x16x16xf32>
    %539 = vector.shape_cast %538 : vector<1x16x16xf32> to vector<16x16xf32>
    %540 = vector.broadcast %536 : f32 to vector<16x16xf32>
    %541 = arith.mulf %540, %539 : vector<16x16xf32>
    %542 = arith.addf %534, %541 : vector<16x16xf32>
    %543 = vector.extract_strided_slice %535 {offsets = [1, 0, 0], sizes = [1, 16, 16], strides = [1, 1, 1]} : vector<2x16x16xf32> to vector<1x16x16xf32>
    %544 = vector.shape_cast %543 : vector<1x16x16xf32> to vector<16x16xf32>
    %545 = vector.broadcast %537 : f32 to vector<16x16xf32>
    %546 = arith.mulf %545, %544 : vector<16x16xf32>
    %547 = arith.addf %542, %546 : vector<16x16xf32>
    %548 = vector.extract_strided_slice %508 {offsets = [0, 3, 0], sizes = [2, 16, 16], strides = [1, 1, 1]} : vector<2x22x16xf32> to vector<2x16x16xf32>
    %c26 = arith.constant 26 : index
    %549 = memref.load %arg4[%c26] : memref<98xf32, #tpu.memory_space<smem>>
    %c75 = arith.constant 75 : index
    %550 = memref.load %arg4[%c75] : memref<98xf32, #tpu.memory_space<smem>>
    %551 = vector.extract_strided_slice %548 {offsets = [0, 0, 0], sizes = [1, 16, 16], strides = [1, 1, 1]} : vector<2x16x16xf32> to vector<1x16x16xf32>
    %552 = vector.shape_cast %551 : vector<1x16x16xf32> to vector<16x16xf32>
    %553 = vector.broadcast %549 : f32 to vector<16x16xf32>
    %554 = arith.mulf %553, %552 : vector<16x16xf32>
    %555 = arith.addf %547, %554 : vector<16x16xf32>
    %556 = vector.extract_strided_slice %548 {offsets = [1, 0, 0], sizes = [1, 16, 16], strides = [1, 1, 1]} : vector<2x16x16xf32> to vector<1x16x16xf32>
    %557 = vector.shape_cast %556 : vector<1x16x16xf32> to vector<16x16xf32>
    %558 = vector.broadcast %550 : f32 to vector<16x16xf32>
    %559 = arith.mulf %558, %557 : vector<16x16xf32>
    %560 = arith.addf %555, %559 : vector<16x16xf32>
    %561 = vector.extract_strided_slice %508 {offsets = [0, 4, 0], sizes = [2, 16, 16], strides = [1, 1, 1]} : vector<2x22x16xf32> to vector<2x16x16xf32>
    %c33 = arith.constant 33 : index
    %562 = memref.load %arg4[%c33] : memref<98xf32, #tpu.memory_space<smem>>
    %c82 = arith.constant 82 : index
    %563 = memref.load %arg4[%c82] : memref<98xf32, #tpu.memory_space<smem>>
    %564 = vector.extract_strided_slice %561 {offsets = [0, 0, 0], sizes = [1, 16, 16], strides = [1, 1, 1]} : vector<2x16x16xf32> to vector<1x16x16xf32>
    %565 = vector.shape_cast %564 : vector<1x16x16xf32> to vector<16x16xf32>
    %566 = vector.broadcast %562 : f32 to vector<16x16xf32>
    %567 = arith.mulf %566, %565 : vector<16x16xf32>
    %568 = arith.addf %560, %567 : vector<16x16xf32>
    %569 = vector.extract_strided_slice %561 {offsets = [1, 0, 0], sizes = [1, 16, 16], strides = [1, 1, 1]} : vector<2x16x16xf32> to vector<1x16x16xf32>
    %570 = vector.shape_cast %569 : vector<1x16x16xf32> to vector<16x16xf32>
    %571 = vector.broadcast %563 : f32 to vector<16x16xf32>
    %572 = arith.mulf %571, %570 : vector<16x16xf32>
    %573 = arith.addf %568, %572 : vector<16x16xf32>
    %574 = vector.extract_strided_slice %508 {offsets = [0, 5, 0], sizes = [2, 16, 16], strides = [1, 1, 1]} : vector<2x22x16xf32> to vector<2x16x16xf32>
    %c40 = arith.constant 40 : index
    %575 = memref.load %arg4[%c40] : memref<98xf32, #tpu.memory_space<smem>>
    %c89 = arith.constant 89 : index
    %576 = memref.load %arg4[%c89] : memref<98xf32, #tpu.memory_space<smem>>
    %577 = vector.extract_strided_slice %574 {offsets = [0, 0, 0], sizes = [1, 16, 16], strides = [1, 1, 1]} : vector<2x16x16xf32> to vector<1x16x16xf32>
    %578 = vector.shape_cast %577 : vector<1x16x16xf32> to vector<16x16xf32>
    %579 = vector.broadcast %575 : f32 to vector<16x16xf32>
    %580 = arith.mulf %579, %578 : vector<16x16xf32>
    %581 = arith.addf %573, %580 : vector<16x16xf32>
    %582 = vector.extract_strided_slice %574 {offsets = [1, 0, 0], sizes = [1, 16, 16], strides = [1, 1, 1]} : vector<2x16x16xf32> to vector<1x16x16xf32>
    %583 = vector.shape_cast %582 : vector<1x16x16xf32> to vector<16x16xf32>
    %584 = vector.broadcast %576 : f32 to vector<16x16xf32>
    %585 = arith.mulf %584, %583 : vector<16x16xf32>
    %586 = arith.addf %581, %585 : vector<16x16xf32>
    %587 = vector.extract_strided_slice %508 {offsets = [0, 6, 0], sizes = [2, 16, 16], strides = [1, 1, 1]} : vector<2x22x16xf32> to vector<2x16x16xf32>
    %c47 = arith.constant 47 : index
    %588 = memref.load %arg4[%c47] : memref<98xf32, #tpu.memory_space<smem>>
    %c96 = arith.constant 96 : index
    %589 = memref.load %arg4[%c96] : memref<98xf32, #tpu.memory_space<smem>>
    %590 = vector.extract_strided_slice %587 {offsets = [0, 0, 0], sizes = [1, 16, 16], strides = [1, 1, 1]} : vector<2x16x16xf32> to vector<1x16x16xf32>
    %591 = vector.shape_cast %590 : vector<1x16x16xf32> to vector<16x16xf32>
    %592 = vector.broadcast %588 : f32 to vector<16x16xf32>
    %593 = arith.mulf %592, %591 : vector<16x16xf32>
    %594 = arith.addf %586, %593 : vector<16x16xf32>
    %595 = vector.extract_strided_slice %587 {offsets = [1, 0, 0], sizes = [1, 16, 16], strides = [1, 1, 1]} : vector<2x16x16xf32> to vector<1x16x16xf32>
    %596 = vector.shape_cast %595 : vector<1x16x16xf32> to vector<16x16xf32>
    %597 = vector.broadcast %589 : f32 to vector<16x16xf32>
    %598 = arith.mulf %597, %596 : vector<16x16xf32>
    %599 = arith.addf %594, %598 : vector<16x16xf32>
    %600 = vector.extract_strided_slice %46 {offsets = [0, 0, 6], sizes = [2, 22, 16], strides = [1, 1, 1]} : vector<2x22x22xf32> to vector<2x22x16xf32>
    %601 = vector.extract_strided_slice %600 {offsets = [0, 0, 0], sizes = [2, 16, 16], strides = [1, 1, 1]} : vector<2x22x16xf32> to vector<2x16x16xf32>
    %c6 = arith.constant 6 : index
    %602 = memref.load %arg4[%c6] : memref<98xf32, #tpu.memory_space<smem>>
    %c55 = arith.constant 55 : index
    %603 = memref.load %arg4[%c55] : memref<98xf32, #tpu.memory_space<smem>>
    %604 = vector.extract_strided_slice %601 {offsets = [0, 0, 0], sizes = [1, 16, 16], strides = [1, 1, 1]} : vector<2x16x16xf32> to vector<1x16x16xf32>
    %605 = vector.shape_cast %604 : vector<1x16x16xf32> to vector<16x16xf32>
    %606 = vector.broadcast %602 : f32 to vector<16x16xf32>
    %607 = arith.mulf %606, %605 : vector<16x16xf32>
    %608 = arith.addf %599, %607 : vector<16x16xf32>
    %609 = vector.extract_strided_slice %601 {offsets = [1, 0, 0], sizes = [1, 16, 16], strides = [1, 1, 1]} : vector<2x16x16xf32> to vector<1x16x16xf32>
    %610 = vector.shape_cast %609 : vector<1x16x16xf32> to vector<16x16xf32>
    %611 = vector.broadcast %603 : f32 to vector<16x16xf32>
    %612 = arith.mulf %611, %610 : vector<16x16xf32>
    %613 = arith.addf %608, %612 : vector<16x16xf32>
    %614 = vector.extract_strided_slice %600 {offsets = [0, 1, 0], sizes = [2, 16, 16], strides = [1, 1, 1]} : vector<2x22x16xf32> to vector<2x16x16xf32>
    %c13 = arith.constant 13 : index
    %615 = memref.load %arg4[%c13] : memref<98xf32, #tpu.memory_space<smem>>
    %c62 = arith.constant 62 : index
    %616 = memref.load %arg4[%c62] : memref<98xf32, #tpu.memory_space<smem>>
    %617 = vector.extract_strided_slice %614 {offsets = [0, 0, 0], sizes = [1, 16, 16], strides = [1, 1, 1]} : vector<2x16x16xf32> to vector<1x16x16xf32>
    %618 = vector.shape_cast %617 : vector<1x16x16xf32> to vector<16x16xf32>
    %619 = vector.broadcast %615 : f32 to vector<16x16xf32>
    %620 = arith.mulf %619, %618 : vector<16x16xf32>
    %621 = arith.addf %613, %620 : vector<16x16xf32>
    %622 = vector.extract_strided_slice %614 {offsets = [1, 0, 0], sizes = [1, 16, 16], strides = [1, 1, 1]} : vector<2x16x16xf32> to vector<1x16x16xf32>
    %623 = vector.shape_cast %622 : vector<1x16x16xf32> to vector<16x16xf32>
    %624 = vector.broadcast %616 : f32 to vector<16x16xf32>
    %625 = arith.mulf %624, %623 : vector<16x16xf32>
    %626 = arith.addf %621, %625 : vector<16x16xf32>
    %627 = vector.extract_strided_slice %600 {offsets = [0, 2, 0], sizes = [2, 16, 16], strides = [1, 1, 1]} : vector<2x22x16xf32> to vector<2x16x16xf32>
    %c20 = arith.constant 20 : index
    %628 = memref.load %arg4[%c20] : memref<98xf32, #tpu.memory_space<smem>>
    %c69 = arith.constant 69 : index
    %629 = memref.load %arg4[%c69] : memref<98xf32, #tpu.memory_space<smem>>
    %630 = vector.extract_strided_slice %627 {offsets = [0, 0, 0], sizes = [1, 16, 16], strides = [1, 1, 1]} : vector<2x16x16xf32> to vector<1x16x16xf32>
    %631 = vector.shape_cast %630 : vector<1x16x16xf32> to vector<16x16xf32>
    %632 = vector.broadcast %628 : f32 to vector<16x16xf32>
    %633 = arith.mulf %632, %631 : vector<16x16xf32>
    %634 = arith.addf %626, %633 : vector<16x16xf32>
    %635 = vector.extract_strided_slice %627 {offsets = [1, 0, 0], sizes = [1, 16, 16], strides = [1, 1, 1]} : vector<2x16x16xf32> to vector<1x16x16xf32>
    %636 = vector.shape_cast %635 : vector<1x16x16xf32> to vector<16x16xf32>
    %637 = vector.broadcast %629 : f32 to vector<16x16xf32>
    %638 = arith.mulf %637, %636 : vector<16x16xf32>
    %639 = arith.addf %634, %638 : vector<16x16xf32>
    %640 = vector.extract_strided_slice %600 {offsets = [0, 3, 0], sizes = [2, 16, 16], strides = [1, 1, 1]} : vector<2x22x16xf32> to vector<2x16x16xf32>
    %c27 = arith.constant 27 : index
    %641 = memref.load %arg4[%c27] : memref<98xf32, #tpu.memory_space<smem>>
    %c76 = arith.constant 76 : index
    %642 = memref.load %arg4[%c76] : memref<98xf32, #tpu.memory_space<smem>>
    %643 = vector.extract_strided_slice %640 {offsets = [0, 0, 0], sizes = [1, 16, 16], strides = [1, 1, 1]} : vector<2x16x16xf32> to vector<1x16x16xf32>
    %644 = vector.shape_cast %643 : vector<1x16x16xf32> to vector<16x16xf32>
    %645 = vector.broadcast %641 : f32 to vector<16x16xf32>
    %646 = arith.mulf %645, %644 : vector<16x16xf32>
    %647 = arith.addf %639, %646 : vector<16x16xf32>
    %648 = vector.extract_strided_slice %640 {offsets = [1, 0, 0], sizes = [1, 16, 16], strides = [1, 1, 1]} : vector<2x16x16xf32> to vector<1x16x16xf32>
    %649 = vector.shape_cast %648 : vector<1x16x16xf32> to vector<16x16xf32>
    %650 = vector.broadcast %642 : f32 to vector<16x16xf32>
    %651 = arith.mulf %650, %649 : vector<16x16xf32>
    %652 = arith.addf %647, %651 : vector<16x16xf32>
    %653 = vector.extract_strided_slice %600 {offsets = [0, 4, 0], sizes = [2, 16, 16], strides = [1, 1, 1]} : vector<2x22x16xf32> to vector<2x16x16xf32>
    %c34 = arith.constant 34 : index
    %654 = memref.load %arg4[%c34] : memref<98xf32, #tpu.memory_space<smem>>
    %c83 = arith.constant 83 : index
    %655 = memref.load %arg4[%c83] : memref<98xf32, #tpu.memory_space<smem>>
    %656 = vector.extract_strided_slice %653 {offsets = [0, 0, 0], sizes = [1, 16, 16], strides = [1, 1, 1]} : vector<2x16x16xf32> to vector<1x16x16xf32>
    %657 = vector.shape_cast %656 : vector<1x16x16xf32> to vector<16x16xf32>
    %658 = vector.broadcast %654 : f32 to vector<16x16xf32>
    %659 = arith.mulf %658, %657 : vector<16x16xf32>
    %660 = arith.addf %652, %659 : vector<16x16xf32>
    %661 = vector.extract_strided_slice %653 {offsets = [1, 0, 0], sizes = [1, 16, 16], strides = [1, 1, 1]} : vector<2x16x16xf32> to vector<1x16x16xf32>
    %662 = vector.shape_cast %661 : vector<1x16x16xf32> to vector<16x16xf32>
    %663 = vector.broadcast %655 : f32 to vector<16x16xf32>
    %664 = arith.mulf %663, %662 : vector<16x16xf32>
    %665 = arith.addf %660, %664 : vector<16x16xf32>
    %666 = vector.extract_strided_slice %600 {offsets = [0, 5, 0], sizes = [2, 16, 16], strides = [1, 1, 1]} : vector<2x22x16xf32> to vector<2x16x16xf32>
    %c41 = arith.constant 41 : index
    %667 = memref.load %arg4[%c41] : memref<98xf32, #tpu.memory_space<smem>>
    %c90 = arith.constant 90 : index
    %668 = memref.load %arg4[%c90] : memref<98xf32, #tpu.memory_space<smem>>
    %669 = vector.extract_strided_slice %666 {offsets = [0, 0, 0], sizes = [1, 16, 16], strides = [1, 1, 1]} : vector<2x16x16xf32> to vector<1x16x16xf32>
    %670 = vector.shape_cast %669 : vector<1x16x16xf32> to vector<16x16xf32>
    %671 = vector.broadcast %667 : f32 to vector<16x16xf32>
    %672 = arith.mulf %671, %670 : vector<16x16xf32>
    %673 = arith.addf %665, %672 : vector<16x16xf32>
    %674 = vector.extract_strided_slice %666 {offsets = [1, 0, 0], sizes = [1, 16, 16], strides = [1, 1, 1]} : vector<2x16x16xf32> to vector<1x16x16xf32>
    %675 = vector.shape_cast %674 : vector<1x16x16xf32> to vector<16x16xf32>
    %676 = vector.broadcast %668 : f32 to vector<16x16xf32>
    %677 = arith.mulf %676, %675 : vector<16x16xf32>
    %678 = arith.addf %673, %677 : vector<16x16xf32>
    %679 = vector.extract_strided_slice %600 {offsets = [0, 6, 0], sizes = [2, 16, 16], strides = [1, 1, 1]} : vector<2x22x16xf32> to vector<2x16x16xf32>
    %c48 = arith.constant 48 : index
    %680 = memref.load %arg4[%c48] : memref<98xf32, #tpu.memory_space<smem>>
    %c97 = arith.constant 97 : index
    %681 = memref.load %arg4[%c97] : memref<98xf32, #tpu.memory_space<smem>>
    %682 = vector.extract_strided_slice %679 {offsets = [0, 0, 0], sizes = [1, 16, 16], strides = [1, 1, 1]} : vector<2x16x16xf32> to vector<1x16x16xf32>
    %683 = vector.shape_cast %682 : vector<1x16x16xf32> to vector<16x16xf32>
    %684 = vector.broadcast %680 : f32 to vector<16x16xf32>
    %685 = arith.mulf %684, %683 : vector<16x16xf32>
    %686 = arith.addf %678, %685 : vector<16x16xf32>
    %687 = vector.extract_strided_slice %679 {offsets = [1, 0, 0], sizes = [1, 16, 16], strides = [1, 1, 1]} : vector<2x16x16xf32> to vector<1x16x16xf32>
    %688 = vector.shape_cast %687 : vector<1x16x16xf32> to vector<16x16xf32>
    %689 = vector.broadcast %681 : f32 to vector<16x16xf32>
    %690 = arith.mulf %689, %688 : vector<16x16xf32>
    %691 = arith.addf %686, %690 : vector<16x16xf32>
    %c0_35 = arith.constant 0 : index
    %692 = memref.load %arg5[%c0_35] : memref<2xf32, #tpu.memory_space<smem>>
    %693 = vector.broadcast %692 : f32 to vector<16x16xf32>
    %694 = arith.addf %691, %693 : vector<16x16xf32>
    %695 = arith.negf %694 : vector<16x16xf32>
    %696 = math.exp %695 : vector<16x16xf32>
    %cst_36 = arith.constant 1.000000e+00 : f32
    %697 = vector.broadcast %cst_36 : f32 to vector<16x16xf32>
    %698 = arith.addf %697, %696 : vector<16x16xf32>
    %699 = arith.divf %697, %698 : vector<16x16xf32>
    %c1_37 = arith.constant 1 : index
    %700 = memref.load %arg5[%c1_37] : memref<2xf32, #tpu.memory_space<smem>>
    %701 = vector.broadcast %700 : f32 to vector<1x1xf32>
    %702 = arith.negf %701 : vector<1x1xf32>
    %703 = math.exp %702 : vector<1x1xf32>
    %cst_38 = arith.constant 1.000000e+00 : f32
    %704 = vector.broadcast %cst_38 : f32 to vector<1x1xf32>
    %705 = arith.addf %704, %703 : vector<1x1xf32>
    %706 = arith.divf %704, %705 : vector<1x1xf32>
    %cst_39 = arith.constant 1.000000e+00 : f32
    %707 = vector.broadcast %cst_39 : f32 to vector<1x1xf32>
    %708 = arith.subf %707, %706 : vector<1x1xf32>
    %709 = vector.shape_cast %708 : vector<1x1xf32> to vector<1x1x1xf32>
    %710 = vector.broadcast %709 : vector<1x1x1xf32> to vector<16x16x32xf32>
    %711 = arith.mulf %1, %710 : vector<16x16x32xf32>
    %712 = vector.broadcast %706 : vector<1x1xf32> to vector<16x16xf32>
    %713 = arith.mulf %712, %699 : vector<16x16xf32>
    %714 = vector.shape_cast %713 : vector<16x16xf32> to vector<16x16x1xf32>
    %715 = vector.broadcast %714 : vector<16x16x1xf32> to vector<16x16x32xf32>
    %716 = arith.mulf %35, %715 : vector<16x16x32xf32>
    %717 = arith.addf %711, %716 : vector<16x16x32xf32>
    %c0_40 = arith.constant 0 : index
    %c0_41 = arith.constant 0 : index
    %c0_42 = arith.constant 0 : index
    %c0_43 = arith.constant 0 : index
    %718 = vector.load %arg6[%c0_40, %c0_41, %c0_42, %c0_43] : memref<1x16x16x32xf32, #tpu.memory_space<vmem>>, vector<1x16x16x32xf32>
    %719 = vector.shape_cast %718 : vector<1x16x16x32xf32> to vector<16x16x32xf32>
    %720 = vector.shape_cast %717 : vector<16x16x32xf32> to vector<1x16x16x32xf32>
    tpu.vector_store %arg6[%c0_40, %c0_41, %c0_42, %c0_43], %720 {strides = array<i32>} : memref<1x16x16x32xf32, #tpu.memory_space<vmem>>, vector<1x16x16x32xf32>,
    return
  }
  func.func @transform_0(%arg0: i32) -> (i32, i32, i32, i32) {
    %c0_i32 = arith.constant 0 : i32
    %c0_i32_0 = arith.constant 0 : i32
    %c0_i32_1 = arith.constant 0 : i32
    %c0_i32_2 = arith.constant 0 : i32
    return %arg0, %c0_i32, %c0_i32_0, %c0_i32_1 : i32, i32, i32, i32
  }
  func.func @transform_1(%arg0: i32) -> (i32, i32) {
    %c0_i32 = arith.constant 0 : i32
    %c0_i32_0 = arith.constant 0 : i32
    %c0_i32_1 = arith.constant 0 : i32
    return %c0_i32, %c0_i32_0 : i32, i32
  }
  func.func @transform_2(%arg0: i32) -> (i32, i32) {
    %c0_i32 = arith.constant 0 : i32
    %c0_i32_0 = arith.constant 0 : i32
    %c0_i32_1 = arith.constant 0 : i32
    return %c0_i32, %c0_i32_0 : i32, i32
  }
  func.func @transform_3(%arg0: i32) -> i32 {
    %c0_i32 = arith.constant 0 : i32
    %c0_i32_0 = arith.constant 0 : i32
    return %c0_i32 : i32
  }
  func.func @transform_4(%arg0: i32) -> i32 {
    %c0_i32 = arith.constant 0 : i32
    %c0_i32_0 = arith.constant 0 : i32
    return %c0_i32 : i32
  }
  func.func @transform_5(%arg0: i32) -> (i32, i32, i32, i32) {
    %c0_i32 = arith.constant 0 : i32
    %c0_i32_0 = arith.constant 0 : i32
    %c0_i32_1 = arith.constant 0 : i32
    %c0_i32_2 = arith.constant 0 : i32
    return %arg0, %c0_i32, %c0_i32_0, %c0_i32_1 : i32, i32, i32, i32
  }
}

</mosaic_0001>

<llo_original>
// kernel: tpu_custom_call.1
$region0: #{tpu_custom_call.1}
  #allocation0 [shape = 'u32[]', space=smem, size = 0x4, offset = 0x4, fixed_abs, tag = 'smem constant byte address 0x4 - core index']
  #allocation1 [shape = 'u32[72,128]{1,0:T(1,128)}', space=vmem, size = 0x9000, scoped, tag = 'internal scratch']
  #allocation2 [shape = 'f32[2,22,22]{2,1,0:T(8,128)}', space=vmem, size = 0x6000, scoped, tag = 'scratch operand']
  %s0 = inlined_call_operand.hbm [shape: f32[2,16,16,32], index: 0, kind: input, shape index: {}]
  %s1 = inlined_call_operand.vmem [shape: f32[32,4], index: 1, kind: input, shape index: {}]
  %s2 = inlined_call_operand.vmem [shape: f32[4,32], index: 2, kind: input, shape index: {}]
  %s3 = inlined_call_operand.vmem [shape: f32[98], index: 3, kind: input, shape index: {}]
  %s4 = inlined_call_operand.vmem [shape: f32[2], index: 4, kind: input, shape index: {}]
  %s5 = inlined_call_operand.hbm [shape: f32[2,16,16,32], index: 5, kind: output, shape index: {}]
  %s6 = sld [smem:[#allocation0]]
  $region65: #{tpu_custom_call.1} parent=0
    _
  %s8 = ssub.s32 1, %s6
  %s9 = scalar_select 0, %s8, %s6
  $region1: #{tpu_custom_call.1} parent=0
    #allocation3 [shape = 'u8[262144]{0}', space=vmem, size = 0x40000, scoped, tag = 'input window, operand 0']
    #allocation4 [shape = 's32[2]{0}', space=sflag, size = 0x8, scoped, tag = 'scoped memory for tpu_custom_call.1']
    #allocation5 [shape = 's32[2]{0}', space=sflag, size = 0x8, scoped, tag = 'scoped memory for tpu_custom_call.1']
    #allocation6 [shape = 's32[2]{0}', space=sflag, size = 0x8, scoped, tag = 'scoped memory for tpu_custom_call.1']
    #allocation7 [shape = 'u8[512]{0}', space=smem, size = 0x200, scoped, tag = 'input window, operand 3, single buffered']
    #allocation8 [shape = 'u8[512]{0}', space=smem, size = 0x200, scoped, tag = 'input window, operand 4, single buffered']
    #allocation9 [shape = 's32[1]{0}', space=sflag, size = 0x4, scoped, tag = 'scoped memory for tpu_custom_call.1']
    #allocation10 [shape = 'u8[262144]{0}', space=vmem, size = 0x40000, scoped, tag = 'output window, operand 0']
    %10 = vsyncpa [#allocation4], 0
    %s11 = scalar_lea.sflag [#allocation4], 1
    %12 = vsyncpa %s11, 0
    %13 = vsyncpa [#allocation6], 0
    %14 = vsyncpa [#allocation9], 0
    %15 = vsyncpa [#allocation5], 0
    %s16 = scalar_lea.sflag [#allocation5], 1
    %17 = vsyncpa %s16, 0
    loop: start=0, step=1, limit=4
    $region2: #{tpu_custom_call.1} parent=1 // loop_pre_header
      _
    $region3: #{tpu_custom_call.1} parent=1 // loop_header
      %s19 = sphi 0, %s23
      %p20 = scmp.ge.s32.totalorder %s19, 4
      %s29 = sphi 0, %s31
      %s32 = sphi 0, %s29
      %s33 = sphi 0, %s32
      %s49 = sphi 0, %s33
      %s53 = sphi 0, %s53
      %s55 = sphi 0, %s53
      %s56 = sphi 0, %s55
      %s70 = sphi 0, %s56
      %s74 = sphi 0, %s74
      %s76 = sphi 0, %s74
      %s77 = sphi 0, %s76
      %s91 = sphi 0, %s77
      %s95 = sphi 0, %s95
      %s97 = sphi 0, %s95
      %s98 = sphi 0, %s97
      %s112 = sphi 0, %s98
      %s116 = sphi 0, %s116
      %s118 = sphi 0, %s116
      %s119 = sphi 0, %s118
      %s133 = sphi 0, %s119
      %s139 = sphi 0, %s141
      %s142 = sphi 0, %s139
      %s143 = sphi 0, %s142
      %s159 = sphi 0, %s143
    $region4: #{tpu_custom_call.1} parent=1 // loop_header_branch
      %22 = sbr.rel (%p20) target = $region8
    $region5: #{tpu_custom_call.1} parent=1 // loop_body
      %s24 = ssub.s32 %s19, 1
      %s25 = ssub.s32 %s19, 2
      %s26 = sadd.s32 %s19, 1
      %s27 = ssub.s32 %s19, %s26
      %p28 = scmp.eq.s32.totalorder %s27, 0
      %s30 = sadd.s32 %s29, 1
      %s31 = scalar_select %p28, %s29, %s30
      %p34 = pneg %p28
      %p35 = scmp.eq.s32.totalorder %s19, 1
      %p36 = por %p34, %p35
      %p37 = scmp.ne.s32.totalorder %s29, %s32
      %p38 = scmp.eq.s32.totalorder %s19, 0
      %p39 = por %p37, %p38
      %p40 = scmp.ne.s32.totalorder %s29, %s32
      %p41 = scmp.eq.s32.totalorder %s24, 1
      %p42 = por %p40, %p41
      %p43 = scmp.ne.s32.totalorder %s32, %s33
      %p44 = scmp.eq.s32.totalorder %s24, 0
      %p45 = por %p43, %p44
      %p46 = scmp.ne.s32.totalorder %s32, %s33
      %p47 = scmp.eq.s32.totalorder %s25, 1
      %p48 = por %p46, %p47
      %p50 = scmp.ne.s32.totalorder %s33, %s49
      %p51 = scmp.eq.s32.totalorder %s25, 0
      %p52 = por %p50, %p51
      %s54 = sadd.s32 %s53, 1
      %p57 = scmp.eq.s32.totalorder %s19, 1
      %p58 = scmp.ne.s32.totalorder %s53, %s55
      %p59 = scmp.eq.s32.totalorder %s19, 0
      %p60 = por %p58, %p59
      %p61 = scmp.ne.s32.totalorder %s53, %s55
      %p62 = scmp.eq.s32.totalorder %s24, 1
      %p63 = por %p61, %p62
      %p64 = scmp.ne.s32.totalorder %s55, %s56
      %p65 = scmp.eq.s32.totalorder %s24, 0
      %p66 = por %p64, %p65
      %p67 = scmp.ne.s32.totalorder %s55, %s56
      %p68 = scmp.eq.s32.totalorder %s25, 1
      %p69 = por %p67, %p68
      %p71 = scmp.ne.s32.totalorder %s56, %s70
      %p72 = scmp.eq.s32.totalorder %s25, 0
      %p73 = por %p71, %p72
      %s75 = sadd.s32 %s74, 1
      %p78 = scmp.eq.s32.totalorder %s19, 1
      %p79 = scmp.ne.s32.totalorder %s74, %s76
      %p80 = scmp.eq.s32.totalorder %s19, 0
      %p81 = por %p79, %p80
      %p82 = scmp.ne.s32.totalorder %s74, %s76
      %p83 = scmp.eq.s32.totalorder %s24, 1
      %p84 = por %p82, %p83
      %p85 = scmp.ne.s32.totalorder %s76, %s77
      %p86 = scmp.eq.s32.totalorder %s24, 0
      %p87 = por %p85, %p86
      %p88 = scmp.ne.s32.totalorder %s76, %s77
      %p89 = scmp.eq.s32.totalorder %s25, 1
      %p90 = por %p88, %p89
      %p92 = scmp.ne.s32.totalorder %s77, %s91
      %p93 = scmp.eq.s32.totalorder %s25, 0
      %p94 = por %p92, %p93
      %s96 = sadd.s32 %s95, 1
      %p99 = scmp.eq.s32.totalorder %s19, 1
      %p100 = scmp.ne.s32.totalorder %s95, %s97
      %p101 = scmp.eq.s32.totalorder %s19, 0
      %p102 = por %p100, %p101
      %p103 = scmp.ne.s32.totalorder %s95, %s97
      %p104 = scmp.eq.s32.totalorder %s24, 1
      %p105 = por %p103, %p104
      %p106 = scmp.ne.s32.totalorder %s97, %s98
      %p107 = scmp.eq.s32.totalorder %s24, 0
      %p108 = por %p106, %p107
      %p109 = scmp.ne.s32.totalorder %s97, %s98
      %p110 = scmp.eq.s32.totalorder %s25, 1
      %p111 = por %p109, %p110
      %p113 = scmp.ne.s32.totalorder %s98, %s112
      %p114 = scmp.eq.s32.totalorder %s25, 0
      %p115 = por %p113, %p114
      %s117 = sadd.s32 %s116, 1
      %p120 = scmp.eq.s32.totalorder %s19, 1
      %p121 = scmp.ne.s32.totalorder %s116, %s118
      %p122 = scmp.eq.s32.totalorder %s19, 0
      %p123 = por %p121, %p122
      %p124 = scmp.ne.s32.totalorder %s116, %s118
      %p125 = scmp.eq.s32.totalorder %s24, 1
      %p126 = por %p124, %p125
      %p127 = scmp.ne.s32.totalorder %s118, %s119
      %p128 = scmp.eq.s32.totalorder %s24, 0
      %p129 = por %p127, %p128
      %p130 = scmp.ne.s32.totalorder %s118, %s119
      %p131 = scmp.eq.s32.totalorder %s25, 1
      %p132 = por %p130, %p131
      %p134 = scmp.ne.s32.totalorder %s119, %s133
      %p135 = scmp.eq.s32.totalorder %s25, 0
      %p136 = por %p134, %p135
      %s137 = ssub.s32 %s19, %s26
      %p138 = scmp.eq.s32.totalorder %s137, 0
      %s140 = sadd.s32 %s139, 1
      %s141 = scalar_select %p138, %s139, %s140
      %p144 = pneg %p138
      %p145 = scmp.eq.s32.totalorder %s19, 1
      %p146 = por %p144, %p145
      %p147 = scmp.ne.s32.totalorder %s139, %s142
      %p148 = scmp.eq.s32.totalorder %s19, 0
      %p149 = por %p147, %p148
      %p150 = scmp.ne.s32.totalorder %s139, %s142
      %p151 = scmp.eq.s32.totalorder %s24, 1
      %p152 = por %p150, %p151
      %p153 = scmp.ne.s32.totalorder %s142, %s143
      %p154 = scmp.eq.s32.totalorder %s24, 0
      %p155 = por %p153, %p154
      %p156 = scmp.ne.s32.totalorder %s142, %s143
      %p157 = scmp.eq.s32.totalorder %s25, 1
      %p158 = por %p156, %p157
      %p160 = scmp.ne.s32.totalorder %s143, %s159
      %p161 = scmp.eq.s32.totalorder %s25, 0
      %p162 = por %p160, %p161
      %p163 = scmp.le.s32.totalorder 1, %s19
      %p164 = scmp.lt.s32.totalorder %s19, 3
      %p165 = pnand %p163, %p164
      %p166 = pneg %p165
      // Predicated region
      $region9: #{tpu_custom_call.1} parent=5 // pred_check
        _
      $region10: #{tpu_custom_call.1} parent=5 // pred_check_branch
        %168 = sbr.rel (%p165) target = $region12
      $region11: #{tpu_custom_call.1} parent=5 // pred_region
        %s169 = ssub.s32 %s19, 1
        // Predicated region
        $region13: #{tpu_custom_call.1} parent=11 // pred_check
          %p170 = pneg %p66
        $region14: #{tpu_custom_call.1} parent=11 // pred_check_branch
          %172 = sbr.rel (%p170) target = $region16
        $region15: #{tpu_custom_call.1} parent=11 // pred_region
          _
        $region16: #{tpu_custom_call.1} parent=11 // pred_fallthru
          _
        // Predicated region
        $region17: #{tpu_custom_call.1} parent=11 // pred_check
          %p173 = pneg %p87
        $region18: #{tpu_custom_call.1} parent=11 // pred_check_branch
          %175 = sbr.rel (%p173) target = $region20
        $region19: #{tpu_custom_call.1} parent=11 // pred_region
          _
        $region20: #{tpu_custom_call.1} parent=11 // pred_fallthru
          _
        // Predicated region
        $region21: #{tpu_custom_call.1} parent=11 // pred_check
          %p176 = pneg %p108
        $region22: #{tpu_custom_call.1} parent=11 // pred_check_branch
          %178 = sbr.rel (%p176) target = $region24
        $region23: #{tpu_custom_call.1} parent=11 // pred_region
          %180 = vsyncadd [#allocation6], 0
          %s182 = sshll.u32 %s3, 4
          %s183 = int_to_ptr.vmem [resolvable:$true] %s182
          %185 = dma.vmem_to_smem %s183, 16, [#allocation7], [#allocation6]
        $region24: #{tpu_custom_call.1} parent=11 // pred_fallthru
          _
        // Predicated region
        $region25: #{tpu_custom_call.1} parent=11 // pred_check
          %p186 = pneg %p129
        $region26: #{tpu_custom_call.1} parent=11 // pred_check_branch
          %188 = sbr.rel (%p186) target = $region28
        $region27: #{tpu_custom_call.1} parent=11 // pred_region
          %190 = vsyncadd [#allocation9], 0
          %s192 = sshll.u32 %s4, 4
          %s193 = int_to_ptr.vmem [resolvable:$true] %s192
          %195 = dma.vmem_to_smem %s193, 16, [#allocation8], [#allocation9]
        $region28: #{tpu_custom_call.1} parent=11 // pred_fallthru
          _
      $region12: #{tpu_custom_call.1} parent=5 // pred_fallthru
        _
      %p196 = scmp.lt.s32.totalorder %s19, 2
      // Predicated region
      $region29: #{tpu_custom_call.1} parent=5 // pred_check
        %p197 = pneg %p196
      $region30: #{tpu_custom_call.1} parent=5 // pred_check_branch
        %199 = sbr.rel (%p197) target = $region32
      $region31: #{tpu_custom_call.1} parent=5 // pred_region
        // Predicated region
        $region33: #{tpu_custom_call.1} parent=31 // pred_check
          %p200 = pneg %p39
        $region34: #{tpu_custom_call.1} parent=31 // pred_check_branch
          %202 = sbr.rel (%p200) target = $region36
        $region35: #{tpu_custom_call.1} parent=31 // pred_region
          %s203 = sand.u32 %s29, 1
          %s204 = scalar_lea.sflag [#allocation4], %s203
          %s205 = sand.u32 %s29, 1
          %s206 = smul.addr %s205, 256
          %s207 = scalar_lea.vmem [#allocation3], %s206
          %209 = vsyncadd %s204, 0
          %s210 = smul.addr %s19, 32
          %s211 = smul.addr %s210, 8
          %s212 = scalar_lea.hbm %s0, %s211
          %s213 = sshll.u32 %s212, 4
          %s214 = int_to_ptr.hbm [resolvable:$true] %s213
          %s215 = sshll.u32 %s207, 4
          %s216 = int_to_ptr.vmem [resolvable:$true] %s215
          %221 = dma.hbm_to_vmem [thread:$0]  %s214, 4096, %s216, %s204, 128, 128, 8
        $region36: #{tpu_custom_call.1} parent=31 // pred_fallthru
          _
      $region32: #{tpu_custom_call.1} parent=5 // pred_fallthru
        _
      %p222 = scmp.le.s32.totalorder 1, %s19
      %p223 = scmp.lt.s32.totalorder %s19, 3
      %p224 = pnand %p222, %p223
      %p225 = pneg %p224
      // Predicated region
      $region37: #{tpu_custom_call.1} parent=5 // pred_check
        _
      $region38: #{tpu_custom_call.1} parent=5 // pred_check_branch
        %227 = sbr.rel (%p224) target = $region40
      $region39: #{tpu_custom_call.1} parent=5 // pred_region
        %s228 = ssub.s32 %s19, 1
        %s229 = sand.u32 %s32, 1
        %s230 = scalar_lea.sflag [#allocation4], %s229
        %s231 = sand.u32 %s32, 1
        %s232 = smul.addr %s231, 256
        %s233 = scalar_lea.vmem [#allocation3], %s232
        // Predicated region
        $region41: #{tpu_custom_call.1} parent=39 // pred_check
          %p234 = pneg %p45
        $region42: #{tpu_custom_call.1} parent=39 // pred_check_branch
          %236 = sbr.rel (%p234) target = $region44
        $region43: #{tpu_custom_call.1} parent=39 // pred_region
          %238 = dma.done %s230, 4096
        $region44: #{tpu_custom_call.1} parent=39 // pred_fallthru
          _
        // Predicated region
        $region45: #{tpu_custom_call.1} parent=39 // pred_check
          %p239 = pneg %p108
        $region46: #{tpu_custom_call.1} parent=39 // pred_check_branch
          %241 = sbr.rel (%p239) target = $region48
        $region47: #{tpu_custom_call.1} parent=39 // pred_region
          %243 = dma.done [#allocation6], 16
        $region48: #{tpu_custom_call.1} parent=39 // pred_fallthru
          _
        // Predicated region
        $region49: #{tpu_custom_call.1} parent=39 // pred_check
          %p244 = pneg %p129
        $region50: #{tpu_custom_call.1} parent=39 // pred_check_branch
          %246 = sbr.rel (%p244) target = $region52
        $region51: #{tpu_custom_call.1} parent=39 // pred_region
          %248 = dma.done [#allocation9], 16
        $region52: #{tpu_custom_call.1} parent=39 // pred_fallthru
          _
        %249 = sfence
        %s250 = sand.u32 %s32, 1
        %s251 = scalar_lea.sflag [#allocation4], %s250
        %s252 = sand.u32 %s32, 1
        %s253 = smul.addr %s252, 256
        %s254 = scalar_lea.vmem [#allocation3], %s253
        %p255 = pneg %p45
        %p256 = pneg %p42
        %p257 = pneg %p66
        %p258 = pneg %p63
        %p259 = pneg %p87
        %p260 = pneg %p84
        %p261 = pneg %p108
        %p262 = pneg %p105
        %p263 = pneg %p129
        %p264 = pneg %p126
        %p265 = pneg %p155
        %p266 = pneg %p152
        %s267 = sand.u32 %s142, 1
        %s268 = scalar_lea.sflag [#allocation5], %s267
        %s269 = sand.u32 %s142, 1
        %s270 = smul.addr %s269, 256
        %s271 = scalar_lea.vmem [#allocation10], %s270
        %v272 = vld [vmem:[%s233] sm:$0xff]
        %v273 = vld [vmem:[%s233 + $0x8] sm:$0xff]
        %v274 = vld [vmem:[%s233 + $0x10] sm:$0xff]
        %v275 = vld [vmem:[%s233 + $0x18] sm:$0xff]
        %v276 = vld [vmem:[%s233 + $0x20] sm:$0xff]
        %v277 = vld [vmem:[%s233 + $0x28] sm:$0xff]
        %v278 = vld [vmem:[%s233 + $0x30] sm:$0xff]
        %v279 = vld [vmem:[%s233 + $0x38] sm:$0xff]
        %v280 = vld [vmem:[%s233 + $0x40] sm:$0xff]
        %v281 = vld [vmem:[%s233 + $0x48] sm:$0xff]
        %v282 = vld [vmem:[%s233 + $0x50] sm:$0xff]
        %v283 = vld [vmem:[%s233 + $0x58] sm:$0xff]
        %v284 = vld [vmem:[%s233 + $0x60] sm:$0xff]
        %v285 = vld [vmem:[%s233 + $0x68] sm:$0xff]
        %v286 = vld [vmem:[%s233 + $0x70] sm:$0xff]
        %v287 = vld [vmem:[%s233 + $0x78] sm:$0xff]
        %v288 = vld [vmem:[%s233 + $0x80] sm:$0xff]
        %v289 = vld [vmem:[%s233 + $0x88] sm:$0xff]
        %v290 = vld [vmem:[%s233 + $0x90] sm:$0xff]
        %v291 = vld [vmem:[%s233 + $0x98] sm:$0xff]
        %v292 = vld [vmem:[%s233 + $0xa0] sm:$0xff]
        %v293 = vld [vmem:[%s233 + $0xa8] sm:$0xff]
        %v294 = vld [vmem:[%s233 + $0xb0] sm:$0xff]
        %v295 = vld [vmem:[%s233 + $0xb8] sm:$0xff]
        %v296 = vld [vmem:[%s233 + $0xc0] sm:$0xff]
        %v297 = vld [vmem:[%s233 + $0xc8] sm:$0xff]
        %v298 = vld [vmem:[%s233 + $0xd0] sm:$0xff]
        %v299 = vld [vmem:[%s233 + $0xd8] sm:$0xff]
        %v300 = vld [vmem:[%s233 + $0xe0] sm:$0xff]
        %v301 = vld [vmem:[%s233 + $0xe8] sm:$0xff]
        %v302 = vld [vmem:[%s233 + $0xf0] sm:$0xff]
        %v303 = vld [vmem:[%s233 + $0xf8] sm:$0xff]
        %vm304 = vcmask 261120
        %v305 = vsel %vm304, %v272, 0.0
        %v306 = vsel %vm304, %v274, 0.0
        %v307 = vadd.f32 %v305, %v306
        %v308 = vsel %vm304, %v276, 0.0
        %v309 = vadd.f32 %v307, %v308
        %v310 = vsel %vm304, %v278, 0.0
        %v311 = vadd.f32 %v309, %v310
        %v312 = vsel %vm304, %v280, 0.0
        %v313 = vadd.f32 %v311, %v312
        %v314 = vsel %vm304, %v282, 0.0
        %v315 = vadd.f32 %v313, %v314
        %v316 = vsel %vm304, %v284, 0.0
        %v317 = vadd.f32 %v315, %v316
        %v318 = vsel %vm304, %v286, 0.0
        %v319 = vadd.f32 %v317, %v318
        %v320 = vsel %vm304, %v288, 0.0
        %v321 = vadd.f32 %v319, %v320
        %v322 = vsel %vm304, %v290, 0.0
        %v323 = vadd.f32 %v321, %v322
        %v324 = vsel %vm304, %v292, 0.0
        %v325 = vadd.f32 %v323, %v324
        %v326 = vsel %vm304, %v294, 0.0
        %v327 = vadd.f32 %v325, %v326
        %v328 = vsel %vm304, %v296, 0.0
        %v329 = vadd.f32 %v327, %v328
        %v330 = vsel %vm304, %v298, 0.0
        %v331 = vadd.f32 %v329, %v330
        %v332 = vsel %vm304, %v300, 0.0
        %v333 = vadd.f32 %v331, %v332
        %v334 = vsel %vm304, %v302, 0.0
        %v335 = vadd.f32 %v333, %v334
        %v336 = vsel %vm304, %v273, 0.0
        %v337 = vsel %vm304, %v275, 0.0
        %v338 = vadd.f32 %v336, %v337
        %v339 = vsel %vm304, %v277, 0.0
        %v340 = vadd.f32 %v338, %v339
        %v341 = vsel %vm304, %v279, 0.0
        %v342 = vadd.f32 %v340, %v341
        %v343 = vsel %vm304, %v281, 0.0
        %v344 = vadd.f32 %v342, %v343
        %v345 = vsel %vm304, %v283, 0.0
        %v346 = vadd.f32 %v344, %v345
        %v347 = vsel %vm304, %v285, 0.0
        %v348 = vadd.f32 %v346, %v347
        %v349 = vsel %vm304, %v287, 0.0
        %v350 = vadd.f32 %v348, %v349
        %v351 = vsel %vm304, %v289, 0.0
        %v352 = vadd.f32 %v350, %v351
        %v353 = vsel %vm304, %v291, 0.0
        %v354 = vadd.f32 %v352, %v353
        %v355 = vsel %vm304, %v293, 0.0
        %v356 = vadd.f32 %v354, %v355
        %v357 = vsel %vm304, %v295, 0.0
        %v358 = vadd.f32 %v356, %v357
        %v359 = vsel %vm304, %v297, 0.0
        %v360 = vadd.f32 %v358, %v359
        %v361 = vsel %vm304, %v299, 0.0
        %v362 = vadd.f32 %v360, %v361
        %v363 = vsel %vm304, %v301, 0.0
        %v364 = vadd.f32 %v362, %v363
        %v365 = vsel %vm304, %v303, 0.0
        %v366 = vadd.f32 %v364, %v365
        %v367 = vrcp.pop 16.0
        %v368 = vmul.f32 16.0, %v367
        %v369 = vsub.f32 1.0, %v368
        %v370 = vmul.f32 %v367, %v369
        %v371 = vadd.f32 %v367, %v370
        %vm372 = vweird.f32 %v367
        %v373 = vsel %vm372, %v367, %v371
        %v374 = vmul.f32 %v335, %v373
        %v375 = vmul.f32 %v366, %v373
        %v376 = vsel %vm304, %v374, 0.0
        %v377 = vsel %vm304, %v375, 0.0
        %v378 = vadd.f32 %v376, %v377
        %v379 = vrot.slane %v378, 4
        %v380 = vadd.f32 %v378, %v379
        %v381 = vrot.slane %v380, 2
        %v382 = vadd.f32 %v380, %v381
        %v383 = vrot.slane %v382, 1
        %v384 = vadd.f32 %v382, %v383
        %v385 = vmul.f32 %v384, %v373
        %v386 = vsel %vm304, %v272, -inf
        %v387 = vsel %vm304, %v274, -inf
        %v388 = vsel %vm304, %v276, -inf
        %v389 = vmax.f32 %v386, %v388
        %v390 = vsel %vm304, %v278, -inf
        %v391 = vmax.f32 %v387, %v390
        %v392 = vsel %vm304, %v280, -inf
        %v393 = vmax.f32 %v389, %v392
        %v394 = vsel %vm304, %v282, -inf
        %v395 = vmax.f32 %v391, %v394
        %v396 = vsel %vm304, %v284, -inf
        %v397 = vmax.f32 %v393, %v396
        %v398 = vsel %vm304, %v286, -inf
        %v399 = vmax.f32 %v395, %v398
        %v400 = vsel %vm304, %v288, -inf
        %v401 = vmax.f32 %v397, %v400
        %v402 = vsel %vm304, %v290, -inf
        %v403 = vmax.f32 %v399, %v402
        %v404 = vsel %vm304, %v292, -inf
        %v405 = vmax.f32 %v401, %v404
        %v406 = vsel %vm304, %v294, -inf
        %v407 = vmax.f32 %v403, %v406
        %v408 = vsel %vm304, %v296, -inf
        %v409 = vmax.f32 %v405, %v408
        %v410 = vsel %vm304, %v298, -inf
        %v411 = vmax.f32 %v407, %v410
        %v412 = vsel %vm304, %v300, -inf
        %v413 = vmax.f32 %v409, %v412
        %v414 = vsel %vm304, %v302, -inf
        %v415 = vmax.f32 %v411, %v414
        %v416 = vmax.f32 %v413, %v415
        %v417 = vsel %vm304, %v273, -inf
        %v418 = vsel %vm304, %v275, -inf
        %v419 = vsel %vm304, %v277, -inf
        %v420 = vmax.f32 %v417, %v419
        %v421 = vsel %vm304, %v279, -inf
        %v422 = vmax.f32 %v418, %v421
        %v423 = vsel %vm304, %v281, -inf
        %v424 = vmax.f32 %v420, %v423
        %v425 = vsel %vm304, %v283, -inf
        %v426 = vmax.f32 %v422, %v425
        %v427 = vsel %vm304, %v285, -inf
        %v428 = vmax.f32 %v424, %v427
        %v429 = vsel %vm304, %v287, -inf
        %v430 = vmax.f32 %v426, %v429
        %v431 = vsel %vm304, %v289, -inf
        %v432 = vmax.f32 %v428, %v431
        %v433 = vsel %vm304, %v291, -inf
        %v434 = vmax.f32 %v430, %v433
        %v435 = vsel %vm304, %v293, -inf
        %v436 = vmax.f32 %v432, %v435
        %v437 = vsel %vm304, %v295, -inf
        %v438 = vmax.f32 %v434, %v437
        %v439 = vsel %vm304, %v297, -inf
        %v440 = vmax.f32 %v436, %v439
        %v441 = vsel %vm304, %v299, -inf
        %v442 = vmax.f32 %v438, %v441
        %v443 = vsel %vm304, %v301, -inf
        %v444 = vmax.f32 %v440, %v443
        %v445 = vsel %vm304, %v303, -inf
        %v446 = vmax.f32 %v442, %v445
        %v447 = vmax.f32 %v444, %v446
        %v448 = vsel %vm304, %v416, -inf
        %v449 = vsel %vm304, %v447, -inf
        %v450 = vmax.f32 %v448, %v449
        %v451 = vrot.slane %v450, 4
        %v452 = vmax.f32 %v450, %v451
        %v453 = vrot.slane %v452, 2
        %v454 = vmax.f32 %v452, %v453
        %v455 = vrot.slane %v454, 1
        %v456 = vmax.f32 %v454, %v455
        %v457 = vlaneseq
        %v458 = vshrl.u32 %v457, 7
        %vm459 = vcmp.eq.s32.totalorder %v458, 0
        %v460 = vsel %vm459, %v385, %v456
        %v461 = vld [vmem:[%s1] sm:$0xff]
        %v462 = vld [vmem:[%s1 + $0x8] sm:$0xff]
        %v463 = vld [vmem:[%s1 + $0x10] sm:$0xff]
        %v464 = vld [vmem:[%s1 + $0x18] sm:$0xff]
        %v466 = vsel %vm304, %v460, 0
        %468 = vmatpush.msra.mxu0 0.0
        %469 = vmatpush.msra.mxu0 0.0
        %470 = vmatpush.msra.mxu0 0.0
        %471 = vmatpush.msra.mxu0 0.0
        %472 = vmatpush.msra.mxu0 0.0
        %473 = vmatpush.msra.mxu0 0.0
        %474 = vmatpush.msra.mxu0 0.0
        %475 = vmatpush.msra.mxu0 0.0
        %476 = vmatpush.msra.mxu0 0.0
        %477 = vmatpush.msra.mxu0 0.0
        %478 = vmatpush.msra.mxu0 0.0
        %479 = vmatpush.msra.mxu0 0.0
        %480 = vmatpush.msra.mxu0 %v464
        %481 = vmatpush.msra.mxu0 %v463
        %482 = vmatpush.msra.mxu0 %v462
        %483 = vmatpush.msra.mxu0 %v461
        %484 = vmatmul.f32.gmra.mxu0 %v466
        %v485 = vpop.f32.mrf.mxu0
        %v486 = vadd.f32 0.0, %v485
        %487 = vdwg.mxu0
        %v488 = vmax.f32 %v486, 0.0
        %v489 = vld [vmem:[%s2] sm:$0xf]
        %vm490 = vcmask 31744
        %v492 = vsel %vm490, %v488, 0
        %vm494 = vcmask 1043456
        %v496 = vsel %vm494, %v489, 0
        %498 = vmatpush.msra.mxu0 0.0
        %499 = vmatpush.msra.mxu0 0.0
        %500 = vmatpush.msra.mxu0 0.0
        %501 = vmatpush.msra.mxu0 0.0
        %502 = vmatpush.msra.mxu0 0.0
        %503 = vmatpush.msra.mxu0 0.0
        %504 = vmatpush.msra.mxu0 0.0
        %505 = vmatpush.msra.mxu0 0.0
        %506 = vmatpush.msra.mxu0 0.0
        %507 = vmatpush.msra.mxu0 0.0
        %508 = vmatpush.msra.mxu0 0.0
        %509 = vmatpush.msra.mxu0 0.0
        %510 = vmatpush.msra.mxu0 0.0
        %511 = vmatpush.msra.mxu0 0.0
        %512 = vmatpush.msra.mxu0 0.0
        %513 = vmatpush.msra.mxu0 %v496
        %514 = vmatmul.f32.gmra.mxu0 %v492
        %v515 = vpop.f32.mrf.mxu0
        %v516 = vadd.f32 0.0, %v515
        %517 = vdwg.mxu0
        %vm518 = vcmask 254976
        %v519 = vsel %vm518, %v516, 0.0
        %v520 = vrot.slane %v519, 4
        %v521 = vadd.f32 %v519, %v520
        %v522 = vrot.slane %v521, 2
        %v523 = vadd.f32 %v521, %v522
        %v524 = vrot.slane %v523, 1
        %v525 = vadd.f32 %v523, %v524
        %v526 = vxor.u32 %v525, 2147483648
        %v527 = vmul.f32 %v526, 1.442695
        %v528 = vpow.pop %v527
        %v529 = vadd.f32 %v528, 1.0
        %v530 = vrcp.pop %v529
        %v531 = vmul.f32 %v529, %v530
        %v532 = vsub.f32 1.0, %v531
        %v533 = vmul.f32 %v530, %v532
        %v534 = vadd.f32 %v530, %v533
        %vm535 = vweird.f32 %v529
        %vm536 = vweird.f32 %v530
        %vm537 = vmor %vm535, %vm536
        %v538 = vsel %vm537, %v530, %v534
        %v539 = vand.u32 2147483647, %v529
        %vm540 = vcmp.eq.f32.partialorder %v539, 8.507059e+37
        %v541 = vand.u32 %v529, 2147483648
        %v542 = vor.u32 1.1754944e-38, %v541
        %v543 = vsel %vm540, %v542, %v538
        %v544 = vmul.f32 1.0, %v543
        %v545 = vmul.f32 %v272, %v544
        %v546 = vmul.f32 %v273, %v544
        %v547 = vmul.f32 %v274, %v544
        %v548 = vmul.f32 %v275, %v544
        %v549 = vmul.f32 %v276, %v544
        %v550 = vmul.f32 %v277, %v544
        %v551 = vmul.f32 %v278, %v544
        %v552 = vmul.f32 %v279, %v544
        %v553 = vmul.f32 %v280, %v544
        %v554 = vmul.f32 %v281, %v544
        %v555 = vmul.f32 %v282, %v544
        %v556 = vmul.f32 %v283, %v544
        %v557 = vmul.f32 %v284, %v544
        %v558 = vmul.f32 %v285, %v544
        %v559 = vmul.f32 %v286, %v544
        %v560 = vmul.f32 %v287, %v544
        %v561 = vmul.f32 %v288, %v544
        %v562 = vmul.f32 %v289, %v544
        %v563 = vmul.f32 %v290, %v544
        %v564 = vmul.f32 %v291, %v544
        %v565 = vmul.f32 %v292, %v544
        %v566 = vmul.f32 %v293, %v544
        %v567 = vmul.f32 %v294, %v544
        %v568 = vmul.f32 %v295, %v544
        %v569 = vmul.f32 %v296, %v544
        %v570 = vmul.f32 %v297, %v544
        %v571 = vmul.f32 %v298, %v544
        %v572 = vmul.f32 %v299, %v544
        %v573 = vmul.f32 %v300, %v544
        %v574 = vmul.f32 %v301, %v544
        %v575 = vmul.f32 %v302, %v544
        %v576 = vmul.f32 %v303, %v544
        %v577 = vsel %vm304, %v545, 0.0
        %578 = vadd.xlane.f32.xlu0 %v577
        %v579 = vpop.xlane.xlu0 %578
        %v580 = vsel %vm304, %v546, 0.0
        %581 = vadd.xlane.f32.xlu0 %v580
        %v582 = vpop.xlane.xlu0 %581
        %v583 = vsel %vm304, %v547, 0.0
        %584 = vadd.xlane.f32.xlu0 %v583
        %v585 = vpop.xlane.xlu0 %584
        %v586 = vsel %vm304, %v548, 0.0
        %587 = vadd.xlane.f32.xlu0 %v586
        %v588 = vpop.xlane.xlu0 %587
        %v589 = vsel %vm304, %v549, 0.0
        %590 = vadd.xlane.f32.xlu0 %v589
        %v591 = vpop.xlane.xlu0 %590
        %v592 = vsel %vm304, %v550, 0.0
        %593 = vadd.xlane.f32.xlu0 %v592
        %v594 = vpop.xlane.xlu0 %593
        %v595 = vsel %vm304, %v551, 0.0
        %596 = vadd.xlane.f32.xlu0 %v595
        %v597 = vpop.xlane.xlu0 %596
        %v598 = vsel %vm304, %v552, 0.0
        %599 = vadd.xlane.f32.xlu0 %v598
        %v600 = vpop.xlane.xlu0 %599
        %v601 = vsel %vm304, %v553, 0.0
        %602 = vadd.xlane.f32.xlu0 %v601
        %v603 = vpop.xlane.xlu0 %602
        %v604 = vsel %vm304, %v554, 0.0
        %605 = vadd.xlane.f32.xlu0 %v604
        %v606 = vpop.xlane.xlu0 %605
        %v607 = vsel %vm304, %v555, 0.0
        %608 = vadd.xlane.f32.xlu0 %v607
        %v609 = vpop.xlane.xlu0 %608
        %v610 = vsel %vm304, %v556, 0.0
        %611 = vadd.xlane.f32.xlu0 %v610
        %v612 = vpop.xlane.xlu0 %611
        %v613 = vsel %vm304, %v557, 0.0
        %614 = vadd.xlane.f32.xlu0 %v613
        %v615 = vpop.xlane.xlu0 %614
        %v616 = vsel %vm304, %v558, 0.0
        %617 = vadd.xlane.f32.xlu0 %v616
        %v618 = vpop.xlane.xlu0 %617
        %v619 = vsel %vm304, %v559, 0.0
        %620 = vadd.xlane.f32.xlu0 %v619
        %v621 = vpop.xlane.xlu0 %620
        %v622 = vsel %vm304, %v560, 0.0
        %623 = vadd.xlane.f32.xlu0 %v622
        %v624 = vpop.xlane.xlu0 %623
        %v625 = vsel %vm304, %v561, 0.0
        %626 = vadd.xlane.f32.xlu0 %v625
        %v627 = vpop.xlane.xlu0 %626
        %v628 = vsel %vm304, %v562, 0.0
        %629 = vadd.xlane.f32.xlu0 %v628
        %v630 = vpop.xlane.xlu0 %629
        %v631 = vsel %vm304, %v563, 0.0
        %632 = vadd.xlane.f32.xlu0 %v631
        %v633 = vpop.xlane.xlu0 %632
        %v634 = vsel %vm304, %v564, 0.0
        %635 = vadd.xlane.f32.xlu0 %v634
        %v636 = vpop.xlane.xlu0 %635
        %v637 = vsel %vm304, %v565, 0.0
        %638 = vadd.xlane.f32.xlu0 %v637
        %v639 = vpop.xlane.xlu0 %638
        %v640 = vsel %vm304, %v566, 0.0
        %641 = vadd.xlane.f32.xlu0 %v640
        %v642 = vpop.xlane.xlu0 %641
        %v643 = vsel %vm304, %v567, 0.0
        %644 = vadd.xlane.f32.xlu0 %v643
        %v645 = vpop.xlane.xlu0 %644
        %v646 = vsel %vm304, %v568, 0.0
        %647 = vadd.xlane.f32.xlu0 %v646
        %v648 = vpop.xlane.xlu0 %647
        %v649 = vsel %vm304, %v569, 0.0
        %650 = vadd.xlane.f32.xlu0 %v649
        %v651 = vpop.xlane.xlu0 %650
        %v652 = vsel %vm304, %v570, 0.0
        %653 = vadd.xlane.f32.xlu0 %v652
        %v654 = vpop.xlane.xlu0 %653
        %v655 = vsel %vm304, %v571, 0.0
        %656 = vadd.xlane.f32.xlu0 %v655
        %v657 = vpop.xlane.xlu0 %656
        %v658 = vsel %vm304, %v572, 0.0
        %659 = vadd.xlane.f32.xlu0 %v658
        %v660 = vpop.xlane.xlu0 %659
        %v661 = vsel %vm304, %v573, 0.0
        %662 = vadd.xlane.f32.xlu0 %v661
        %v663 = vpop.xlane.xlu0 %662
        %v664 = vsel %vm304, %v574, 0.0
        %665 = vadd.xlane.f32.xlu0 %v664
        %v666 = vpop.xlane.xlu0 %665
        %v667 = vsel %vm304, %v575, 0.0
        %668 = vadd.xlane.f32.xlu0 %v667
        %v669 = vpop.xlane.xlu0 %668
        %v670 = vsel %vm304, %v576, 0.0
        %671 = vadd.xlane.f32.xlu0 %v670
        %v672 = vpop.xlane.xlu0 %671
        %v673 = vrcp.pop 32.0
        %v674 = vmul.f32 32.0, %v673
        %v675 = vsub.f32 1.0, %v674
        %v676 = vmul.f32 %v673, %v675
        %v677 = vadd.f32 %v673, %v676
        %vm678 = vweird.f32 %v673
        %v679 = vsel %vm678, %v673, %v677
        %v680 = vmul.f32 %v579, %v679
        %v681 = vmul.f32 %v582, %v679
        %v682 = vmul.f32 %v585, %v679
        %v683 = vmul.f32 %v588, %v679
        %v684 = vmul.f32 %v591, %v679
        %v685 = vmul.f32 %v594, %v679
        %v686 = vmul.f32 %v597, %v679
        %v687 = vmul.f32 %v600, %v679
        %v688 = vmul.f32 %v603, %v679
        %v689 = vmul.f32 %v606, %v679
        %v690 = vmul.f32 %v609, %v679
        %v691 = vmul.f32 %v612, %v679
        %v692 = vmul.f32 %v615, %v679
        %v693 = vmul.f32 %v618, %v679
        %v694 = vmul.f32 %v621, %v679
        %v695 = vmul.f32 %v624, %v679
        %v696 = vmul.f32 %v627, %v679
        %v697 = vmul.f32 %v630, %v679
        %v698 = vmul.f32 %v633, %v679
        %v699 = vmul.f32 %v636, %v679
        %v700 = vmul.f32 %v639, %v679
        %v701 = vmul.f32 %v642, %v679
        %v702 = vmul.f32 %v645, %v679
        %v703 = vmul.f32 %v648, %v679
        %v704 = vmul.f32 %v651, %v679
        %v705 = vmul.f32 %v654, %v679
        %v706 = vmul.f32 %v657, %v679
        %v707 = vmul.f32 %v660, %v679
        %v708 = vmul.f32 %v663, %v679
        %v709 = vmul.f32 %v666, %v679
        %v710 = vmul.f32 %v669, %v679
        %v711 = vmul.f32 %v672, %v679
        %v712 = vsel %vm304, %v545, -inf
        %713 = vmax.xlane.f32.xlu0 %v712
        %v714 = vpop.xlane.xlu0 %713
        %v715 = vsel %vm304, %v546, -inf
        %716 = vmax.xlane.f32.xlu0 %v715
        %v717 = vpop.xlane.xlu0 %716
        %v718 = vsel %vm304, %v547, -inf
        %719 = vmax.xlane.f32.xlu0 %v718
        %v720 = vpop.xlane.xlu0 %719
        %v721 = vsel %vm304, %v548, -inf
        %722 = vmax.xlane.f32.xlu0 %v721
        %v723 = vpop.xlane.xlu0 %722
        %v724 = vsel %vm304, %v549, -inf
        %725 = vmax.xlane.f32.xlu0 %v724
        %v726 = vpop.xlane.xlu0 %725
        %v727 = vsel %vm304, %v550, -inf
        %728 = vmax.xlane.f32.xlu0 %v727
        %v729 = vpop.xlane.xlu0 %728
        %v730 = vsel %vm304, %v551, -inf
        %731 = vmax.xlane.f32.xlu0 %v730
        %v732 = vpop.xlane.xlu0 %731
        %v733 = vsel %vm304, %v552, -inf
        %734 = vmax.xlane.f32.xlu0 %v733
        %v735 = vpop.xlane.xlu0 %734
        %v736 = vsel %vm304, %v553, -inf
        %737 = vmax.xlane.f32.xlu0 %v736
        %v738 = vpop.xlane.xlu0 %737
        %v739 = vsel %vm304, %v554, -inf
        %740 = vmax.xlane.f32.xlu0 %v739
        %v741 = vpop.xlane.xlu0 %740
        %v742 = vsel %vm304, %v555, -inf
        %743 = vmax.xlane.f32.xlu0 %v742
        %v744 = vpop.xlane.xlu0 %743
        %v745 = vsel %vm304, %v556, -inf
        %746 = vmax.xlane.f32.xlu0 %v745
        %v747 = vpop.xlane.xlu0 %746
        %v748 = vsel %vm304, %v557, -inf
        %749 = vmax.xlane.f32.xlu0 %v748
        %v750 = vpop.xlane.xlu0 %749
        %v751 = vsel %vm304, %v558, -inf
        %752 = vmax.xlane.f32.xlu0 %v751
        %v753 = vpop.xlane.xlu0 %752
        %v754 = vsel %vm304, %v559, -inf
        %755 = vmax.xlane.f32.xlu0 %v754
        %v756 = vpop.xlane.xlu0 %755
        %v757 = vsel %vm304, %v560, -inf
        %758 = vmax.xlane.f32.xlu0 %v757
        %v759 = vpop.xlane.xlu0 %758
        %v760 = vsel %vm304, %v561, -inf
        %761 = vmax.xlane.f32.xlu0 %v760
        %v762 = vpop.xlane.xlu0 %761
        %v763 = vsel %vm304, %v562, -inf
        %764 = vmax.xlane.f32.xlu0 %v763
        %v765 = vpop.xlane.xlu0 %764
        %v766 = vsel %vm304, %v563, -inf
        %767 = vmax.xlane.f32.xlu0 %v766
        %v768 = vpop.xlane.xlu0 %767
        %v769 = vsel %vm304, %v564, -inf
        %770 = vmax.xlane.f32.xlu0 %v769
        %v771 = vpop.xlane.xlu0 %770
        %v772 = vsel %vm304, %v565, -inf
        %773 = vmax.xlane.f32.xlu0 %v772
        %v774 = vpop.xlane.xlu0 %773
        %v775 = vsel %vm304, %v566, -inf
        %776 = vmax.xlane.f32.xlu0 %v775
        %v777 = vpop.xlane.xlu0 %776
        %v778 = vsel %vm304, %v567, -inf
        %779 = vmax.xlane.f32.xlu0 %v778
        %v780 = vpop.xlane.xlu0 %779
        %v781 = vsel %vm304, %v568, -inf
        %782 = vmax.xlane.f32.xlu0 %v781
        %v783 = vpop.xlane.xlu0 %782
        %v784 = vsel %vm304, %v569, -inf
        %785 = vmax.xlane.f32.xlu0 %v784
        %v786 = vpop.xlane.xlu0 %785
        %v787 = vsel %vm304, %v570, -inf
        %788 = vmax.xlane.f32.xlu0 %v787
        %v789 = vpop.xlane.xlu0 %788
        %v790 = vsel %vm304, %v571, -inf
        %791 = vmax.xlane.f32.xlu0 %v790
        %v792 = vpop.xlane.xlu0 %791
        %v793 = vsel %vm304, %v572, -inf
        %794 = vmax.xlane.f32.xlu0 %v793
        %v795 = vpop.xlane.xlu0 %794
        %v796 = vsel %vm304, %v573, -inf
        %797 = vmax.xlane.f32.xlu0 %v796
        %v798 = vpop.xlane.xlu0 %797
        %v799 = vsel %vm304, %v574, -inf
        %800 = vmax.xlane.f32.xlu0 %v799
        %v801 = vpop.xlane.xlu0 %800
        %v802 = vsel %vm304, %v575, -inf
        %803 = vmax.xlane.f32.xlu0 %v802
        %v804 = vpop.xlane.xlu0 %803
        %v805 = vsel %vm304, %v576, -inf
        %806 = vmax.xlane.f32.xlu0 %v805
        %v807 = vpop.xlane.xlu0 %806
        %vm808 = vcmask 179200
        %809 = vst.msk [vmem:[#allocation2] sm:$0xff] %vm808, 0.0
        %810 = vst.msk [vmem:[#allocation2 + $0x8] sm:$0xff] %vm808, 0.0
        %vm811 = vcmask 177152
        %812 = vst.msk [vmem:[#allocation2 + $0x10] sm:$0x3f] %vm811, 0.0
        %813 = vst.msk [vmem:[#allocation2 + $0x18] sm:$0xff] %vm808, 0.0
        %814 = vst.msk [vmem:[#allocation2 + $0x20] sm:$0xff] %vm808, 0.0
        %815 = vst.msk [vmem:[#allocation2 + $0x28] sm:$0x3f] %vm811, 0.0
        %v848 = vlaneseq
        %v849 = vand.u32 %v848, 127
        %v850 = vadd.s32 %v849, 4294967293
        %v851 = vperm.slane %v680, %v850
        %v852 = vadd.s32 %v849, 4294967285
        %v853 = vperm.slane %v681, %v852
        %vm854 = vcmask 154712
        %v855 = vsel %vm854, %v853, %v851
        %v856 = vperm.slane %v682, %v850
        %v857 = vperm.slane %v683, %v852
        %v858 = vsel %vm854, %v857, %v856
        %v859 = vperm.slane %v684, %v850
        %v860 = vperm.slane %v685, %v852
        %v861 = vsel %vm854, %v860, %v859
        %v862 = vperm.slane %v686, %v850
        %v863 = vperm.slane %v687, %v852
        %v864 = vsel %vm854, %v863, %v862
        %v865 = vperm.slane %v688, %v850
        %v866 = vperm.slane %v689, %v852
        %v867 = vsel %vm854, %v866, %v865
        %v868 = vperm.slane %v690, %v850
        %v869 = vperm.slane %v691, %v852
        %v870 = vsel %vm854, %v869, %v868
        %v871 = vperm.slane %v692, %v850
        %v872 = vperm.slane %v693, %v852
        %v873 = vsel %vm854, %v872, %v871
        %v874 = vperm.slane %v694, %v850
        %v875 = vperm.slane %v695, %v852
        %v876 = vsel %vm854, %v875, %v874
        %v877 = vperm.slane %v696, %v850
        %v878 = vperm.slane %v697, %v852
        %v879 = vsel %vm854, %v878, %v877
        %v880 = vperm.slane %v698, %v850
        %v881 = vperm.slane %v699, %v852
        %v882 = vsel %vm854, %v881, %v880
        %v883 = vperm.slane %v700, %v850
        %v884 = vperm.slane %v701, %v852
        %v885 = vsel %vm854, %v884, %v883
        %v886 = vperm.slane %v702, %v850
        %v887 = vperm.slane %v703, %v852
        %v888 = vsel %vm854, %v887, %v886
        %v889 = vperm.slane %v704, %v850
        %v890 = vperm.slane %v705, %v852
        %v891 = vsel %vm854, %v890, %v889
        %v892 = vperm.slane %v706, %v850
        %v893 = vperm.slane %v707, %v852
        %v894 = vsel %vm854, %v893, %v892
        %v895 = vperm.slane %v708, %v850
        %v896 = vperm.slane %v709, %v852
        %v897 = vsel %vm854, %v896, %v895
        %v898 = vperm.slane %v710, %v850
        %v899 = vperm.slane %v711, %v852
        %v900 = vsel %vm854, %v899, %v898
        %vm901 = vcmask 1041409
        %v902 = vsel %vm901, %v858, %v855
        %vm903 = vcmask 1042434
        %v904 = vsel %vm903, %v861, %v902
        %vm905 = vcmask 1043459
        %v906 = vsel %vm905, %v864, %v904
        %vm907 = vcmask 1044484
        %v908 = vsel %vm907, %v867, %v906
        %vm909 = vcmask 1045509
        %v910 = vsel %vm909, %v870, %v908
        %vm911 = vcmask 1046534
        %v912 = vsel %vm911, %v873, %v910
        %vm913 = vcmask 1047559
        %v914 = vsel %vm913, %v876, %v912
        %v915 = vsel %vm901, %v882, %v879
        %v916 = vsel %vm903, %v885, %v915
        %v917 = vsel %vm905, %v888, %v916
        %v918 = vsel %vm907, %v891, %v917
        %v919 = vsel %vm909, %v894, %v918
        %v920 = vsel %vm911, %v897, %v919
        %v921 = vsel %vm913, %v900, %v920
        %vm924 = vcmask 154648
        %925 = vst.msk [vmem:[#allocation2 + $0x3] sm:$0xff] %vm924, %v914
        %926 = vst.msk [vmem:[#allocation2 + $0xb] sm:$0xff] %vm924, %v921
        %v959 = vperm.slane %v714, %v850
        %v960 = vperm.slane %v717, %v852
        %v961 = vsel %vm854, %v960, %v959
        %v962 = vperm.slane %v720, %v850
        %v963 = vperm.slane %v723, %v852
        %v964 = vsel %vm854, %v963, %v962
        %v965 = vperm.slane %v726, %v850
        %v966 = vperm.slane %v729, %v852
        %v967 = vsel %vm854, %v966, %v965
        %v968 = vperm.slane %v732, %v850
        %v969 = vperm.slane %v735, %v852
        %v970 = vsel %vm854, %v969, %v968
        %v971 = vperm.slane %v738, %v850
        %v972 = vperm.slane %v741, %v852
        %v973 = vsel %vm854, %v972, %v971
        %v974 = vperm.slane %v744, %v850
        %v975 = vperm.slane %v747, %v852
        %v976 = vsel %vm854, %v975, %v974
        %v977 = vperm.slane %v750, %v850
        %v978 = vperm.slane %v753, %v852
        %v979 = vsel %vm854, %v978, %v977
        %v980 = vperm.slane %v756, %v850
        %v981 = vperm.slane %v759, %v852
        %v982 = vsel %vm854, %v981, %v980
        %v983 = vperm.slane %v762, %v850
        %v984 = vperm.slane %v765, %v852
        %v985 = vsel %vm854, %v984, %v983
        %v986 = vperm.slane %v768, %v850
        %v987 = vperm.slane %v771, %v852
        %v988 = vsel %vm854, %v987, %v986
        %v989 = vperm.slane %v774, %v850
        %v990 = vperm.slane %v777, %v852
        %v991 = vsel %vm854, %v990, %v989
        %v992 = vperm.slane %v780, %v850
        %v993 = vperm.slane %v783, %v852
        %v994 = vsel %vm854, %v993, %v992
        %v995 = vperm.slane %v786, %v850
        %v996 = vperm.slane %v789, %v852
        %v997 = vsel %vm854, %v996, %v995
        %v998 = vperm.slane %v792, %v850
        %v999 = vperm.slane %v795, %v852
        %v1000 = vsel %vm854, %v999, %v998
        %v1001 = vperm.slane %v798, %v850
        %v1002 = vperm.slane %v801, %v852
        %v1003 = vsel %vm854, %v1002, %v1001
        %v1004 = vperm.slane %v804, %v850
        %v1005 = vperm.slane %v807, %v852
        %v1006 = vsel %vm854, %v1005, %v1004
        %v1007 = vsel %vm901, %v964, %v961
        %v1008 = vsel %vm903, %v967, %v1007
        %v1009 = vsel %vm905, %v970, %v1008
        %v1010 = vsel %vm907, %v973, %v1009
        %v1011 = vsel %vm909, %v976, %v1010
        %v1012 = vsel %vm911, %v979, %v1011
        %v1013 = vsel %vm913, %v982, %v1012
        %v1014 = vsel %vm901, %v988, %v985
        %v1015 = vsel %vm903, %v991, %v1014
        %v1016 = vsel %vm905, %v994, %v1015
        %v1017 = vsel %vm907, %v997, %v1016
        %v1018 = vsel %vm909, %v1000, %v1017
        %v1019 = vsel %vm911, %v1003, %v1018
        %v1020 = vsel %vm913, %v1006, %v1019
        %s1023 = scalar_lea.vmem [#allocation2], 24
        %1024 = vst.msk [vmem:[%s1023 + $0x3] sm:$0xff] %vm924, %v1013
        %1025 = vst.msk [vmem:[%s1023 + $0xb] sm:$0xff] %vm924, %v1020
        %v1026 = vld [vmem:[#allocation2] sm:$0xff]
        %v1027 = vld [vmem:[#allocation2 + $0x8] sm:$0xff]
        %v1028 = vld [vmem:[#allocation2 + $0x10] sm:$0x3f]
        %v1029 = vld [vmem:[#allocation2 + $0x18] sm:$0xff]
        %v1030 = vld [vmem:[#allocation2 + $0x20] sm:$0xff]
        %v1031 = vld [vmem:[#allocation2 + $0x28] sm:$0x3f]
        %s1032 = sld [smem:[#allocation7]]
        %s1033 = sld [smem:[#allocation7 + $0x31]]
        %v1034 = vstv %s1032
        %v1035 = vmul.f32 %v1034, %v1026
        %v1036 = vmul.f32 %v1034, %v1027
        %v1037 = vadd.f32 %v1035, 0.0
        %v1038 = vadd.f32 %v1036, 0.0
        %v1039 = vstv %s1033
        %v1040 = vmul.f32 %v1039, %v1029
        %v1041 = vmul.f32 %v1039, %v1030
        %v1042 = vadd.f32 %v1037, %v1040
        %v1043 = vadd.f32 %v1038, %v1041
        %s1044 = sld [smem:[#allocation7 + $0x7]]
        %s1045 = sld [smem:[#allocation7 + $0x38]]
        %v1046 = vstv %s1044
        %v1047 = vmul.f32 %v1046, %v1026
        %v1048 = vmul.f32 %v1046, %v1027
        %v1049 = vmul.f32 %v1046, %v1028
        %vm1053 = vcmask 1046528
        %v1054 = vrot.slane %v1047, 1
        %v1055 = vrot.slane %v1048, 1
        %v1056 = vsel %vm1053, %v1054, %v1055
        %v1057 = vrot.slane %v1049, 1
        %v1058 = vsel %vm1053, %v1055, %v1057
        %v1061 = vadd.f32 %v1042, %v1056
        %v1062 = vadd.f32 %v1043, %v1058
        %v1063 = vstv %s1045
        %v1064 = vmul.f32 %v1063, %v1029
        %v1065 = vmul.f32 %v1063, %v1030
        %v1066 = vmul.f32 %v1063, %v1031
        %v1070 = vrot.slane %v1064, 1
        %v1071 = vrot.slane %v1065, 1
        %v1072 = vsel %vm1053, %v1070, %v1071
        %v1073 = vrot.slane %v1066, 1
        %v1074 = vsel %vm1053, %v1071, %v1073
        %v1077 = vadd.f32 %v1061, %v1072
        %v1078 = vadd.f32 %v1062, %v1074
        %s1079 = sld [smem:[#allocation7 + $0xe]]
        %s1080 = sld [smem:[#allocation7 + $0x3f]]
        %v1081 = vstv %s1079
        %v1082 = vmul.f32 %v1081, %v1026
        %v1083 = vmul.f32 %v1081, %v1027
        %v1084 = vmul.f32 %v1081, %v1028
        %vm1088 = vcmask 1045504
        %v1089 = vrot.slane %v1082, 2
        %v1090 = vrot.slane %v1083, 2
        %v1091 = vsel %vm1088, %v1089, %v1090
        %v1092 = vrot.slane %v1084, 2
        %v1093 = vsel %vm1088, %v1090, %v1092
        %v1096 = vadd.f32 %v1077, %v1091
        %v1097 = vadd.f32 %v1078, %v1093
        %v1098 = vstv %s1080
        %v1099 = vmul.f32 %v1098, %v1029
        %v1100 = vmul.f32 %v1098, %v1030
        %v1101 = vmul.f32 %v1098, %v1031
        %v1105 = vrot.slane %v1099, 2
        %v1106 = vrot.slane %v1100, 2
        %v1107 = vsel %vm1088, %v1105, %v1106
        %v1108 = vrot.slane %v1101, 2
        %v1109 = vsel %vm1088, %v1106, %v1108
        %v1112 = vadd.f32 %v1096, %v1107
        %v1113 = vadd.f32 %v1097, %v1109
        %s1114 = sld [smem:[#allocation7 + $0x15]]
        %s1115 = sld [smem:[#allocation7 + $0x46]]
        %v1116 = vstv %s1114
        %v1117 = vmul.f32 %v1116, %v1026
        %v1118 = vmul.f32 %v1116, %v1027
        %v1119 = vmul.f32 %v1116, %v1028
        %vm1123 = vcmask 1044480
        %v1124 = vrot.slane %v1117, 3
        %v1125 = vrot.slane %v1118, 3
        %v1126 = vsel %vm1123, %v1124, %v1125
        %v1127 = vrot.slane %v1119, 3
        %v1128 = vsel %vm1123, %v1125, %v1127
        %v1131 = vadd.f32 %v1112, %v1126
        %v1132 = vadd.f32 %v1113, %v1128
        %v1133 = vstv %s1115
        %v1134 = vmul.f32 %v1133, %v1029
        %v1135 = vmul.f32 %v1133, %v1030
        %v1136 = vmul.f32 %v1133, %v1031
        %v1140 = vrot.slane %v1134, 3
        %v1141 = vrot.slane %v1135, 3
        %v1142 = vsel %vm1123, %v1140, %v1141
        %v1143 = vrot.slane %v1136, 3
        %v1144 = vsel %vm1123, %v1141, %v1143
        %v1147 = vadd.f32 %v1131, %v1142
        %v1148 = vadd.f32 %v1132, %v1144
        %s1149 = sld [smem:[#allocation7 + $0x1c]]
        %s1150 = sld [smem:[#allocation7 + $0x4d]]
        %v1151 = vstv %s1149
        %v1152 = vmul.f32 %v1151, %v1026
        %v1153 = vmul.f32 %v1151, %v1027
        %v1154 = vmul.f32 %v1151, %v1028
        %v1158 = vrot.slane %v1152, 4
        %v1159 = vrot.slane %v1153, 4
        %v1160 = vsel %vm494, %v1158, %v1159
        %v1161 = vrot.slane %v1154, 4
        %v1162 = vsel %vm494, %v1159, %v1161
        %v1165 = vadd.f32 %v1147, %v1160
        %v1166 = vadd.f32 %v1148, %v1162
        %v1167 = vstv %s1150
        %v1168 = vmul.f32 %v1167, %v1029
        %v1169 = vmul.f32 %v1167, %v1030
        %v1170 = vmul.f32 %v1167, %v1031
        %v1174 = vrot.slane %v1168, 4
        %v1175 = vrot.slane %v1169, 4
        %v1176 = vsel %vm494, %v1174, %v1175
        %v1177 = vrot.slane %v1170, 4
        %v1178 = vsel %vm494, %v1175, %v1177
        %v1181 = vadd.f32 %v1165, %v1176
        %v1182 = vadd.f32 %v1166, %v1178
        %s1183 = sld [smem:[#allocation7 + $0x23]]
        %s1184 = sld [smem:[#allocation7 + $0x54]]
        %v1185 = vstv %s1183
        %v1186 = vmul.f32 %v1185, %v1026
        %v1187 = vmul.f32 %v1185, %v1027
        %v1188 = vmul.f32 %v1185, %v1028
        %vm1192 = vcmask 1042432
        %v1193 = vrot.slane %v1186, 5
        %v1194 = vrot.slane %v1187, 5
        %v1195 = vsel %vm1192, %v1193, %v1194
        %v1196 = vrot.slane %v1188, 5
        %v1197 = vsel %vm1192, %v1194, %v1196
        %v1200 = vadd.f32 %v1181, %v1195
        %v1201 = vadd.f32 %v1182, %v1197
        %v1202 = vstv %s1184
        %v1203 = vmul.f32 %v1202, %v1029
        %v1204 = vmul.f32 %v1202, %v1030
        %v1205 = vmul.f32 %v1202, %v1031
        %v1209 = vrot.slane %v1203, 5
        %v1210 = vrot.slane %v1204, 5
        %v1211 = vsel %vm1192, %v1209, %v1210
        %v1212 = vrot.slane %v1205, 5
        %v1213 = vsel %vm1192, %v1210, %v1212
        %v1216 = vadd.f32 %v1200, %v1211
        %v1217 = vadd.f32 %v1201, %v1213
        %s1218 = sld [smem:[#allocation7 + $0x2a]]
        %s1219 = sld [smem:[#allocation7 + $0x5b]]
        %v1220 = vstv %s1218
        %v1221 = vmul.f32 %v1220, %v1026
        %v1222 = vmul.f32 %v1220, %v1027
        %v1223 = vmul.f32 %v1220, %v1028
        %vm1227 = vcmask 1041408
        %v1228 = vrot.slane %v1221, 6
        %v1229 = vrot.slane %v1222, 6
        %v1230 = vsel %vm1227, %v1228, %v1229
        %v1231 = vrot.slane %v1223, 6
        %v1232 = vsel %vm1227, %v1229, %v1231
        %v1235 = vadd.f32 %v1216, %v1230
        %v1236 = vadd.f32 %v1217, %v1232
        %v1237 = vstv %s1219
        %v1238 = vmul.f32 %v1237, %v1029
        %v1239 = vmul.f32 %v1237, %v1030
        %v1240 = vmul.f32 %v1237, %v1031
        %v1244 = vrot.slane %v1238, 6
        %v1245 = vrot.slane %v1239, 6
        %v1246 = vsel %vm1227, %v1244, %v1245
        %v1247 = vrot.slane %v1240, 6
        %v1248 = vsel %vm1227, %v1245, %v1247
        %v1251 = vadd.f32 %v1235, %v1246
        %v1252 = vadd.f32 %v1236, %v1248
        %s1253 = sld [smem:[#allocation7 + $0x1]]
        %s1254 = sld [smem:[#allocation7 + $0x32]]
        %v1255 = vstv %s1253
        %v1256 = vmul.f32 %v1255, %v1026
        %v1257 = vmul.f32 %v1255, %v1027
        %1260 = vrot.lane.b32.xlu0 %v1256, 127
        %v1261 = vpop.permute.xlu0 %1260
        %1262 = vrot.lane.b32.xlu0 %v1257, 127
        %v1263 = vpop.permute.xlu0 %1262
        %v1266 = vadd.f32 %v1251, %v1261
        %v1267 = vadd.f32 %v1252, %v1263
        %v1268 = vstv %s1254
        %v1269 = vmul.f32 %v1268, %v1029
        %v1270 = vmul.f32 %v1268, %v1030
        %1273 = vrot.lane.b32.xlu0 %v1269, 127
        %v1274 = vpop.permute.xlu0 %1273
        %1275 = vrot.lane.b32.xlu0 %v1270, 127
        %v1276 = vpop.permute.xlu0 %1275
        %v1279 = vadd.f32 %v1266, %v1274
        %v1280 = vadd.f32 %v1267, %v1276
        %s1281 = sld [smem:[#allocation7 + $0x8]]
        %s1282 = sld [smem:[#allocation7 + $0x39]]
        %v1283 = vstv %s1281
        %v1284 = vmul.f32 %v1283, %v1026
        %v1285 = vmul.f32 %v1283, %v1027
        %v1286 = vmul.f32 %v1283, %v1028
        %v1290 = vrot.slane %v1284, 1
        %v1291 = vrot.slane %v1285, 1
        %v1292 = vsel %vm1053, %v1290, %v1291
        %v1293 = vrot.slane %v1286, 1
        %v1294 = vsel %vm1053, %v1291, %v1293
        %1295 = vrot.lane.b32.xlu0 %v1292, 127
        %v1296 = vpop.permute.xlu0 %1295
        %1297 = vrot.lane.b32.xlu0 %v1294, 127
        %v1298 = vpop.permute.xlu0 %1297
        %v1301 = vadd.f32 %v1279, %v1296
        %v1302 = vadd.f32 %v1280, %v1298
        %v1303 = vstv %s1282
        %v1304 = vmul.f32 %v1303, %v1029
        %v1305 = vmul.f32 %v1303, %v1030
        %v1306 = vmul.f32 %v1303, %v1031
        %v1310 = vrot.slane %v1304, 1
        %v1311 = vrot.slane %v1305, 1
        %v1312 = vsel %vm1053, %v1310, %v1311
        %v1313 = vrot.slane %v1306, 1
        %v1314 = vsel %vm1053, %v1311, %v1313
        %1315 = vrot.lane.b32.xlu0 %v1312, 127
        %v1316 = vpop.permute.xlu0 %1315
        %1317 = vrot.lane.b32.xlu0 %v1314, 127
        %v1318 = vpop.permute.xlu0 %1317
        %v1321 = vadd.f32 %v1301, %v1316
        %v1322 = vadd.f32 %v1302, %v1318
        %s1323 = sld [smem:[#allocation7 + $0xf]]
        %s1324 = sld [smem:[#allocation7 + $0x40]]
        %v1325 = vstv %s1323
        %v1326 = vmul.f32 %v1325, %v1026
        %v1327 = vmul.f32 %v1325, %v1027
        %v1328 = vmul.f32 %v1325, %v1028
        %v1332 = vrot.slane %v1326, 2
        %v1333 = vrot.slane %v1327, 2
        %v1334 = vsel %vm1088, %v1332, %v1333
        %v1335 = vrot.slane %v1328, 2
        %v1336 = vsel %vm1088, %v1333, %v1335
        %1337 = vrot.lane.b32.xlu0 %v1334, 127
        %v1338 = vpop.permute.xlu0 %1337
        %1339 = vrot.lane.b32.xlu0 %v1336, 127
        %v1340 = vpop.permute.xlu0 %1339
        %v1343 = vadd.f32 %v1321, %v1338
        %v1344 = vadd.f32 %v1322, %v1340
        %v1345 = vstv %s1324
        %v1346 = vmul.f32 %v1345, %v1029
        %v1347 = vmul.f32 %v1345, %v1030
        %v1348 = vmul.f32 %v1345, %v1031
        %v1352 = vrot.slane %v1346, 2
        %v1353 = vrot.slane %v1347, 2
        %v1354 = vsel %vm1088, %v1352, %v1353
        %v1355 = vrot.slane %v1348, 2
        %v1356 = vsel %vm1088, %v1353, %v1355
        %1357 = vrot.lane.b32.xlu0 %v1354, 127
        %v1358 = vpop.permute.xlu0 %1357
        %1359 = vrot.lane.b32.xlu0 %v1356, 127
        %v1360 = vpop.permute.xlu0 %1359
        %v1363 = vadd.f32 %v1343, %v1358
        %v1364 = vadd.f32 %v1344, %v1360
        %s1365 = sld [smem:[#allocation7 + $0x16]]
        %s1366 = sld [smem:[#allocation7 + $0x47]]
        %v1367 = vstv %s1365
        %v1368 = vmul.f32 %v1367, %v1026
        %v1369 = vmul.f32 %v1367, %v1027
        %v1370 = vmul.f32 %v1367, %v1028
        %v1374 = vrot.slane %v1368, 3
        %v1375 = vrot.slane %v1369, 3
        %v1376 = vsel %vm1123, %v1374, %v1375
        %v1377 = vrot.slane %v1370, 3
        %v1378 = vsel %vm1123, %v1375, %v1377
        %1379 = vrot.lane.b32.xlu0 %v1376, 127
        %v1380 = vpop.permute.xlu0 %1379
        %1381 = vrot.lane.b32.xlu0 %v1378, 127
        %v1382 = vpop.permute.xlu0 %1381
        %v1385 = vadd.f32 %v1363, %v1380
        %v1386 = vadd.f32 %v1364, %v1382
        %v1387 = vstv %s1366
        %v1388 = vmul.f32 %v1387, %v1029
        %v1389 = vmul.f32 %v1387, %v1030
        %v1390 = vmul.f32 %v1387, %v1031
        %v1394 = vrot.slane %v1388, 3
        %v1395 = vrot.slane %v1389, 3
        %v1396 = vsel %vm1123, %v1394, %v1395
        %v1397 = vrot.slane %v1390, 3
        %v1398 = vsel %vm1123, %v1395, %v1397
        %1399 = vrot.lane.b32.xlu0 %v1396, 127
        %v1400 = vpop.permute.xlu0 %1399
        %1401 = vrot.lane.b32.xlu0 %v1398, 127
        %v1402 = vpop.permute.xlu0 %1401
        %v1405 = vadd.f32 %v1385, %v1400
        %v1406 = vadd.f32 %v1386, %v1402
        %s1407 = sld [smem:[#allocation7 + $0x1d]]
        %s1408 = sld [smem:[#allocation7 + $0x4e]]
        %v1409 = vstv %s1407
        %v1410 = vmul.f32 %v1409, %v1026
        %v1411 = vmul.f32 %v1409, %v1027
        %v1412 = vmul.f32 %v1409, %v1028
        %v1416 = vrot.slane %v1410, 4
        %v1417 = vrot.slane %v1411, 4
        %v1418 = vsel %vm494, %v1416, %v1417
        %v1419 = vrot.slane %v1412, 4
        %v1420 = vsel %vm494, %v1417, %v1419
        %1421 = vrot.lane.b32.xlu0 %v1418, 127
        %v1422 = vpop.permute.xlu0 %1421
        %1423 = vrot.lane.b32.xlu0 %v1420, 127
        %v1424 = vpop.permute.xlu0 %1423
        %v1427 = vadd.f32 %v1405, %v1422
        %v1428 = vadd.f32 %v1406, %v1424
        %v1429 = vstv %s1408
        %v1430 = vmul.f32 %v1429, %v1029
        %v1431 = vmul.f32 %v1429, %v1030
        %v1432 = vmul.f32 %v1429, %v1031
        %v1436 = vrot.slane %v1430, 4
        %v1437 = vrot.slane %v1431, 4
        %v1438 = vsel %vm494, %v1436, %v1437
        %v1439 = vrot.slane %v1432, 4
        %v1440 = vsel %vm494, %v1437, %v1439
        %1441 = vrot.lane.b32.xlu0 %v1438, 127
        %v1442 = vpop.permute.xlu0 %1441
        %1443 = vrot.lane.b32.xlu0 %v1440, 127
        %v1444 = vpop.permute.xlu0 %1443
        %v1447 = vadd.f32 %v1427, %v1442
        %v1448 = vadd.f32 %v1428, %v1444
        %s1449 = sld [smem:[#allocation7 + $0x24]]
        %s1450 = sld [smem:[#allocation7 + $0x55]]
        %v1451 = vstv %s1449
        %v1452 = vmul.f32 %v1451, %v1026
        %v1453 = vmul.f32 %v1451, %v1027
        %v1454 = vmul.f32 %v1451, %v1028
        %v1458 = vrot.slane %v1452, 5
        %v1459 = vrot.slane %v1453, 5
        %v1460 = vsel %vm1192, %v1458, %v1459
        %v1461 = vrot.slane %v1454, 5
        %v1462 = vsel %vm1192, %v1459, %v1461
        %1463 = vrot.lane.b32.xlu0 %v1460, 127
        %v1464 = vpop.permute.xlu0 %1463
        %1465 = vrot.lane.b32.xlu0 %v1462, 127
        %v1466 = vpop.permute.xlu0 %1465
        %v1469 = vadd.f32 %v1447, %v1464
        %v1470 = vadd.f32 %v1448, %v1466
        %v1471 = vstv %s1450
        %v1472 = vmul.f32 %v1471, %v1029
        %v1473 = vmul.f32 %v1471, %v1030
        %v1474 = vmul.f32 %v1471, %v1031
        %v1478 = vrot.slane %v1472, 5
        %v1479 = vrot.slane %v1473, 5
        %v1480 = vsel %vm1192, %v1478, %v1479
        %v1481 = vrot.slane %v1474, 5
        %v1482 = vsel %vm1192, %v1479, %v1481
        %1483 = vrot.lane.b32.xlu0 %v1480, 127
        %v1484 = vpop.permute.xlu0 %1483
        %1485 = vrot.lane.b32.xlu0 %v1482, 127
        %v1486 = vpop.permute.xlu0 %1485
        %v1489 = vadd.f32 %v1469, %v1484
        %v1490 = vadd.f32 %v1470, %v1486
        %s1491 = sld [smem:[#allocation7 + $0x2b]]
        %s1492 = sld [smem:[#allocation7 + $0x5c]]
        %v1493 = vstv %s1491
        %v1494 = vmul.f32 %v1493, %v1026
        %v1495 = vmul.f32 %v1493, %v1027
        %v1496 = vmul.f32 %v1493, %v1028
        %v1500 = vrot.slane %v1494, 6
        %v1501 = vrot.slane %v1495, 6
        %v1502 = vsel %vm1227, %v1500, %v1501
        %v1503 = vrot.slane %v1496, 6
        %v1504 = vsel %vm1227, %v1501, %v1503
        %1505 = vrot.lane.b32.xlu0 %v1502, 127
        %v1506 = vpop.permute.xlu0 %1505
        %1507 = vrot.lane.b32.xlu0 %v1504, 127
        %v1508 = vpop.permute.xlu0 %1507
        %v1511 = vadd.f32 %v1489, %v1506
        %v1512 = vadd.f32 %v1490, %v1508
        %v1513 = vstv %s1492
        %v1514 = vmul.f32 %v1513, %v1029
        %v1515 = vmul.f32 %v1513, %v1030
        %v1516 = vmul.f32 %v1513, %v1031
        %v1520 = vrot.slane %v1514, 6
        %v1521 = vrot.slane %v1515, 6
        %v1522 = vsel %vm1227, %v1520, %v1521
        %v1523 = vrot.slane %v1516, 6
        %v1524 = vsel %vm1227, %v1521, %v1523
        %1525 = vrot.lane.b32.xlu0 %v1522, 127
        %v1526 = vpop.permute.xlu0 %1525
        %1527 = vrot.lane.b32.xlu0 %v1524, 127
        %v1528 = vpop.permute.xlu0 %1527
        %v1531 = vadd.f32 %v1511, %v1526
        %v1532 = vadd.f32 %v1512, %v1528
        %s1533 = sld [smem:[#allocation7 + $0x2]]
        %s1534 = sld [smem:[#allocation7 + $0x33]]
        %v1535 = vstv %s1533
        %v1536 = vmul.f32 %v1535, %v1026
        %v1537 = vmul.f32 %v1535, %v1027
        %1540 = vrot.lane.b32.xlu0 %v1536, 126
        %v1541 = vpop.permute.xlu0 %1540
        %1542 = vrot.lane.b32.xlu0 %v1537, 126
        %v1543 = vpop.permute.xlu0 %1542
        %v1546 = vadd.f32 %v1531, %v1541
        %v1547 = vadd.f32 %v1532, %v1543
        %v1548 = vstv %s1534
        %v1549 = vmul.f32 %v1548, %v1029
        %v1550 = vmul.f32 %v1548, %v1030
        %1553 = vrot.lane.b32.xlu0 %v1549, 126
        %v1554 = vpop.permute.xlu0 %1553
        %1555 = vrot.lane.b32.xlu0 %v1550, 126
        %v1556 = vpop.permute.xlu0 %1555
        %v1559 = vadd.f32 %v1546, %v1554
        %v1560 = vadd.f32 %v1547, %v1556
        %s1561 = sld [smem:[#allocation7 + $0x9]]
        %s1562 = sld [smem:[#allocation7 + $0x3a]]
        %v1563 = vstv %s1561
        %v1564 = vmul.f32 %v1563, %v1026
        %v1565 = vmul.f32 %v1563, %v1027
        %v1566 = vmul.f32 %v1563, %v1028
        %v1570 = vrot.slane %v1564, 1
        %v1571 = vrot.slane %v1565, 1
        %v1572 = vsel %vm1053, %v1570, %v1571
        %v1573 = vrot.slane %v1566, 1
        %v1574 = vsel %vm1053, %v1571, %v1573
        %1575 = vrot.lane.b32.xlu0 %v1572, 126
        %v1576 = vpop.permute.xlu0 %1575
        %1577 = vrot.lane.b32.xlu0 %v1574, 126
        %v1578 = vpop.permute.xlu0 %1577
        %v1581 = vadd.f32 %v1559, %v1576
        %v1582 = vadd.f32 %v1560, %v1578
        %v1583 = vstv %s1562
        %v1584 = vmul.f32 %v1583, %v1029
        %v1585 = vmul.f32 %v1583, %v1030
        %v1586 = vmul.f32 %v1583, %v1031
        %v1590 = vrot.slane %v1584, 1
        %v1591 = vrot.slane %v1585, 1
        %v1592 = vsel %vm1053, %v1590, %v1591
        %v1593 = vrot.slane %v1586, 1
        %v1594 = vsel %vm1053, %v1591, %v1593
        %1595 = vrot.lane.b32.xlu0 %v1592, 126
        %v1596 = vpop.permute.xlu0 %1595
        %1597 = vrot.lane.b32.xlu0 %v1594, 126
        %v1598 = vpop.permute.xlu0 %1597
        %v1601 = vadd.f32 %v1581, %v1596
        %v1602 = vadd.f32 %v1582, %v1598
        %s1603 = sld [smem:[#allocation7 + $0x10]]
        %s1604 = sld [smem:[#allocation7 + $0x41]]
        %v1605 = vstv %s1603
        %v1606 = vmul.f32 %v1605, %v1026
        %v1607 = vmul.f32 %v1605, %v1027
        %v1608 = vmul.f32 %v1605, %v1028
        %v1612 = vrot.slane %v1606, 2
        %v1613 = vrot.slane %v1607, 2
        %v1614 = vsel %vm1088, %v1612, %v1613
        %v1615 = vrot.slane %v1608, 2
        %v1616 = vsel %vm1088, %v1613, %v1615
        %1617 = vrot.lane.b32.xlu0 %v1614, 126
        %v1618 = vpop.permute.xlu0 %1617
        %1619 = vrot.lane.b32.xlu0 %v1616, 126
        %v1620 = vpop.permute.xlu0 %1619
        %v1623 = vadd.f32 %v1601, %v1618
        %v1624 = vadd.f32 %v1602, %v1620
        %v1625 = vstv %s1604
        %v1626 = vmul.f32 %v1625, %v1029
        %v1627 = vmul.f32 %v1625, %v1030
        %v1628 = vmul.f32 %v1625, %v1031
        %v1632 = vrot.slane %v1626, 2
        %v1633 = vrot.slane %v1627, 2
        %v1634 = vsel %vm1088, %v1632, %v1633
        %v1635 = vrot.slane %v1628, 2
        %v1636 = vsel %vm1088, %v1633, %v1635
        %1637 = vrot.lane.b32.xlu0 %v1634, 126
        %v1638 = vpop.permute.xlu0 %1637
        %1639 = vrot.lane.b32.xlu0 %v1636, 126
        %v1640 = vpop.permute.xlu0 %1639
        %v1643 = vadd.f32 %v1623, %v1638
        %v1644 = vadd.f32 %v1624, %v1640
        %s1645 = sld [smem:[#allocation7 + $0x17]]
        %s1646 = sld [smem:[#allocation7 + $0x48]]
        %v1647 = vstv %s1645
        %v1648 = vmul.f32 %v1647, %v1026
        %v1649 = vmul.f32 %v1647, %v1027
        %v1650 = vmul.f32 %v1647, %v1028
        %v1654 = vrot.slane %v1648, 3
        %v1655 = vrot.slane %v1649, 3
        %v1656 = vsel %vm1123, %v1654, %v1655
        %v1657 = vrot.slane %v1650, 3
        %v1658 = vsel %vm1123, %v1655, %v1657
        %1659 = vrot.lane.b32.xlu0 %v1656, 126
        %v1660 = vpop.permute.xlu0 %1659
        %1661 = vrot.lane.b32.xlu0 %v1658, 126
        %v1662 = vpop.permute.xlu0 %1661
        %v1665 = vadd.f32 %v1643, %v1660
        %v1666 = vadd.f32 %v1644, %v1662
        %v1667 = vstv %s1646
        %v1668 = vmul.f32 %v1667, %v1029
        %v1669 = vmul.f32 %v1667, %v1030
        %v1670 = vmul.f32 %v1667, %v1031
        %v1674 = vrot.slane %v1668, 3
        %v1675 = vrot.slane %v1669, 3
        %v1676 = vsel %vm1123, %v1674, %v1675
        %v1677 = vrot.slane %v1670, 3
        %v1678 = vsel %vm1123, %v1675, %v1677
        %1679 = vrot.lane.b32.xlu0 %v1676, 126
        %v1680 = vpop.permute.xlu0 %1679
        %1681 = vrot.lane.b32.xlu0 %v1678, 126
        %v1682 = vpop.permute.xlu0 %1681
        %v1685 = vadd.f32 %v1665, %v1680
        %v1686 = vadd.f32 %v1666, %v1682
        %s1687 = sld [smem:[#allocation7 + $0x1e]]
        %s1688 = sld [smem:[#allocation7 + $0x4f]]
        %v1689 = vstv %s1687
        %v1690 = vmul.f32 %v1689, %v1026
        %v1691 = vmul.f32 %v1689, %v1027
        %v1692 = vmul.f32 %v1689, %v1028
        %v1696 = vrot.slane %v1690, 4
        %v1697 = vrot.slane %v1691, 4
        %v1698 = vsel %vm494, %v1696, %v1697
        %v1699 = vrot.slane %v1692, 4
        %v1700 = vsel %vm494, %v1697, %v1699
        %1701 = vrot.lane.b32.xlu0 %v1698, 126
        %v1702 = vpop.permute.xlu0 %1701
        %1703 = vrot.lane.b32.xlu0 %v1700, 126
        %v1704 = vpop.permute.xlu0 %1703
        %v1707 = vadd.f32 %v1685, %v1702
        %v1708 = vadd.f32 %v1686, %v1704
        %v1709 = vstv %s1688
        %v1710 = vmul.f32 %v1709, %v1029
        %v1711 = vmul.f32 %v1709, %v1030
        %v1712 = vmul.f32 %v1709, %v1031
        %v1716 = vrot.slane %v1710, 4
        %v1717 = vrot.slane %v1711, 4
        %v1718 = vsel %vm494, %v1716, %v1717
        %v1719 = vrot.slane %v1712, 4
        %v1720 = vsel %vm494, %v1717, %v1719
        %1721 = vrot.lane.b32.xlu0 %v1718, 126
        %v1722 = vpop.permute.xlu0 %1721
        %1723 = vrot.lane.b32.xlu0 %v1720, 126
        %v1724 = vpop.permute.xlu0 %1723
        %v1727 = vadd.f32 %v1707, %v1722
        %v1728 = vadd.f32 %v1708, %v1724
        %s1729 = sld [smem:[#allocation7 + $0x25]]
        %s1730 = sld [smem:[#allocation7 + $0x56]]
        %v1731 = vstv %s1729
        %v1732 = vmul.f32 %v1731, %v1026
        %v1733 = vmul.f32 %v1731, %v1027
        %v1734 = vmul.f32 %v1731, %v1028
        %v1738 = vrot.slane %v1732, 5
        %v1739 = vrot.slane %v1733, 5
        %v1740 = vsel %vm1192, %v1738, %v1739
        %v1741 = vrot.slane %v1734, 5
        %v1742 = vsel %vm1192, %v1739, %v1741
        %1743 = vrot.lane.b32.xlu0 %v1740, 126
        %v1744 = vpop.permute.xlu0 %1743
        %1745 = vrot.lane.b32.xlu0 %v1742, 126
        %v1746 = vpop.permute.xlu0 %1745
        %v1749 = vadd.f32 %v1727, %v1744
        %v1750 = vadd.f32 %v1728, %v1746
        %v1751 = vstv %s1730
        %v1752 = vmul.f32 %v1751, %v1029
        %v1753 = vmul.f32 %v1751, %v1030
        %v1754 = vmul.f32 %v1751, %v1031
        %v1758 = vrot.slane %v1752, 5
        %v1759 = vrot.slane %v1753, 5
        %v1760 = vsel %vm1192, %v1758, %v1759
        %v1761 = vrot.slane %v1754, 5
        %v1762 = vsel %vm1192, %v1759, %v1761
        %1763 = vrot.lane.b32.xlu0 %v1760, 126
        %v1764 = vpop.permute.xlu0 %1763
        %1765 = vrot.lane.b32.xlu0 %v1762, 126
        %v1766 = vpop.permute.xlu0 %1765
        %v1769 = vadd.f32 %v1749, %v1764
        %v1770 = vadd.f32 %v1750, %v1766
        %s1771 = sld [smem:[#allocation7 + $0x2c]]
        %s1772 = sld [smem:[#allocation7 + $0x5d]]
        %v1773 = vstv %s1771
        %v1774 = vmul.f32 %v1773, %v1026
        %v1775 = vmul.f32 %v1773, %v1027
        %v1776 = vmul.f32 %v1773, %v1028
        %v1780 = vrot.slane %v1774, 6
        %v1781 = vrot.slane %v1775, 6
        %v1782 = vsel %vm1227, %v1780, %v1781
        %v1783 = vrot.slane %v1776, 6
        %v1784 = vsel %vm1227, %v1781, %v1783
        %1785 = vrot.lane.b32.xlu0 %v1782, 126
        %v1786 = vpop.permute.xlu0 %1785
        %1787 = vrot.lane.b32.xlu0 %v1784, 126
        %v1788 = vpop.permute.xlu0 %1787
        %v1791 = vadd.f32 %v1769, %v1786
        %v1792 = vadd.f32 %v1770, %v1788
        %v1793 = vstv %s1772
        %v1794 = vmul.f32 %v1793, %v1029
        %v1795 = vmul.f32 %v1793, %v1030
        %v1796 = vmul.f32 %v1793, %v1031
        %v1800 = vrot.slane %v1794, 6
        %v1801 = vrot.slane %v1795, 6
        %v1802 = vsel %vm1227, %v1800, %v1801
        %v1803 = vrot.slane %v1796, 6
        %v1804 = vsel %vm1227, %v1801, %v1803
        %1805 = vrot.lane.b32.xlu0 %v1802, 126
        %v1806 = vpop.permute.xlu0 %1805
        %1807 = vrot.lane.b32.xlu0 %v1804, 126
        %v1808 = vpop.permute.xlu0 %1807
        %v1811 = vadd.f32 %v1791, %v1806
        %v1812 = vadd.f32 %v1792, %v1808
        %s1813 = sld [smem:[#allocation7 + $0x3]]
        %s1814 = sld [smem:[#allocation7 + $0x34]]
        %v1815 = vstv %s1813
        %v1816 = vmul.f32 %v1815, %v1026
        %v1817 = vmul.f32 %v1815, %v1027
        %1820 = vrot.lane.b32.xlu0 %v1816, 125
        %v1821 = vpop.permute.xlu0 %1820
        %1822 = vrot.lane.b32.xlu0 %v1817, 125
        %v1823 = vpop.permute.xlu0 %1822
        %v1826 = vadd.f32 %v1811, %v1821
        %v1827 = vadd.f32 %v1812, %v1823
        %v1828 = vstv %s1814
        %v1829 = vmul.f32 %v1828, %v1029
        %v1830 = vmul.f32 %v1828, %v1030
        %1833 = vrot.lane.b32.xlu0 %v1829, 125
        %v1834 = vpop.permute.xlu0 %1833
        %1835 = vrot.lane.b32.xlu0 %v1830, 125
        %v1836 = vpop.permute.xlu0 %1835
        %v1839 = vadd.f32 %v1826, %v1834
        %v1840 = vadd.f32 %v1827, %v1836
        %s1841 = sld [smem:[#allocation7 + $0xa]]
        %s1842 = sld [smem:[#allocation7 + $0x3b]]
        %v1843 = vstv %s1841
        %v1844 = vmul.f32 %v1843, %v1026
        %v1845 = vmul.f32 %v1843, %v1027
        %v1846 = vmul.f32 %v1843, %v1028
        %v1850 = vrot.slane %v1844, 1
        %v1851 = vrot.slane %v1845, 1
        %v1852 = vsel %vm1053, %v1850, %v1851
        %v1853 = vrot.slane %v1846, 1
        %v1854 = vsel %vm1053, %v1851, %v1853
        %1855 = vrot.lane.b32.xlu0 %v1852, 125
        %v1856 = vpop.permute.xlu0 %1855
        %1857 = vrot.lane.b32.xlu0 %v1854, 125
        %v1858 = vpop.permute.xlu0 %1857
        %v1861 = vadd.f32 %v1839, %v1856
        %v1862 = vadd.f32 %v1840, %v1858
        %v1863 = vstv %s1842
        %v1864 = vmul.f32 %v1863, %v1029
        %v1865 = vmul.f32 %v1863, %v1030
        %v1866 = vmul.f32 %v1863, %v1031
        %v1870 = vrot.slane %v1864, 1
        %v1871 = vrot.slane %v1865, 1
        %v1872 = vsel %vm1053, %v1870, %v1871
        %v1873 = vrot.slane %v1866, 1
        %v1874 = vsel %vm1053, %v1871, %v1873
        %1875 = vrot.lane.b32.xlu0 %v1872, 125
        %v1876 = vpop.permute.xlu0 %1875
        %1877 = vrot.lane.b32.xlu0 %v1874, 125
        %v1878 = vpop.permute.xlu0 %1877
        %v1881 = vadd.f32 %v1861, %v1876
        %v1882 = vadd.f32 %v1862, %v1878
        %s1883 = sld [smem:[#allocation7 + $0x11]]
        %s1884 = sld [smem:[#allocation7 + $0x42]]
        %v1885 = vstv %s1883
        %v1886 = vmul.f32 %v1885, %v1026
        %v1887 = vmul.f32 %v1885, %v1027
        %v1888 = vmul.f32 %v1885, %v1028
        %v1892 = vrot.slane %v1886, 2
        %v1893 = vrot.slane %v1887, 2
        %v1894 = vsel %vm1088, %v1892, %v1893
        %v1895 = vrot.slane %v1888, 2
        %v1896 = vsel %vm1088, %v1893, %v1895
        %1897 = vrot.lane.b32.xlu0 %v1894, 125
        %v1898 = vpop.permute.xlu0 %1897
        %1899 = vrot.lane.b32.xlu0 %v1896, 125
        %v1900 = vpop.permute.xlu0 %1899
        %v1903 = vadd.f32 %v1881, %v1898
        %v1904 = vadd.f32 %v1882, %v1900
        %v1905 = vstv %s1884
        %v1906 = vmul.f32 %v1905, %v1029
        %v1907 = vmul.f32 %v1905, %v1030
        %v1908 = vmul.f32 %v1905, %v1031
        %v1912 = vrot.slane %v1906, 2
        %v1913 = vrot.slane %v1907, 2
        %v1914 = vsel %vm1088, %v1912, %v1913
        %v1915 = vrot.slane %v1908, 2
        %v1916 = vsel %vm1088, %v1913, %v1915
        %1917 = vrot.lane.b32.xlu0 %v1914, 125
        %v1918 = vpop.permute.xlu0 %1917
        %1919 = vrot.lane.b32.xlu0 %v1916, 125
        %v1920 = vpop.permute.xlu0 %1919
        %v1923 = vadd.f32 %v1903, %v1918
        %v1924 = vadd.f32 %v1904, %v1920
        %s1925 = sld [smem:[#allocation7 + $0x18]]
        %s1926 = sld [smem:[#allocation7 + $0x49]]
        %v1927 = vstv %s1925
        %v1928 = vmul.f32 %v1927, %v1026
        %v1929 = vmul.f32 %v1927, %v1027
        %v1930 = vmul.f32 %v1927, %v1028
        %v1934 = vrot.slane %v1928, 3
        %v1935 = vrot.slane %v1929, 3
        %v1936 = vsel %vm1123, %v1934, %v1935
        %v1937 = vrot.slane %v1930, 3
        %v1938 = vsel %vm1123, %v1935, %v1937
        %1939 = vrot.lane.b32.xlu0 %v1936, 125
        %v1940 = vpop.permute.xlu0 %1939
        %1941 = vrot.lane.b32.xlu0 %v1938, 125
        %v1942 = vpop.permute.xlu0 %1941
        %v1945 = vadd.f32 %v1923, %v1940
        %v1946 = vadd.f32 %v1924, %v1942
        %v1947 = vstv %s1926
        %v1948 = vmul.f32 %v1947, %v1029
        %v1949 = vmul.f32 %v1947, %v1030
        %v1950 = vmul.f32 %v1947, %v1031
        %v1954 = vrot.slane %v1948, 3
        %v1955 = vrot.slane %v1949, 3
        %v1956 = vsel %vm1123, %v1954, %v1955
        %v1957 = vrot.slane %v1950, 3
        %v1958 = vsel %vm1123, %v1955, %v1957
        %1959 = vrot.lane.b32.xlu0 %v1956, 125
        %v1960 = vpop.permute.xlu0 %1959
        %1961 = vrot.lane.b32.xlu0 %v1958, 125
        %v1962 = vpop.permute.xlu0 %1961
        %v1965 = vadd.f32 %v1945, %v1960
        %v1966 = vadd.f32 %v1946, %v1962
        %s1967 = sld [smem:[#allocation7 + $0x1f]]
        %s1968 = sld [smem:[#allocation7 + $0x50]]
        %v1969 = vstv %s1967
        %v1970 = vmul.f32 %v1969, %v1026
        %v1971 = vmul.f32 %v1969, %v1027
        %v1972 = vmul.f32 %v1969, %v1028
        %v1976 = vrot.slane %v1970, 4
        %v1977 = vrot.slane %v1971, 4
        %v1978 = vsel %vm494, %v1976, %v1977
        %v1979 = vrot.slane %v1972, 4
        %v1980 = vsel %vm494, %v1977, %v1979
        %1981 = vrot.lane.b32.xlu0 %v1978, 125
        %v1982 = vpop.permute.xlu0 %1981
        %1983 = vrot.lane.b32.xlu0 %v1980, 125
        %v1984 = vpop.permute.xlu0 %1983
        %v1987 = vadd.f32 %v1965, %v1982
        %v1988 = vadd.f32 %v1966, %v1984
        %v1989 = vstv %s1968
        %v1990 = vmul.f32 %v1989, %v1029
        %v1991 = vmul.f32 %v1989, %v1030
        %v1992 = vmul.f32 %v1989, %v1031
        %v1996 = vrot.slane %v1990, 4
        %v1997 = vrot.slane %v1991, 4
        %v1998 = vsel %vm494, %v1996, %v1997
        %v1999 = vrot.slane %v1992, 4
        %v2000 = vsel %vm494, %v1997, %v1999
        %2001 = vrot.lane.b32.xlu0 %v1998, 125
        %v2002 = vpop.permute.xlu0 %2001
        %2003 = vrot.lane.b32.xlu0 %v2000, 125
        %v2004 = vpop.permute.xlu0 %2003
        %v2007 = vadd.f32 %v1987, %v2002
        %v2008 = vadd.f32 %v1988, %v2004
        %s2009 = sld [smem:[#allocation7 + $0x26]]
        %s2010 = sld [smem:[#allocation7 + $0x57]]
        %v2011 = vstv %s2009
        %v2012 = vmul.f32 %v2011, %v1026
        %v2013 = vmul.f32 %v2011, %v1027
        %v2014 = vmul.f32 %v2011, %v1028
        %v2018 = vrot.slane %v2012, 5
        %v2019 = vrot.slane %v2013, 5
        %v2020 = vsel %vm1192, %v2018, %v2019
        %v2021 = vrot.slane %v2014, 5
        %v2022 = vsel %vm1192, %v2019, %v2021
        %2023 = vrot.lane.b32.xlu0 %v2020, 125
        %v2024 = vpop.permute.xlu0 %2023
        %2025 = vrot.lane.b32.xlu0 %v2022, 125
        %v2026 = vpop.permute.xlu0 %2025
        %v2029 = vadd.f32 %v2007, %v2024
        %v2030 = vadd.f32 %v2008, %v2026
        %v2031 = vstv %s2010
        %v2032 = vmul.f32 %v2031, %v1029
        %v2033 = vmul.f32 %v2031, %v1030
        %v2034 = vmul.f32 %v2031, %v1031
        %v2038 = vrot.slane %v2032, 5
        %v2039 = vrot.slane %v2033, 5
        %v2040 = vsel %vm1192, %v2038, %v2039
        %v2041 = vrot.slane %v2034, 5
        %v2042 = vsel %vm1192, %v2039, %v2041
        %2043 = vrot.lane.b32.xlu0 %v2040, 125
        %v2044 = vpop.permute.xlu0 %2043
        %2045 = vrot.lane.b32.xlu0 %v2042, 125
        %v2046 = vpop.permute.xlu0 %2045
        %v2049 = vadd.f32 %v2029, %v2044
        %v2050 = vadd.f32 %v2030, %v2046
        %s2051 = sld [smem:[#allocation7 + $0x2d]]
        %s2052 = sld [smem:[#allocation7 + $0x5e]]
        %v2053 = vstv %s2051
        %v2054 = vmul.f32 %v2053, %v1026
        %v2055 = vmul.f32 %v2053, %v1027
        %v2056 = vmul.f32 %v2053, %v1028
        %v2060 = vrot.slane %v2054, 6
        %v2061 = vrot.slane %v2055, 6
        %v2062 = vsel %vm1227, %v2060, %v2061
        %v2063 = vrot.slane %v2056, 6
        %v2064 = vsel %vm1227, %v2061, %v2063
        %2065 = vrot.lane.b32.xlu0 %v2062, 125
        %v2066 = vpop.permute.xlu0 %2065
        %2067 = vrot.lane.b32.xlu0 %v2064, 125
        %v2068 = vpop.permute.xlu0 %2067
        %v2071 = vadd.f32 %v2049, %v2066
        %v2072 = vadd.f32 %v2050, %v2068
        %v2073 = vstv %s2052
        %v2074 = vmul.f32 %v2073, %v1029
        %v2075 = vmul.f32 %v2073, %v1030
        %v2076 = vmul.f32 %v2073, %v1031
        %v2080 = vrot.slane %v2074, 6
        %v2081 = vrot.slane %v2075, 6
        %v2082 = vsel %vm1227, %v2080, %v2081
        %v2083 = vrot.slane %v2076, 6
        %v2084 = vsel %vm1227, %v2081, %v2083
        %2085 = vrot.lane.b32.xlu0 %v2082, 125
        %v2086 = vpop.permute.xlu0 %2085
        %2087 = vrot.lane.b32.xlu0 %v2084, 125
        %v2088 = vpop.permute.xlu0 %2087
        %v2091 = vadd.f32 %v2071, %v2086
        %v2092 = vadd.f32 %v2072, %v2088
        %s2093 = sld [smem:[#allocation7 + $0x4]]
        %s2094 = sld [smem:[#allocation7 + $0x35]]
        %v2095 = vstv %s2093
        %v2096 = vmul.f32 %v2095, %v1026
        %v2097 = vmul.f32 %v2095, %v1027
        %2100 = vrot.lane.b32.xlu0 %v2096, 124
        %v2101 = vpop.permute.xlu0 %2100
        %2102 = vrot.lane.b32.xlu0 %v2097, 124
        %v2103 = vpop.permute.xlu0 %2102
        %v2106 = vadd.f32 %v2091, %v2101
        %v2107 = vadd.f32 %v2092, %v2103
        %v2108 = vstv %s2094
        %v2109 = vmul.f32 %v2108, %v1029
        %v2110 = vmul.f32 %v2108, %v1030
        %2113 = vrot.lane.b32.xlu0 %v2109, 124
        %v2114 = vpop.permute.xlu0 %2113
        %2115 = vrot.lane.b32.xlu0 %v2110, 124
        %v2116 = vpop.permute.xlu0 %2115
        %v2119 = vadd.f32 %v2106, %v2114
        %v2120 = vadd.f32 %v2107, %v2116
        %s2121 = sld [smem:[#allocation7 + $0xb]]
        %s2122 = sld [smem:[#allocation7 + $0x3c]]
        %v2123 = vstv %s2121
        %v2124 = vmul.f32 %v2123, %v1026
        %v2125 = vmul.f32 %v2123, %v1027
        %v2126 = vmul.f32 %v2123, %v1028
        %v2130 = vrot.slane %v2124, 1
        %v2131 = vrot.slane %v2125, 1
        %v2132 = vsel %vm1053, %v2130, %v2131
        %v2133 = vrot.slane %v2126, 1
        %v2134 = vsel %vm1053, %v2131, %v2133
        %2135 = vrot.lane.b32.xlu0 %v2132, 124
        %v2136 = vpop.permute.xlu0 %2135
        %2137 = vrot.lane.b32.xlu0 %v2134, 124
        %v2138 = vpop.permute.xlu0 %2137
        %v2141 = vadd.f32 %v2119, %v2136
        %v2142 = vadd.f32 %v2120, %v2138
        %v2143 = vstv %s2122
        %v2144 = vmul.f32 %v2143, %v1029
        %v2145 = vmul.f32 %v2143, %v1030
        %v2146 = vmul.f32 %v2143, %v1031
        %v2150 = vrot.slane %v2144, 1
        %v2151 = vrot.slane %v2145, 1
        %v2152 = vsel %vm1053, %v2150, %v2151
        %v2153 = vrot.slane %v2146, 1
        %v2154 = vsel %vm1053, %v2151, %v2153
        %2155 = vrot.lane.b32.xlu0 %v2152, 124
        %v2156 = vpop.permute.xlu0 %2155
        %2157 = vrot.lane.b32.xlu0 %v2154, 124
        %v2158 = vpop.permute.xlu0 %2157
        %v2161 = vadd.f32 %v2141, %v2156
        %v2162 = vadd.f32 %v2142, %v2158
        %s2163 = sld [smem:[#allocation7 + $0x12]]
        %s2164 = sld [smem:[#allocation7 + $0x43]]
        %v2165 = vstv %s2163
        %v2166 = vmul.f32 %v2165, %v1026
        %v2167 = vmul.f32 %v2165, %v1027
        %v2168 = vmul.f32 %v2165, %v1028
        %v2172 = vrot.slane %v2166, 2
        %v2173 = vrot.slane %v2167, 2
        %v2174 = vsel %vm1088, %v2172, %v2173
        %v2175 = vrot.slane %v2168, 2
        %v2176 = vsel %vm1088, %v2173, %v2175
        %2177 = vrot.lane.b32.xlu0 %v2174, 124
        %v2178 = vpop.permute.xlu0 %2177
        %2179 = vrot.lane.b32.xlu0 %v2176, 124
        %v2180 = vpop.permute.xlu0 %2179
        %v2183 = vadd.f32 %v2161, %v2178
        %v2184 = vadd.f32 %v2162, %v2180
        %v2185 = vstv %s2164
        %v2186 = vmul.f32 %v2185, %v1029
        %v2187 = vmul.f32 %v2185, %v1030
        %v2188 = vmul.f32 %v2185, %v1031
        %v2192 = vrot.slane %v2186, 2
        %v2193 = vrot.slane %v2187, 2
        %v2194 = vsel %vm1088, %v2192, %v2193
        %v2195 = vrot.slane %v2188, 2
        %v2196 = vsel %vm1088, %v2193, %v2195
        %2197 = vrot.lane.b32.xlu0 %v2194, 124
        %v2198 = vpop.permute.xlu0 %2197
        %2199 = vrot.lane.b32.xlu0 %v2196, 124
        %v2200 = vpop.permute.xlu0 %2199
        %v2203 = vadd.f32 %v2183, %v2198
        %v2204 = vadd.f32 %v2184, %v2200
        %s2205 = sld [smem:[#allocation7 + $0x19]]
        %s2206 = sld [smem:[#allocation7 + $0x4a]]
        %v2207 = vstv %s2205
        %v2208 = vmul.f32 %v2207, %v1026
        %v2209 = vmul.f32 %v2207, %v1027
        %v2210 = vmul.f32 %v2207, %v1028
        %v2214 = vrot.slane %v2208, 3
        %v2215 = vrot.slane %v2209, 3
        %v2216 = vsel %vm1123, %v2214, %v2215
        %v2217 = vrot.slane %v2210, 3
        %v2218 = vsel %vm1123, %v2215, %v2217
        %2219 = vrot.lane.b32.xlu0 %v2216, 124
        %v2220 = vpop.permute.xlu0 %2219
        %2221 = vrot.lane.b32.xlu0 %v2218, 124
        %v2222 = vpop.permute.xlu0 %2221
        %v2225 = vadd.f32 %v2203, %v2220
        %v2226 = vadd.f32 %v2204, %v2222
        %v2227 = vstv %s2206
        %v2228 = vmul.f32 %v2227, %v1029
        %v2229 = vmul.f32 %v2227, %v1030
        %v2230 = vmul.f32 %v2227, %v1031
        %v2234 = vrot.slane %v2228, 3
        %v2235 = vrot.slane %v2229, 3
        %v2236 = vsel %vm1123, %v2234, %v2235
        %v2237 = vrot.slane %v2230, 3
        %v2238 = vsel %vm1123, %v2235, %v2237
        %2239 = vrot.lane.b32.xlu0 %v2236, 124
        %v2240 = vpop.permute.xlu0 %2239
        %2241 = vrot.lane.b32.xlu0 %v2238, 124
        %v2242 = vpop.permute.xlu0 %2241
        %v2245 = vadd.f32 %v2225, %v2240
        %v2246 = vadd.f32 %v2226, %v2242
        %s2247 = sld [smem:[#allocation7 + $0x20]]
        %s2248 = sld [smem:[#allocation7 + $0x51]]
        %v2249 = vstv %s2247
        %v2250 = vmul.f32 %v2249, %v1026
        %v2251 = vmul.f32 %v2249, %v1027
        %v2252 = vmul.f32 %v2249, %v1028
        %v2256 = vrot.slane %v2250, 4
        %v2257 = vrot.slane %v2251, 4
        %v2258 = vsel %vm494, %v2256, %v2257
        %v2259 = vrot.slane %v2252, 4
        %v2260 = vsel %vm494, %v2257, %v2259
        %2261 = vrot.lane.b32.xlu0 %v2258, 124
        %v2262 = vpop.permute.xlu0 %2261
        %2263 = vrot.lane.b32.xlu0 %v2260, 124
        %v2264 = vpop.permute.xlu0 %2263
        %v2267 = vadd.f32 %v2245, %v2262
        %v2268 = vadd.f32 %v2246, %v2264
        %v2269 = vstv %s2248
        %v2270 = vmul.f32 %v2269, %v1029
        %v2271 = vmul.f32 %v2269, %v1030
        %v2272 = vmul.f32 %v2269, %v1031
        %v2276 = vrot.slane %v2270, 4
        %v2277 = vrot.slane %v2271, 4
        %v2278 = vsel %vm494, %v2276, %v2277
        %v2279 = vrot.slane %v2272, 4
        %v2280 = vsel %vm494, %v2277, %v2279
        %2281 = vrot.lane.b32.xlu0 %v2278, 124
        %v2282 = vpop.permute.xlu0 %2281
        %2283 = vrot.lane.b32.xlu0 %v2280, 124
        %v2284 = vpop.permute.xlu0 %2283
        %v2287 = vadd.f32 %v2267, %v2282
        %v2288 = vadd.f32 %v2268, %v2284
        %s2289 = sld [smem:[#allocation7 + $0x27]]
        %s2290 = sld [smem:[#allocation7 + $0x58]]
        %v2291 = vstv %s2289
        %v2292 = vmul.f32 %v2291, %v1026
        %v2293 = vmul.f32 %v2291, %v1027
        %v2294 = vmul.f32 %v2291, %v1028
        %v2298 = vrot.slane %v2292, 5
        %v2299 = vrot.slane %v2293, 5
        %v2300 = vsel %vm1192, %v2298, %v2299
        %v2301 = vrot.slane %v2294, 5
        %v2302 = vsel %vm1192, %v2299, %v2301
        %2303 = vrot.lane.b32.xlu0 %v2300, 124
        %v2304 = vpop.permute.xlu0 %2303
        %2305 = vrot.lane.b32.xlu0 %v2302, 124
        %v2306 = vpop.permute.xlu0 %2305
        %v2309 = vadd.f32 %v2287, %v2304
        %v2310 = vadd.f32 %v2288, %v2306
        %v2311 = vstv %s2290
        %v2312 = vmul.f32 %v2311, %v1029
        %v2313 = vmul.f32 %v2311, %v1030
        %v2314 = vmul.f32 %v2311, %v1031
        %v2318 = vrot.slane %v2312, 5
        %v2319 = vrot.slane %v2313, 5
        %v2320 = vsel %vm1192, %v2318, %v2319
        %v2321 = vrot.slane %v2314, 5
        %v2322 = vsel %vm1192, %v2319, %v2321
        %2323 = vrot.lane.b32.xlu0 %v2320, 124
        %v2324 = vpop.permute.xlu0 %2323
        %2325 = vrot.lane.b32.xlu0 %v2322, 124
        %v2326 = vpop.permute.xlu0 %2325
        %v2329 = vadd.f32 %v2309, %v2324
        %v2330 = vadd.f32 %v2310, %v2326
        %s2331 = sld [smem:[#allocation7 + $0x2e]]
        %s2332 = sld [smem:[#allocation7 + $0x5f]]
        %v2333 = vstv %s2331
        %v2334 = vmul.f32 %v2333, %v1026
        %v2335 = vmul.f32 %v2333, %v1027
        %v2336 = vmul.f32 %v2333, %v1028
        %v2340 = vrot.slane %v2334, 6
        %v2341 = vrot.slane %v2335, 6
        %v2342 = vsel %vm1227, %v2340, %v2341
        %v2343 = vrot.slane %v2336, 6
        %v2344 = vsel %vm1227, %v2341, %v2343
        %2345 = vrot.lane.b32.xlu0 %v2342, 124
        %v2346 = vpop.permute.xlu0 %2345
        %2347 = vrot.lane.b32.xlu0 %v2344, 124
        %v2348 = vpop.permute.xlu0 %2347
        %v2351 = vadd.f32 %v2329, %v2346
        %v2352 = vadd.f32 %v2330, %v2348
        %v2353 = vstv %s2332
        %v2354 = vmul.f32 %v2353, %v1029
        %v2355 = vmul.f32 %v2353, %v1030
        %v2356 = vmul.f32 %v2353, %v1031
        %v2360 = vrot.slane %v2354, 6
        %v2361 = vrot.slane %v2355, 6
        %v2362 = vsel %vm1227, %v2360, %v2361
        %v2363 = vrot.slane %v2356, 6
        %v2364 = vsel %vm1227, %v2361, %v2363
        %2365 = vrot.lane.b32.xlu0 %v2362, 124
        %v2366 = vpop.permute.xlu0 %2365
        %2367 = vrot.lane.b32.xlu0 %v2364, 124
        %v2368 = vpop.permute.xlu0 %2367
        %v2371 = vadd.f32 %v2351, %v2366
        %v2372 = vadd.f32 %v2352, %v2368
        %s2373 = sld [smem:[#allocation7 + $0x5]]
        %s2374 = sld [smem:[#allocation7 + $0x36]]
        %v2375 = vstv %s2373
        %v2376 = vmul.f32 %v2375, %v1026
        %v2377 = vmul.f32 %v2375, %v1027
        %2380 = vrot.lane.b32.xlu0 %v2376, 123
        %v2381 = vpop.permute.xlu0 %2380
        %2382 = vrot.lane.b32.xlu0 %v2377, 123
        %v2383 = vpop.permute.xlu0 %2382
        %v2386 = vadd.f32 %v2371, %v2381
        %v2387 = vadd.f32 %v2372, %v2383
        %v2388 = vstv %s2374
        %v2389 = vmul.f32 %v2388, %v1029
        %v2390 = vmul.f32 %v2388, %v1030
        %2393 = vrot.lane.b32.xlu0 %v2389, 123
        %v2394 = vpop.permute.xlu0 %2393
        %2395 = vrot.lane.b32.xlu0 %v2390, 123
        %v2396 = vpop.permute.xlu0 %2395
        %v2399 = vadd.f32 %v2386, %v2394
        %v2400 = vadd.f32 %v2387, %v2396
        %s2401 = sld [smem:[#allocation7 + $0xc]]
        %s2402 = sld [smem:[#allocation7 + $0x3d]]
        %v2403 = vstv %s2401
        %v2404 = vmul.f32 %v2403, %v1026
        %v2405 = vmul.f32 %v2403, %v1027
        %v2406 = vmul.f32 %v2403, %v1028
        %v2410 = vrot.slane %v2404, 1
        %v2411 = vrot.slane %v2405, 1
        %v2412 = vsel %vm1053, %v2410, %v2411
        %v2413 = vrot.slane %v2406, 1
        %v2414 = vsel %vm1053, %v2411, %v2413
        %2415 = vrot.lane.b32.xlu0 %v2412, 123
        %v2416 = vpop.permute.xlu0 %2415
        %2417 = vrot.lane.b32.xlu0 %v2414, 123
        %v2418 = vpop.permute.xlu0 %2417
        %v2421 = vadd.f32 %v2399, %v2416
        %v2422 = vadd.f32 %v2400, %v2418
        %v2423 = vstv %s2402
        %v2424 = vmul.f32 %v2423, %v1029
        %v2425 = vmul.f32 %v2423, %v1030
        %v2426 = vmul.f32 %v2423, %v1031
        %v2430 = vrot.slane %v2424, 1
        %v2431 = vrot.slane %v2425, 1
        %v2432 = vsel %vm1053, %v2430, %v2431
        %v2433 = vrot.slane %v2426, 1
        %v2434 = vsel %vm1053, %v2431, %v2433
        %2435 = vrot.lane.b32.xlu0 %v2432, 123
        %v2436 = vpop.permute.xlu0 %2435
        %2437 = vrot.lane.b32.xlu0 %v2434, 123
        %v2438 = vpop.permute.xlu0 %2437
        %v2441 = vadd.f32 %v2421, %v2436
        %v2442 = vadd.f32 %v2422, %v2438
        %s2443 = sld [smem:[#allocation7 + $0x13]]
        %s2444 = sld [smem:[#allocation7 + $0x44]]
        %v2445 = vstv %s2443
        %v2446 = vmul.f32 %v2445, %v1026
        %v2447 = vmul.f32 %v2445, %v1027
        %v2448 = vmul.f32 %v2445, %v1028
        %v2452 = vrot.slane %v2446, 2
        %v2453 = vrot.slane %v2447, 2
        %v2454 = vsel %vm1088, %v2452, %v2453
        %v2455 = vrot.slane %v2448, 2
        %v2456 = vsel %vm1088, %v2453, %v2455
        %2457 = vrot.lane.b32.xlu0 %v2454, 123
        %v2458 = vpop.permute.xlu0 %2457
        %2459 = vrot.lane.b32.xlu0 %v2456, 123
        %v2460 = vpop.permute.xlu0 %2459
        %v2463 = vadd.f32 %v2441, %v2458
        %v2464 = vadd.f32 %v2442, %v2460
        %v2465 = vstv %s2444
        %v2466 = vmul.f32 %v2465, %v1029
        %v2467 = vmul.f32 %v2465, %v1030
        %v2468 = vmul.f32 %v2465, %v1031
        %v2472 = vrot.slane %v2466, 2
        %v2473 = vrot.slane %v2467, 2
        %v2474 = vsel %vm1088, %v2472, %v2473
        %v2475 = vrot.slane %v2468, 2
        %v2476 = vsel %vm1088, %v2473, %v2475
        %2477 = vrot.lane.b32.xlu0 %v2474, 123
        %v2478 = vpop.permute.xlu0 %2477
        %2479 = vrot.lane.b32.xlu0 %v2476, 123
        %v2480 = vpop.permute.xlu0 %2479
        %v2483 = vadd.f32 %v2463, %v2478
        %v2484 = vadd.f32 %v2464, %v2480
        %s2485 = sld [smem:[#allocation7 + $0x1a]]
        %s2486 = sld [smem:[#allocation7 + $0x4b]]
        %v2487 = vstv %s2485
        %v2488 = vmul.f32 %v2487, %v1026
        %v2489 = vmul.f32 %v2487, %v1027
        %v2490 = vmul.f32 %v2487, %v1028
        %v2494 = vrot.slane %v2488, 3
        %v2495 = vrot.slane %v2489, 3
        %v2496 = vsel %vm1123, %v2494, %v2495
        %v2497 = vrot.slane %v2490, 3
        %v2498 = vsel %vm1123, %v2495, %v2497
        %2499 = vrot.lane.b32.xlu0 %v2496, 123
        %v2500 = vpop.permute.xlu0 %2499
        %2501 = vrot.lane.b32.xlu0 %v2498, 123
        %v2502 = vpop.permute.xlu0 %2501
        %v2505 = vadd.f32 %v2483, %v2500
        %v2506 = vadd.f32 %v2484, %v2502
        %v2507 = vstv %s2486
        %v2508 = vmul.f32 %v2507, %v1029
        %v2509 = vmul.f32 %v2507, %v1030
        %v2510 = vmul.f32 %v2507, %v1031
        %v2514 = vrot.slane %v2508, 3
        %v2515 = vrot.slane %v2509, 3
        %v2516 = vsel %vm1123, %v2514, %v2515
        %v2517 = vrot.slane %v2510, 3
        %v2518 = vsel %vm1123, %v2515, %v2517
        %2519 = vrot.lane.b32.xlu0 %v2516, 123
        %v2520 = vpop.permute.xlu0 %2519
        %2521 = vrot.lane.b32.xlu0 %v2518, 123
        %v2522 = vpop.permute.xlu0 %2521
        %v2525 = vadd.f32 %v2505, %v2520
        %v2526 = vadd.f32 %v2506, %v2522
        %s2527 = sld [smem:[#allocation7 + $0x21]]
        %s2528 = sld [smem:[#allocation7 + $0x52]]
        %v2529 = vstv %s2527
        %v2530 = vmul.f32 %v2529, %v1026
        %v2531 = vmul.f32 %v2529, %v1027
        %v2532 = vmul.f32 %v2529, %v1028
        %v2536 = vrot.slane %v2530, 4
        %v2537 = vrot.slane %v2531, 4
        %v2538 = vsel %vm494, %v2536, %v2537
        %v2539 = vrot.slane %v2532, 4
        %v2540 = vsel %vm494, %v2537, %v2539
        %2541 = vrot.lane.b32.xlu0 %v2538, 123
        %v2542 = vpop.permute.xlu0 %2541
        %2543 = vrot.lane.b32.xlu0 %v2540, 123
        %v2544 = vpop.permute.xlu0 %2543
        %v2547 = vadd.f32 %v2525, %v2542
        %v2548 = vadd.f32 %v2526, %v2544
        %v2549 = vstv %s2528
        %v2550 = vmul.f32 %v2549, %v1029
        %v2551 = vmul.f32 %v2549, %v1030
        %v2552 = vmul.f32 %v2549, %v1031
        %v2556 = vrot.slane %v2550, 4
        %v2557 = vrot.slane %v2551, 4
        %v2558 = vsel %vm494, %v2556, %v2557
        %v2559 = vrot.slane %v2552, 4
        %v2560 = vsel %vm494, %v2557, %v2559
        %2561 = vrot.lane.b32.xlu0 %v2558, 123
        %v2562 = vpop.permute.xlu0 %2561
        %2563 = vrot.lane.b32.xlu0 %v2560, 123
        %v2564 = vpop.permute.xlu0 %2563
        %v2567 = vadd.f32 %v2547, %v2562
        %v2568 = vadd.f32 %v2548, %v2564
        %s2569 = sld [smem:[#allocation7 + $0x28]]
        %s2570 = sld [smem:[#allocation7 + $0x59]]
        %v2571 = vstv %s2569
        %v2572 = vmul.f32 %v2571, %v1026
        %v2573 = vmul.f32 %v2571, %v1027
        %v2574 = vmul.f32 %v2571, %v1028
        %v2578 = vrot.slane %v2572, 5
        %v2579 = vrot.slane %v2573, 5
        %v2580 = vsel %vm1192, %v2578, %v2579
        %v2581 = vrot.slane %v2574, 5
        %v2582 = vsel %vm1192, %v2579, %v2581
        %2583 = vrot.lane.b32.xlu0 %v2580, 123
        %v2584 = vpop.permute.xlu0 %2583
        %2585 = vrot.lane.b32.xlu0 %v2582, 123
        %v2586 = vpop.permute.xlu0 %2585
        %v2589 = vadd.f32 %v2567, %v2584
        %v2590 = vadd.f32 %v2568, %v2586
        %v2591 = vstv %s2570
        %v2592 = vmul.f32 %v2591, %v1029
        %v2593 = vmul.f32 %v2591, %v1030
        %v2594 = vmul.f32 %v2591, %v1031
        %v2598 = vrot.slane %v2592, 5
        %v2599 = vrot.slane %v2593, 5
        %v2600 = vsel %vm1192, %v2598, %v2599
        %v2601 = vrot.slane %v2594, 5
        %v2602 = vsel %vm1192, %v2599, %v2601
        %2603 = vrot.lane.b32.xlu0 %v2600, 123
        %v2604 = vpop.permute.xlu0 %2603
        %2605 = vrot.lane.b32.xlu0 %v2602, 123
        %v2606 = vpop.permute.xlu0 %2605
        %v2609 = vadd.f32 %v2589, %v2604
        %v2610 = vadd.f32 %v2590, %v2606
        %s2611 = sld [smem:[#allocation7 + $0x2f]]
        %s2612 = sld [smem:[#allocation7 + $0x60]]
        %v2613 = vstv %s2611
        %v2614 = vmul.f32 %v2613, %v1026
        %v2615 = vmul.f32 %v2613, %v1027
        %v2616 = vmul.f32 %v2613, %v1028
        %v2620 = vrot.slane %v2614, 6
        %v2621 = vrot.slane %v2615, 6
        %v2622 = vsel %vm1227, %v2620, %v2621
        %v2623 = vrot.slane %v2616, 6
        %v2624 = vsel %vm1227, %v2621, %v2623
        %2625 = vrot.lane.b32.xlu0 %v2622, 123
        %v2626 = vpop.permute.xlu0 %2625
        %2627 = vrot.lane.b32.xlu0 %v2624, 123
        %v2628 = vpop.permute.xlu0 %2627
        %v2631 = vadd.f32 %v2609, %v2626
        %v2632 = vadd.f32 %v2610, %v2628
        %v2633 = vstv %s2612
        %v2634 = vmul.f32 %v2633, %v1029
        %v2635 = vmul.f32 %v2633, %v1030
        %v2636 = vmul.f32 %v2633, %v1031
        %v2640 = vrot.slane %v2634, 6
        %v2641 = vrot.slane %v2635, 6
        %v2642 = vsel %vm1227, %v2640, %v2641
        %v2643 = vrot.slane %v2636, 6
        %v2644 = vsel %vm1227, %v2641, %v2643
        %2645 = vrot.lane.b32.xlu0 %v2642, 123
        %v2646 = vpop.permute.xlu0 %2645
        %2647 = vrot.lane.b32.xlu0 %v2644, 123
        %v2648 = vpop.permute.xlu0 %2647
        %v2651 = vadd.f32 %v2631, %v2646
        %v2652 = vadd.f32 %v2632, %v2648
        %s2653 = sld [smem:[#allocation7 + $0x6]]
        %s2654 = sld [smem:[#allocation7 + $0x37]]
        %v2655 = vstv %s2653
        %v2656 = vmul.f32 %v2655, %v1026
        %v2657 = vmul.f32 %v2655, %v1027
        %2660 = vrot.lane.b32.xlu0 %v2656, 122
        %v2661 = vpop.permute.xlu0 %2660
        %2662 = vrot.lane.b32.xlu0 %v2657, 122
        %v2663 = vpop.permute.xlu0 %2662
        %v2666 = vadd.f32 %v2651, %v2661
        %v2667 = vadd.f32 %v2652, %v2663
        %v2668 = vstv %s2654
        %v2669 = vmul.f32 %v2668, %v1029
        %v2670 = vmul.f32 %v2668, %v1030
        %2673 = vrot.lane.b32.xlu0 %v2669, 122
        %v2674 = vpop.permute.xlu0 %2673
        %2675 = vrot.lane.b32.xlu0 %v2670, 122
        %v2676 = vpop.permute.xlu0 %2675
        %v2679 = vadd.f32 %v2666, %v2674
        %v2680 = vadd.f32 %v2667, %v2676
        %s2681 = sld [smem:[#allocation7 + $0xd]]
        %s2682 = sld [smem:[#allocation7 + $0x3e]]
        %v2683 = vstv %s2681
        %v2684 = vmul.f32 %v2683, %v1026
        %v2685 = vmul.f32 %v2683, %v1027
        %v2686 = vmul.f32 %v2683, %v1028
        %v2690 = vrot.slane %v2684, 1
        %v2691 = vrot.slane %v2685, 1
        %v2692 = vsel %vm1053, %v2690, %v2691
        %v2693 = vrot.slane %v2686, 1
        %v2694 = vsel %vm1053, %v2691, %v2693
        %2695 = vrot.lane.b32.xlu0 %v2692, 122
        %v2696 = vpop.permute.xlu0 %2695
        %2697 = vrot.lane.b32.xlu0 %v2694, 122
        %v2698 = vpop.permute.xlu0 %2697
        %v2701 = vadd.f32 %v2679, %v2696
        %v2702 = vadd.f32 %v2680, %v2698
        %v2703 = vstv %s2682
        %v2704 = vmul.f32 %v2703, %v1029
        %v2705 = vmul.f32 %v2703, %v1030
        %v2706 = vmul.f32 %v2703, %v1031
        %v2710 = vrot.slane %v2704, 1
        %v2711 = vrot.slane %v2705, 1
        %v2712 = vsel %vm1053, %v2710, %v2711
        %v2713 = vrot.slane %v2706, 1
        %v2714 = vsel %vm1053, %v2711, %v2713
        %2715 = vrot.lane.b32.xlu0 %v2712, 122
        %v2716 = vpop.permute.xlu0 %2715
        %2717 = vrot.lane.b32.xlu0 %v2714, 122
        %v2718 = vpop.permute.xlu0 %2717
        %v2721 = vadd.f32 %v2701, %v2716
        %v2722 = vadd.f32 %v2702, %v2718
        %s2723 = sld [smem:[#allocation7 + $0x14]]
        %s2724 = sld [smem:[#allocation7 + $0x45]]
        %v2725 = vstv %s2723
        %v2726 = vmul.f32 %v2725, %v1026
        %v2727 = vmul.f32 %v2725, %v1027
        %v2728 = vmul.f32 %v2725, %v1028
        %v2732 = vrot.slane %v2726, 2
        %v2733 = vrot.slane %v2727, 2
        %v2734 = vsel %vm1088, %v2732, %v2733
        %v2735 = vrot.slane %v2728, 2
        %v2736 = vsel %vm1088, %v2733, %v2735
        %2737 = vrot.lane.b32.xlu0 %v2734, 122
        %v2738 = vpop.permute.xlu0 %2737
        %2739 = vrot.lane.b32.xlu0 %v2736, 122
        %v2740 = vpop.permute.xlu0 %2739
        %v2743 = vadd.f32 %v2721, %v2738
        %v2744 = vadd.f32 %v2722, %v2740
        %v2745 = vstv %s2724
        %v2746 = vmul.f32 %v2745, %v1029
        %v2747 = vmul.f32 %v2745, %v1030
        %v2748 = vmul.f32 %v2745, %v1031
        %v2752 = vrot.slane %v2746, 2
        %v2753 = vrot.slane %v2747, 2
        %v2754 = vsel %vm1088, %v2752, %v2753
        %v2755 = vrot.slane %v2748, 2
        %v2756 = vsel %vm1088, %v2753, %v2755
        %2757 = vrot.lane.b32.xlu0 %v2754, 122
        %v2758 = vpop.permute.xlu0 %2757
        %2759 = vrot.lane.b32.xlu0 %v2756, 122
        %v2760 = vpop.permute.xlu0 %2759
        %v2763 = vadd.f32 %v2743, %v2758
        %v2764 = vadd.f32 %v2744, %v2760
        %s2765 = sld [smem:[#allocation7 + $0x1b]]
        %s2766 = sld [smem:[#allocation7 + $0x4c]]
        %v2767 = vstv %s2765
        %v2768 = vmul.f32 %v2767, %v1026
        %v2769 = vmul.f32 %v2767, %v1027
        %v2770 = vmul.f32 %v2767, %v1028
        %v2774 = vrot.slane %v2768, 3
        %v2775 = vrot.slane %v2769, 3
        %v2776 = vsel %vm1123, %v2774, %v2775
        %v2777 = vrot.slane %v2770, 3
        %v2778 = vsel %vm1123, %v2775, %v2777
        %2779 = vrot.lane.b32.xlu0 %v2776, 122
        %v2780 = vpop.permute.xlu0 %2779
        %2781 = vrot.lane.b32.xlu0 %v2778, 122
        %v2782 = vpop.permute.xlu0 %2781
        %v2785 = vadd.f32 %v2763, %v2780
        %v2786 = vadd.f32 %v2764, %v2782
        %v2787 = vstv %s2766
        %v2788 = vmul.f32 %v2787, %v1029
        %v2789 = vmul.f32 %v2787, %v1030
        %v2790 = vmul.f32 %v2787, %v1031
        %v2794 = vrot.slane %v2788, 3
        %v2795 = vrot.slane %v2789, 3
        %v2796 = vsel %vm1123, %v2794, %v2795
        %v2797 = vrot.slane %v2790, 3
        %v2798 = vsel %vm1123, %v2795, %v2797
        %2799 = vrot.lane.b32.xlu0 %v2796, 122
        %v2800 = vpop.permute.xlu0 %2799
        %2801 = vrot.lane.b32.xlu0 %v2798, 122
        %v2802 = vpop.permute.xlu0 %2801
        %v2805 = vadd.f32 %v2785, %v2800
        %v2806 = vadd.f32 %v2786, %v2802
        %s2807 = sld [smem:[#allocation7 + $0x22]]
        %s2808 = sld [smem:[#allocation7 + $0x53]]
        %v2809 = vstv %s2807
        %v2810 = vmul.f32 %v2809, %v1026
        %v2811 = vmul.f32 %v2809, %v1027
        %v2812 = vmul.f32 %v2809, %v1028
        %v2816 = vrot.slane %v2810, 4
        %v2817 = vrot.slane %v2811, 4
        %v2818 = vsel %vm494, %v2816, %v2817
        %v2819 = vrot.slane %v2812, 4
        %v2820 = vsel %vm494, %v2817, %v2819
        %2821 = vrot.lane.b32.xlu0 %v2818, 122
        %v2822 = vpop.permute.xlu0 %2821
        %2823 = vrot.lane.b32.xlu0 %v2820, 122
        %v2824 = vpop.permute.xlu0 %2823
        %v2827 = vadd.f32 %v2805, %v2822
        %v2828 = vadd.f32 %v2806, %v2824
        %v2829 = vstv %s2808
        %v2830 = vmul.f32 %v2829, %v1029
        %v2831 = vmul.f32 %v2829, %v1030
        %v2832 = vmul.f32 %v2829, %v1031
        %v2836 = vrot.slane %v2830, 4
        %v2837 = vrot.slane %v2831, 4
        %v2838 = vsel %vm494, %v2836, %v2837
        %v2839 = vrot.slane %v2832, 4
        %v2840 = vsel %vm494, %v2837, %v2839
        %2841 = vrot.lane.b32.xlu0 %v2838, 122
        %v2842 = vpop.permute.xlu0 %2841
        %2843 = vrot.lane.b32.xlu0 %v2840, 122
        %v2844 = vpop.permute.xlu0 %2843
        %v2847 = vadd.f32 %v2827, %v2842
        %v2848 = vadd.f32 %v2828, %v2844
        %s2849 = sld [smem:[#allocation7 + $0x29]]
        %s2850 = sld [smem:[#allocation7 + $0x5a]]
        %v2851 = vstv %s2849
        %v2852 = vmul.f32 %v2851, %v1026
        %v2853 = vmul.f32 %v2851, %v1027
        %v2854 = vmul.f32 %v2851, %v1028
        %v2858 = vrot.slane %v2852, 5
        %v2859 = vrot.slane %v2853, 5
        %v2860 = vsel %vm1192, %v2858, %v2859
        %v2861 = vrot.slane %v2854, 5
        %v2862 = vsel %vm1192, %v2859, %v2861
        %2863 = vrot.lane.b32.xlu0 %v2860, 122
        %v2864 = vpop.permute.xlu0 %2863
        %2865 = vrot.lane.b32.xlu0 %v2862, 122
        %v2866 = vpop.permute.xlu0 %2865
        %v2869 = vadd.f32 %v2847, %v2864
        %v2870 = vadd.f32 %v2848, %v2866
        %v2871 = vstv %s2850
        %v2872 = vmul.f32 %v2871, %v1029
        %v2873 = vmul.f32 %v2871, %v1030
        %v2874 = vmul.f32 %v2871, %v1031
        %v2878 = vrot.slane %v2872, 5
        %v2879 = vrot.slane %v2873, 5
        %v2880 = vsel %vm1192, %v2878, %v2879
        %v2881 = vrot.slane %v2874, 5
        %v2882 = vsel %vm1192, %v2879, %v2881
        %2883 = vrot.lane.b32.xlu0 %v2880, 122
        %v2884 = vpop.permute.xlu0 %2883
        %2885 = vrot.lane.b32.xlu0 %v2882, 122
        %v2886 = vpop.permute.xlu0 %2885
        %v2889 = vadd.f32 %v2869, %v2884
        %v2890 = vadd.f32 %v2870, %v2886
        %s2891 = sld [smem:[#allocation7 + $0x30]]
        %s2892 = sld [smem:[#allocation7 + $0x61]]
        %v2893 = vstv %s2891
        %v2894 = vmul.f32 %v2893, %v1026
        %v2895 = vmul.f32 %v2893, %v1027
        %v2896 = vmul.f32 %v2893, %v1028
        %v2900 = vrot.slane %v2894, 6
        %v2901 = vrot.slane %v2895, 6
        %v2902 = vsel %vm1227, %v2900, %v2901
        %v2903 = vrot.slane %v2896, 6
        %v2904 = vsel %vm1227, %v2901, %v2903
        %2905 = vrot.lane.b32.xlu0 %v2902, 122
        %v2906 = vpop.permute.xlu0 %2905
        %2907 = vrot.lane.b32.xlu0 %v2904, 122
        %v2908 = vpop.permute.xlu0 %2907
        %v2911 = vadd.f32 %v2889, %v2906
        %v2912 = vadd.f32 %v2890, %v2908
        %v2913 = vstv %s2892
        %v2914 = vmul.f32 %v2913, %v1029
        %v2915 = vmul.f32 %v2913, %v1030
        %v2916 = vmul.f32 %v2913, %v1031
        %v2920 = vrot.slane %v2914, 6
        %v2921 = vrot.slane %v2915, 6
        %v2922 = vsel %vm1227, %v2920, %v2921
        %v2923 = vrot.slane %v2916, 6
        %v2924 = vsel %vm1227, %v2921, %v2923
        %2925 = vrot.lane.b32.xlu0 %v2922, 122
        %v2926 = vpop.permute.xlu0 %2925
        %2927 = vrot.lane.b32.xlu0 %v2924, 122
        %v2928 = vpop.permute.xlu0 %2927
        %v2931 = vadd.f32 %v2911, %v2926
        %v2932 = vadd.f32 %v2912, %v2928
        %s2933 = sld [smem:[#allocation8]]
        %v2934 = vstv %s2933
        %v2935 = vadd.f32 %v2931, %v2934
        %v2936 = vadd.f32 %v2932, %v2934
        %v2937 = vxor.u32 %v2935, 2147483648
        %v2938 = vxor.u32 %v2936, 2147483648
        %v2939 = vmul.f32 %v2937, 1.442695
        %v2940 = vpow.pop %v2939
        %v2941 = vmul.f32 %v2938, 1.442695
        %v2942 = vpow.pop %v2941
        %v2943 = vadd.f32 %v2940, 1.0
        %v2944 = vadd.f32 %v2942, 1.0
        %v2945 = vrcp.pop %v2943
        %v2946 = vmul.f32 %v2943, %v2945
        %v2947 = vsub.f32 1.0, %v2946
        %v2948 = vmul.f32 %v2945, %v2947
        %v2949 = vadd.f32 %v2945, %v2948
        %vm2950 = vweird.f32 %v2943
        %vm2951 = vweird.f32 %v2945
        %vm2952 = vmor %vm2950, %vm2951
        %v2953 = vsel %vm2952, %v2945, %v2949
        %v2954 = vand.u32 2147483647, %v2943
        %vm2955 = vcmp.eq.f32.partialorder %v2954, 8.507059e+37
        %v2956 = vand.u32 %v2943, 2147483648
        %v2957 = vor.u32 1.1754944e-38, %v2956
        %v2958 = vsel %vm2955, %v2957, %v2953
        %v2959 = vmul.f32 1.0, %v2958
        %v2960 = vrcp.pop %v2944
        %v2961 = vmul.f32 %v2944, %v2960
        %v2962 = vsub.f32 1.0, %v2961
        %v2963 = vmul.f32 %v2960, %v2962
        %v2964 = vadd.f32 %v2960, %v2963
        %vm2965 = vweird.f32 %v2944
        %vm2966 = vweird.f32 %v2960
        %vm2967 = vmor %vm2965, %vm2966
        %v2968 = vsel %vm2967, %v2960, %v2964
        %v2969 = vand.u32 2147483647, %v2944
        %vm2970 = vcmp.eq.f32.partialorder %v2969, 8.507059e+37
        %v2971 = vand.u32 %v2944, 2147483648
        %v2972 = vor.u32 1.1754944e-38, %v2971
        %v2973 = vsel %vm2970, %v2972, %v2968
        %v2974 = vmul.f32 1.0, %v2973
        %s2975 = sld [smem:[#allocation8 + $0x1]]
        %v2976 = vstv %s2975
        %v2977 = vxor.u32 %v2976, 2147483648
        %v2978 = vmul.f32 %v2977, 1.442695
        %v2979 = vpow.pop %v2978
        %v2980 = vadd.f32 %v2979, 1.0
        %v2981 = vrcp.pop %v2980
        %v2982 = vmul.f32 %v2980, %v2981
        %v2983 = vsub.f32 1.0, %v2982
        %v2984 = vmul.f32 %v2981, %v2983
        %v2985 = vadd.f32 %v2981, %v2984
        %vm2986 = vweird.f32 %v2980
        %vm2987 = vweird.f32 %v2981
        %vm2988 = vmor %vm2986, %vm2987
        %v2989 = vsel %vm2988, %v2981, %v2985
        %v2990 = vand.u32 2147483647, %v2980
        %vm2991 = vcmp.eq.f32.partialorder %v2990, 8.507059e+37
        %v2992 = vand.u32 %v2980, 2147483648
        %v2993 = vor.u32 1.1754944e-38, %v2992
        %v2994 = vsel %vm2991, %v2993, %v2989
        %v2995 = vmul.f32 1.0, %v2994
        %v2996 = vsub.f32 1.0, %v2995
        %v2997 = vmul.f32 %v272, %v2996
        %v2998 = vmul.f32 %v273, %v2996
        %v2999 = vmul.f32 %v274, %v2996
        %v3000 = vmul.f32 %v275, %v2996
        %v3001 = vmul.f32 %v276, %v2996
        %v3002 = vmul.f32 %v277, %v2996
        %v3003 = vmul.f32 %v278, %v2996
        %v3004 = vmul.f32 %v279, %v2996
        %v3005 = vmul.f32 %v280, %v2996
        %v3006 = vmul.f32 %v281, %v2996
        %v3007 = vmul.f32 %v282, %v2996
        %v3008 = vmul.f32 %v283, %v2996
        %v3009 = vmul.f32 %v284, %v2996
        %v3010 = vmul.f32 %v285, %v2996
        %v3011 = vmul.f32 %v286, %v2996
        %v3012 = vmul.f32 %v287, %v2996
        %v3013 = vmul.f32 %v288, %v2996
        %v3014 = vmul.f32 %v289, %v2996
        %v3015 = vmul.f32 %v290, %v2996
        %v3016 = vmul.f32 %v291, %v2996
        %v3017 = vmul.f32 %v292, %v2996
        %v3018 = vmul.f32 %v293, %v2996
        %v3019 = vmul.f32 %v294, %v2996
        %v3020 = vmul.f32 %v295, %v2996
        %v3021 = vmul.f32 %v296, %v2996
        %v3022 = vmul.f32 %v297, %v2996
        %v3023 = vmul.f32 %v298, %v2996
        %v3024 = vmul.f32 %v299, %v2996
        %v3025 = vmul.f32 %v300, %v2996
        %v3026 = vmul.f32 %v301, %v2996
        %v3027 = vmul.f32 %v302, %v2996
        %v3028 = vmul.f32 %v303, %v2996
        %v3029 = vmul.f32 %v2995, %v2959
        %v3030 = vmul.f32 %v2995, %v2974
        %v3031 = vperm.slane %v3029, 0
        %v3032 = vlaneseq
        %v3033 = vshrl.u32 %v3032, 7
        %3035 = vset.pattern.permute.xlu0 %v3033
        %3036 = vperm.xlu0 %3035, %v3031
        %v3037 = vpop.permute.xlu0 %3036
        %v3038 = vlaneseq
        %v3039 = vshrl.u32 %v3038, 7
        %v3040 = vadd.s32 %v3039, 8
        %3041 = vset.pattern.permute.xlu0 %v3040
        %3042 = vperm.xlu0 %3041, %v3031
        %v3043 = vpop.permute.xlu0 %3042
        %v3044 = vperm.slane %v3029, 1
        %v3045 = vlaneseq
        %v3046 = vshrl.u32 %v3045, 7
        %3048 = vset.pattern.permute.xlu0 %v3046
        %3049 = vperm.xlu0 %3048, %v3044
        %v3050 = vpop.permute.xlu0 %3049
        %v3051 = vlaneseq
        %v3052 = vshrl.u32 %v3051, 7
        %v3053 = vadd.s32 %v3052, 8
        %3054 = vset.pattern.permute.xlu0 %v3053
        %3055 = vperm.xlu0 %3054, %v3044
        %v3056 = vpop.permute.xlu0 %3055
        %v3057 = vperm.slane %v3029, 2
        %v3058 = vlaneseq
        %v3059 = vshrl.u32 %v3058, 7
        %3061 = vset.pattern.permute.xlu0 %v3059
        %3062 = vperm.xlu0 %3061, %v3057
        %v3063 = vpop.permute.xlu0 %3062
        %v3064 = vlaneseq
        %v3065 = vshrl.u32 %v3064, 7
        %v3066 = vadd.s32 %v3065, 8
        %3067 = vset.pattern.permute.xlu0 %v3066
        %3068 = vperm.xlu0 %3067, %v3057
        %v3069 = vpop.permute.xlu0 %3068
        %v3070 = vperm.slane %v3029, 3
        %v3071 = vlaneseq
        %v3072 = vshrl.u32 %v3071, 7
        %3074 = vset.pattern.permute.xlu0 %v3072
        %3075 = vperm.xlu0 %3074, %v3070
        %v3076 = vpop.permute.xlu0 %3075
        %v3077 = vlaneseq
        %v3078 = vshrl.u32 %v3077, 7
        %v3079 = vadd.s32 %v3078, 8
        %3080 = vset.pattern.permute.xlu0 %v3079
        %3081 = vperm.xlu0 %3080, %v3070
        %v3082 = vpop.permute.xlu0 %3081
        %v3083 = vperm.slane %v3029, 4
        %v3084 = vlaneseq
        %v3085 = vshrl.u32 %v3084, 7
        %3087 = vset.pattern.permute.xlu0 %v3085
        %3088 = vperm.xlu0 %3087, %v3083
        %v3089 = vpop.permute.xlu0 %3088
        %v3090 = vlaneseq
        %v3091 = vshrl.u32 %v3090, 7
        %v3092 = vadd.s32 %v3091, 8
        %3093 = vset.pattern.permute.xlu0 %v3092
        %3094 = vperm.xlu0 %3093, %v3083
        %v3095 = vpop.permute.xlu0 %3094
        %v3096 = vperm.slane %v3029, 5
        %v3097 = vlaneseq
        %v3098 = vshrl.u32 %v3097, 7
        %3100 = vset.pattern.permute.xlu0 %v3098
        %3101 = vperm.xlu0 %3100, %v3096
        %v3102 = vpop.permute.xlu0 %3101
        %v3103 = vlaneseq
        %v3104 = vshrl.u32 %v3103, 7
        %v3105 = vadd.s32 %v3104, 8
        %3106 = vset.pattern.permute.xlu0 %v3105
        %3107 = vperm.xlu0 %3106, %v3096
        %v3108 = vpop.permute.xlu0 %3107
        %v3109 = vperm.slane %v3029, 6
        %v3110 = vlaneseq
        %v3111 = vshrl.u32 %v3110, 7
        %3113 = vset.pattern.permute.xlu0 %v3111
        %3114 = vperm.xlu0 %3113, %v3109
        %v3115 = vpop.permute.xlu0 %3114
        %v3116 = vlaneseq
        %v3117 = vshrl.u32 %v3116, 7
        %v3118 = vadd.s32 %v3117, 8
        %3119 = vset.pattern.permute.xlu0 %v3118
        %3120 = vperm.xlu0 %3119, %v3109
        %v3121 = vpop.permute.xlu0 %3120
        %v3122 = vperm.slane %v3029, 7
        %v3123 = vlaneseq
        %v3124 = vshrl.u32 %v3123, 7
        %3126 = vset.pattern.permute.xlu0 %v3124
        %3127 = vperm.xlu0 %3126, %v3122
        %v3128 = vpop.permute.xlu0 %3127
        %v3129 = vlaneseq
        %v3130 = vshrl.u32 %v3129, 7
        %v3131 = vadd.s32 %v3130, 8
        %3132 = vset.pattern.permute.xlu0 %v3131
        %3133 = vperm.xlu0 %3132, %v3122
        %v3134 = vpop.permute.xlu0 %3133
        %v3135 = vperm.slane %v3030, 0
        %v3136 = vlaneseq
        %v3137 = vshrl.u32 %v3136, 7
        %3139 = vset.pattern.permute.xlu0 %v3137
        %3140 = vperm.xlu0 %3139, %v3135
        %v3141 = vpop.permute.xlu0 %3140
        %v3142 = vlaneseq
        %v3143 = vshrl.u32 %v3142, 7
        %v3144 = vadd.s32 %v3143, 8
        %3145 = vset.pattern.permute.xlu0 %v3144
        %3146 = vperm.xlu0 %3145, %v3135
        %v3147 = vpop.permute.xlu0 %3146
        %v3148 = vperm.slane %v3030, 1
        %v3149 = vlaneseq
        %v3150 = vshrl.u32 %v3149, 7
        %3152 = vset.pattern.permute.xlu0 %v3150
        %3153 = vperm.xlu0 %3152, %v3148
        %v3154 = vpop.permute.xlu0 %3153
        %v3155 = vlaneseq
        %v3156 = vshrl.u32 %v3155, 7
        %v3157 = vadd.s32 %v3156, 8
        %3158 = vset.pattern.permute.xlu0 %v3157
        %3159 = vperm.xlu0 %3158, %v3148
        %v3160 = vpop.permute.xlu0 %3159
        %v3161 = vperm.slane %v3030, 2
        %v3162 = vlaneseq
        %v3163 = vshrl.u32 %v3162, 7
        %3165 = vset.pattern.permute.xlu0 %v3163
        %3166 = vperm.xlu0 %3165, %v3161
        %v3167 = vpop.permute.xlu0 %3166
        %v3168 = vlaneseq
        %v3169 = vshrl.u32 %v3168, 7
        %v3170 = vadd.s32 %v3169, 8
        %3171 = vset.pattern.permute.xlu0 %v3170
        %3172 = vperm.xlu0 %3171, %v3161
        %v3173 = vpop.permute.xlu0 %3172
        %v3174 = vperm.slane %v3030, 3
        %v3175 = vlaneseq
        %v3176 = vshrl.u32 %v3175, 7
        %3178 = vset.pattern.permute.xlu0 %v3176
        %3179 = vperm.xlu0 %3178, %v3174
        %v3180 = vpop.permute.xlu0 %3179
        %v3181 = vlaneseq
        %v3182 = vshrl.u32 %v3181, 7
        %v3183 = vadd.s32 %v3182, 8
        %3184 = vset.pattern.permute.xlu0 %v3183
        %3185 = vperm.xlu0 %3184, %v3174
        %v3186 = vpop.permute.xlu0 %3185
        %v3187 = vperm.slane %v3030, 4
        %v3188 = vlaneseq
        %v3189 = vshrl.u32 %v3188, 7
        %3191 = vset.pattern.permute.xlu0 %v3189
        %3192 = vperm.xlu0 %3191, %v3187
        %v3193 = vpop.permute.xlu0 %3192
        %v3194 = vlaneseq
        %v3195 = vshrl.u32 %v3194, 7
        %v3196 = vadd.s32 %v3195, 8
        %3197 = vset.pattern.permute.xlu0 %v3196
        %3198 = vperm.xlu0 %3197, %v3187
        %v3199 = vpop.permute.xlu0 %3198
        %v3200 = vperm.slane %v3030, 5
        %v3201 = vlaneseq
        %v3202 = vshrl.u32 %v3201, 7
        %3204 = vset.pattern.permute.xlu0 %v3202
        %3205 = vperm.xlu0 %3204, %v3200
        %v3206 = vpop.permute.xlu0 %3205
        %v3207 = vlaneseq
        %v3208 = vshrl.u32 %v3207, 7
        %v3209 = vadd.s32 %v3208, 8
        %3210 = vset.pattern.permute.xlu0 %v3209
        %3211 = vperm.xlu0 %3210, %v3200
        %v3212 = vpop.permute.xlu0 %3211
        %v3213 = vperm.slane %v3030, 6
        %v3214 = vlaneseq
        %v3215 = vshrl.u32 %v3214, 7
        %3217 = vset.pattern.permute.xlu0 %v3215
        %3218 = vperm.xlu0 %3217, %v3213
        %v3219 = vpop.permute.xlu0 %3218
        %v3220 = vlaneseq
        %v3221 = vshrl.u32 %v3220, 7
        %v3222 = vadd.s32 %v3221, 8
        %3223 = vset.pattern.permute.xlu0 %v3222
        %3224 = vperm.xlu0 %3223, %v3213
        %v3225 = vpop.permute.xlu0 %3224
        %v3226 = vperm.slane %v3030, 7
        %v3227 = vlaneseq
        %v3228 = vshrl.u32 %v3227, 7
        %3230 = vset.pattern.permute.xlu0 %v3228
        %3231 = vperm.xlu0 %3230, %v3226
        %v3232 = vpop.permute.xlu0 %3231
        %v3233 = vlaneseq
        %v3234 = vshrl.u32 %v3233, 7
        %v3235 = vadd.s32 %v3234, 8
        %3236 = vset.pattern.permute.xlu0 %v3235
        %3237 = vperm.xlu0 %3236, %v3226
        %v3238 = vpop.permute.xlu0 %3237
        %v3239 = vmul.f32 %v545, %v3037
        %v3240 = vmul.f32 %v546, %v3043
        %v3241 = vmul.f32 %v547, %v3050
        %v3242 = vmul.f32 %v548, %v3056
        %v3243 = vmul.f32 %v549, %v3063
        %v3244 = vmul.f32 %v550, %v3069
        %v3245 = vmul.f32 %v551, %v3076
        %v3246 = vmul.f32 %v552, %v3082
        %v3247 = vmul.f32 %v553, %v3089
        %v3248 = vmul.f32 %v554, %v3095
        %v3249 = vmul.f32 %v555, %v3102
        %v3250 = vmul.f32 %v556, %v3108
        %v3251 = vmul.f32 %v557, %v3115
        %v3252 = vmul.f32 %v558, %v3121
        %v3253 = vmul.f32 %v559, %v3128
        %v3254 = vmul.f32 %v560, %v3134
        %v3255 = vmul.f32 %v561, %v3141
        %v3256 = vmul.f32 %v562, %v3147
        %v3257 = vmul.f32 %v563, %v3154
        %v3258 = vmul.f32 %v564, %v3160
        %v3259 = vmul.f32 %v565, %v3167
        %v3260 = vmul.f32 %v566, %v3173
        %v3261 = vmul.f32 %v567, %v3180
        %v3262 = vmul.f32 %v568, %v3186
        %v3263 = vmul.f32 %v569, %v3193
        %v3264 = vmul.f32 %v570, %v3199
        %v3265 = vmul.f32 %v571, %v3206
        %v3266 = vmul.f32 %v572, %v3212
        %v3267 = vmul.f32 %v573, %v3219
        %v3268 = vmul.f32 %v574, %v3225
        %v3269 = vmul.f32 %v575, %v3232
        %v3270 = vmul.f32 %v576, %v3238
        %v3271 = vadd.f32 %v2997, %v3239
        %v3272 = vadd.f32 %v2998, %v3240
        %v3273 = vadd.f32 %v2999, %v3241
        %v3274 = vadd.f32 %v3000, %v3242
        %v3275 = vadd.f32 %v3001, %v3243
        %v3276 = vadd.f32 %v3002, %v3244
        %v3277 = vadd.f32 %v3003, %v3245
        %v3278 = vadd.f32 %v3004, %v3246
        %v3279 = vadd.f32 %v3005, %v3247
        %v3280 = vadd.f32 %v3006, %v3248
        %v3281 = vadd.f32 %v3007, %v3249
        %v3282 = vadd.f32 %v3008, %v3250
        %v3283 = vadd.f32 %v3009, %v3251
        %v3284 = vadd.f32 %v3010, %v3252
        %v3285 = vadd.f32 %v3011, %v3253
        %v3286 = vadd.f32 %v3012, %v3254
        %v3287 = vadd.f32 %v3013, %v3255
        %v3288 = vadd.f32 %v3014, %v3256
        %v3289 = vadd.f32 %v3015, %v3257
        %v3290 = vadd.f32 %v3016, %v3258
        %v3291 = vadd.f32 %v3017, %v3259
        %v3292 = vadd.f32 %v3018, %v3260
        %v3293 = vadd.f32 %v3019, %v3261
        %v3294 = vadd.f32 %v3020, %v3262
        %v3295 = vadd.f32 %v3021, %v3263
        %v3296 = vadd.f32 %v3022, %v3264
        %v3297 = vadd.f32 %v3023, %v3265
        %v3298 = vadd.f32 %v3024, %v3266
        %v3299 = vadd.f32 %v3025, %v3267
        %v3300 = vadd.f32 %v3026, %v3268
        %v3301 = vadd.f32 %v3027, %v3269
        %v3302 = vadd.f32 %v3028, %v3270
        %3303 = vst.msk [vmem:[%s271] sm:$0xff] %vm304, %v3271
        %3304 = vst.msk [vmem:[%s271 + $0x8] sm:$0xff] %vm304, %v3272
        %3305 = vst.msk [vmem:[%s271 + $0x10] sm:$0xff] %vm304, %v3273
        %3306 = vst.msk [vmem:[%s271 + $0x18] sm:$0xff] %vm304, %v3274
        %3307 = vst.msk [vmem:[%s271 + $0x20] sm:$0xff] %vm304, %v3275
        %3308 = vst.msk [vmem:[%s271 + $0x28] sm:$0xff] %vm304, %v3276
        %3309 = vst.msk [vmem:[%s271 + $0x30] sm:$0xff] %vm304, %v3277
        %3310 = vst.msk [vmem:[%s271 + $0x38] sm:$0xff] %vm304, %v3278
        %3311 = vst.msk [vmem:[%s271 + $0x40] sm:$0xff] %vm304, %v3279
        %3312 = vst.msk [vmem:[%s271 + $0x48] sm:$0xff] %vm304, %v3280
        %3313 = vst.msk [vmem:[%s271 + $0x50] sm:$0xff] %vm304, %v3281
        %3314 = vst.msk [vmem:[%s271 + $0x58] sm:$0xff] %vm304, %v3282
        %3315 = vst.msk [vmem:[%s271 + $0x60] sm:$0xff] %vm304, %v3283
        %3316 = vst.msk [vmem:[%s271 + $0x68] sm:$0xff] %vm304, %v3284
        %3317 = vst.msk [vmem:[%s271 + $0x70] sm:$0xff] %vm304, %v3285
        %3318 = vst.msk [vmem:[%s271 + $0x78] sm:$0xff] %vm304, %v3286
        %3319 = vst.msk [vmem:[%s271 + $0x80] sm:$0xff] %vm304, %v3287
        %3320 = vst.msk [vmem:[%s271 + $0x88] sm:$0xff] %vm304, %v3288
        %3321 = vst.msk [vmem:[%s271 + $0x90] sm:$0xff] %vm304, %v3289
        %3322 = vst.msk [vmem:[%s271 + $0x98] sm:$0xff] %vm304, %v3290
        %3323 = vst.msk [vmem:[%s271 + $0xa0] sm:$0xff] %vm304, %v3291
        %3324 = vst.msk [vmem:[%s271 + $0xa8] sm:$0xff] %vm304, %v3292
        %3325 = vst.msk [vmem:[%s271 + $0xb0] sm:$0xff] %vm304, %v3293
        %3326 = vst.msk [vmem:[%s271 + $0xb8] sm:$0xff] %vm304, %v3294
        %3327 = vst.msk [vmem:[%s271 + $0xc0] sm:$0xff] %vm304, %v3295
        %3328 = vst.msk [vmem:[%s271 + $0xc8] sm:$0xff] %vm304, %v3296
        %3329 = vst.msk [vmem:[%s271 + $0xd0] sm:$0xff] %vm304, %v3297
        %3330 = vst.msk [vmem:[%s271 + $0xd8] sm:$0xff] %vm304, %v3298
        %3331 = vst.msk [vmem:[%s271 + $0xe0] sm:$0xff] %vm304, %v3299
        %3332 = vst.msk [vmem:[%s271 + $0xe8] sm:$0xff] %vm304, %v3300
        %3333 = vst.msk [vmem:[%s271 + $0xf0] sm:$0xff] %vm304, %v3301
        %3334 = vst.msk [vmem:[%s271 + $0xf8] sm:$0xff] %vm304, %v3302
        %s3335 = sand.u32 %s142, 1
        %s3336 = scalar_lea.sflag [#allocation5], %s3335
        %s3337 = sand.u32 %s142, 1
        %s3338 = smul.addr %s3337, 256
        %s3339 = scalar_lea.vmem [#allocation10], %s3338
        // Predicated region
        $region53: #{tpu_custom_call.1} parent=39 // pred_check
          %p3340 = pneg %p152
        $region54: #{tpu_custom_call.1} parent=39 // pred_check_branch
          %3342 = sbr.rel (%p3340) target = $region56
        $region55: #{tpu_custom_call.1} parent=39 // pred_region
          %3344 = vsyncadd %s3336, 0
          %s3345 = smul.addr %s24, 32
          %s3346 = smul.addr %s3345, 8
          %s3347 = scalar_lea.hbm %s5, %s3346
          %s3348 = sshll.u32 %s3339, 4
          %s3349 = int_to_ptr.vmem [resolvable:$true] %s3348
          %s3350 = sshll.u32 %s3347, 4
          %s3351 = int_to_ptr.hbm [resolvable:$true] %s3350
          %3356 = dma.vmem_to_hbm [thread:$0]  %s3349, 4096, %s3351, %s3336, 128, 128, 8
        $region56: #{tpu_custom_call.1} parent=39 // pred_fallthru
          _
      $region40: #{tpu_custom_call.1} parent=5 // pred_fallthru
        _
      %p3357 = scmp.le.s32.totalorder 2, %s19
      // Predicated region
      $region57: #{tpu_custom_call.1} parent=5 // pred_check
        %p3358 = pneg %p3357
      $region58: #{tpu_custom_call.1} parent=5 // pred_check_branch
        %3360 = sbr.rel (%p3358) target = $region60
      $region59: #{tpu_custom_call.1} parent=5 // pred_region
        %s3361 = ssub.s32 %s19, 2
        // Predicated region
        $region61: #{tpu_custom_call.1} parent=59 // pred_check
          %p3362 = pneg %p158
        $region62: #{tpu_custom_call.1} parent=59 // pred_check_branch
          %3364 = sbr.rel (%p3362) target = $region64
        $region63: #{tpu_custom_call.1} parent=59 // pred_region
          %s3365 = sand.u32 %s143, 1
          %s3366 = scalar_lea.sflag [#allocation5], %s3365
          %s3367 = sand.u32 %s143, 1
          %s3368 = smul.addr %s3367, 256
          %s3369 = scalar_lea.vmem [#allocation10], %s3368
          %3371 = dma.done %s3366, 4096
        $region64: #{tpu_custom_call.1} parent=59 // pred_fallthru
          _
      $region60: #{tpu_custom_call.1} parent=5 // pred_fallthru
        _
    $region6: #{tpu_custom_call.1} parent=1 // loop_footer
      %s23 = sadd.s32 1, %s19
    $region7: #{tpu_custom_call.1} parent=1 // loop_footer_branch
      %18 = sbr.rel target = $region3
    $region8: #{tpu_custom_call.1} parent=1 // loop_exit
      _
    %3372 = vsyncpa [#allocation4], 1
    %s3373 = scalar_lea.sflag [#allocation4], 1
    %3374 = vsyncpa %s3373, 1
    %3375 = vsyncpa [#allocation5], 1
    %s3376 = scalar_lea.sflag [#allocation5], 1
    %3377 = vsyncpa %s3376, 1
    %3378 = vsyncpa [#allocation6], 1
    %s3379 = scalar_lea.sflag [#allocation6], 1
    %3380 = vsyncpa %s3379, 1
    %3381 = vsyncpa [#allocation9], 1

</llo_original>
